<compile_context>
chip_gen: v6e
topology: v6e:2x2x1
jax: 0.10.0
libtpu: 0.0.40
codegen_flags: <defaults>
</compile_context>

<pallas_src>
import functools
import math

import jax
import jax.numpy as jnp
from jax.experimental import pallas as pl
from jax.experimental.pallas import tpu as pltpu

LN_EPS = 1e-5          # PyTorch nn.LayerNorm default
NEG_INF = -1e30        # additive mask for cross-batch (query, key) pairs

# ---------------------- packed-parameter slab layout -------------------------
# Matmul weights: one (17, d, d) bf16 slab; every entry is stored pre-transposed
# so the kernel computes `activation @ W` (PyTorch keeps weights as (out, in)).
(ENC_WQ, ENC_WK, ENC_WV, ENC_WO, ENC_W1, ENC_W2,
 DSA_WQ, DSA_WK, DSA_WV, DSA_WO,
 DCA_WQ, DCA_WK, DCA_WV, DCA_WO,
 DEC_W1, DEC_W2, FC_W) = range(17)
N_W = 17

# Bias / LayerNorm rows: one (27, d) f32 slab.
(ENC_BQ, ENC_BK, ENC_BV, ENC_BO, ENC_LN1_W, ENC_LN1_B, ENC_B1, ENC_B2,
 ENC_LN2_W, ENC_LN2_B,
 DSA_BQ, DSA_BK, DSA_BV, DSA_BO, DEC_LN1_W, DEC_LN1_B,
 DCA_BQ, DCA_BK, DCA_BV, DCA_BO, DEC_LN2_W, DEC_LN2_B, DEC_B1, DEC_B2,
 DEC_LN3_W, DEC_LN3_B, FC_B) = range(27)
N_V = 27
LN_W_ROWS = (ENC_LN1_W, ENC_LN2_W, DEC_LN1_W, DEC_LN2_W, DEC_LN3_W)
LN_B_ROWS = (ENC_LN1_B, ENC_LN2_B, DEC_LN1_B, DEC_LN2_B, DEC_LN3_B)


# ----------------------------- in-kernel helpers ------------------------------

def _dot(a, w):
    """MXU matmul: bf16 operands (single MXU pass), f32 accumulation."""
    return jnp.dot(a.astype(jnp.bfloat16), w, preferred_element_type=jnp.float32)


def _layer_norm(x, w, b):
    mu = jnp.mean(x, axis=-1, keepdims=True)
    var = jnp.mean(jnp.square(x - mu), axis=-1, keepdims=True)
    return (x - mu) * jax.lax.rsqrt(var + LN_EPS) * w + b


def _ffn(x, w1, b1, w2, b2):
    h = jnp.maximum(_dot(x, w1) + b1, 0.0)          # ReLU; dropout = identity (eval)
    return _dot(h, w2) + b2


def _mha(q_in, kv_in, wq, wk, wv, bq, bk, bv, wo, bo, attn_bias, *, num_heads):
    """Multi-head attention on (N, d) activations (N = seq*batch, seq-major rows).

    attn_bias is an (N, N) additive mask (0 for same-batch pairs, NEG_INF
    otherwise), which makes full-N attention equal to independent per-batch
    attention over the sequence axis.
    """
    n, d = q_in.shape
    dh = d // num_heads
    scale = 1.0 / math.sqrt(dh)

    q = (_dot(q_in, wq) + bq) * scale               # fold 1/sqrt(dh) into Q
    k = _dot(kv_in, wk) + bk
    v = _dot(kv_in, wv) + bv

    # Head-major relayout (N, H, dh) -> (H, N, dh), then head-batched einsums.
    qh = pltpu.einshape("nhd->hnd", q.reshape(n, num_heads, dh)).astype(jnp.bfloat16)
    kh = pltpu.einshape("nhd->hnd", k.reshape(n, num_heads, dh)).astype(jnp.bfloat16)
    vh = pltpu.einshape("nhd->hnd", v.reshape(n, num_heads, dh)).astype(jnp.bfloat16)

    s = jnp.einsum("hqd,hkd->hqk", qh, kh,
                   preferred_element_type=jnp.float32)        # (H, N, N)
    s = s + attn_bias                                          # mask cross-batch pairs
    s = s - jnp.max(s, axis=-1, keepdims=True)
    p = jnp.exp(s)
    p = p / jnp.sum(p, axis=-1, keepdims=True)                 # exact normalization
    ctx = jnp.einsum("hqk,hkd->hqd", p.astype(jnp.bfloat16), vh,
                     preferred_element_type=jnp.float32)       # (H, N, dh)
    ctx = pltpu.einshape("hnd->nhd", ctx).reshape(n, d)        # heads back to lanes
    return _dot(ctx, wo) + bo


# --------------------------------- kernel -------------------------------------

def galactic_kernel(x_ref, w_ref, vec_ref, o_ref, *, num_heads, batch):
    n, d = x_ref.shape
    seq = n // batch
    out_dim = o_ref.shape[-1]

    vec = vec_ref[...]                               # (27, d) f32 — one load
    row = lambda i: vec[i:i + 1, :]                  # (1, d) static slice
    W = lambda i: w_ref[i]                           # (d, d) bf16 tile

    # Rows are seq-major (row r = s*batch + b), so batch id of row r is r % batch.
    rb = jax.lax.broadcasted_iota(jnp.int32, (n, n), 0) % batch
    cb = jax.lax.broadcasted_iota(jnp.int32, (n, n), 1) % batch
    attn_bias = jnp.where(rb == cb, 0.0, NEG_INF).astype(jnp.float32)

    x = x_ref[...]                                   # (N, d) f32

    # ----- encoder layer (post-norm) -----
    sa = _mha(x, x, W(ENC_WQ), W(ENC_WK), W(ENC_WV),
              row(ENC_BQ), row(ENC_BK), row(ENC_BV),
              W(ENC_WO), row(ENC_BO), attn_bias, num_heads=num_heads)
    h = _layer_norm(x + sa, row(ENC_LN1_W), row(ENC_LN1_B))
    ff = _ffn(h, W(ENC_W1), row(ENC_B1), W(ENC_W2), row(ENC_B2))
    enc = _layer_norm(h + ff, row(ENC_LN2_W), row(ENC_LN2_B))

    # ----- decoder layer: decoder(tgt=enc, memory=enc) -----
    # TODO(synk): reference calls self.decoder(x) with one arg (raises in
    # PyTorch); implemented as decoder(tgt=x, memory=x).
    sa = _mha(enc, enc, W(DSA_WQ), W(DSA_WK), W(DSA_WV),
              row(DSA_BQ), row(DSA_BK), row(DSA_BV),
              W(DSA_WO), row(DSA_BO), attn_bias, num_heads=num_heads)
    h = _layer_norm(enc + sa, row(DEC_LN1_W), row(DEC_LN1_B))
    ca = _mha(h, enc, W(DCA_WQ), W(DCA_WK), W(DCA_WV),
              row(DCA_BQ), row(DCA_BK), row(DCA_BV),
              W(DCA_WO), row(DCA_BO), attn_bias, num_heads=num_heads)
    h = _layer_norm(h + ca, row(DEC_LN2_W), row(DEC_LN2_B))
    ff = _ffn(h, W(DEC_W1), row(DEC_B1), W(DEC_W2), row(DEC_B2))
    dec = _layer_norm(h + ff, row(DEC_LN3_W), row(DEC_LN3_B))

    # ----- fc + softmax over the batch axis (nn.Softmax(dim=1) on (S,B,O)) ----
    y = _dot(dec, W(FC_W)) + row(FC_B)               # (N, O)
    y3 = y.reshape(seq, batch, out_dim)
    y3 = y3 - jnp.max(y3, axis=1, keepdims=True)
    e = jnp.exp(y3)
    o_ref[...] = e / jnp.sum(e, axis=1, keepdims=True)   # exact normalization


# --------------------------------- wrapper ------------------------------------

@functools.partial(jax.jit, static_argnames=("num_heads",))
def galactic_transformer(x_sbd, w_slab, vec_slab, num_heads):
    """x_sbd: (seq, batch, d_model) f32 -> (seq, batch, d_model), softmax over dim=1."""
    S, B, D = x_sbd.shape
    x2 = x_sbd.reshape(S * B, D)      # free row-major flatten (no transpose, no copy)

    vmem = pl.BlockSpec(memory_space=pltpu.MemorySpace.VMEM)
    return pl.pallas_call(
        functools.partial(galactic_kernel, num_heads=num_heads, batch=B),
        out_shape=jax.ShapeDtypeStruct((S, B, D), jnp.float32),
        in_specs=[vmem, vmem, vmem],
        out_specs=vmem,
    )(x2, w_slab, vec_slab)


# ------------------------------ parameter init --------------------------------

def init_params(key, input_dim, hidden_dim, output_dim):
    """Builds the two packed parameter slabs.

    The reference module only type-checks when input_dim == hidden_dim ==
    output_dim (encoder d_model feeds a decoder with d_model=output_dim, and
    the decoder output feeds nn.Linear(hidden_dim, output_dim)); that equality
    also lets every matmul weight share one (d, d) slot in the packed slab.
    """
    assert input_dim == hidden_dim == output_dim
    d = input_dim
    kw, kv = jax.random.split(key)
    w_slab = (0.1 * jax.random.normal(kw, (N_W, d, d), jnp.float32)
              ).astype(jnp.bfloat16)                           # MXU operand dtype
    vec_slab = 0.1 * jax.random.normal(kv, (N_V, d), jnp.float32)
    vec_slab = vec_slab.at[jnp.array(LN_W_ROWS)].set(1.0)      # LayerNorm weight = 1
    vec_slab = vec_slab.at[jnp.array(LN_B_ROWS)].set(0.0)      # LayerNorm bias   = 0
    return w_slab, vec_slab


# ----------------------------------- main --------------------------------------

if __name__ == "__main__":
    SEQ, BATCH = 8, 2
    INPUT_DIM = HIDDEN_DIM = OUTPUT_DIM = 32
    NUM_HEADS = 4                      # head_dim = 8

    key = jax.random.PRNGKey(0)
    kx, kp = jax.random.split(key)
    x = jax.random.normal(kx, (SEQ, BATCH, INPUT_DIM), jnp.float32)   # (seq, batch, d)
    w_slab, vec_slab = init_params(kp, INPUT_DIM, HIDDEN_DIM, OUTPUT_DIM)

    y = jax.block_until_ready(
        galactic_transformer(x, w_slab, vec_slab, num_heads=NUM_HEADS))

    assert y.shape == (SEQ, BATCH, OUTPUT_DIM), y.shape
    # nn.Softmax(dim=1): every (seq, :, out) slice sums to 1 over the batch axis.
    assert bool(jnp.allclose(jnp.sum(y, axis=1), 1.0, atol=1e-4))
    assert bool(jnp.all(jnp.isfinite(y)))
    print("KERNEL_OK")
</pallas_src>

<mosaic_0001>
module attributes {stable_mosaic.version = 11 : i64} {
  func.func @galactic_kernel(%arg0: memref<16x32xf32, #tpu.memory_space<vmem>>, %arg1: memref<17x32x32xbf16, #tpu.memory_space<vmem>>, %arg2: memref<27x32xf32, #tpu.memory_space<vmem>>, %arg3: memref<8x2x32xf32, #tpu.memory_space<vmem>>) attributes {dimension_semantics = [], scalar_prefetch = 0 : i64, scratch_operands = 0 : i64, tpu.core_type = #tpu.core_type<tc>} {
    %c0 = arith.constant 0 : index
    %c0_0 = arith.constant 0 : index
    %0 = vector.load %arg2[%c0, %c0_0] : memref<27x32xf32, #tpu.memory_space<vmem>>, vector<27x32xf32>
    %1 = tpu.iota {dimensions = array<i32: 0>} : vector<16x16xi32>
    %c2_i32 = arith.constant 2 : i32
    %c0_i32 = arith.constant 0 : i32
    %2 = arith.cmpi eq, %c2_i32, %c0_i32 : i32
    %c1_i32 = arith.constant 1 : i32
    %3 = arith.select %2, %c1_i32, %c2_i32 : i32
    %4 = vector.broadcast %3 : i32 to vector<16x16xi32>
    %5 = arith.remsi %1, %4 : vector<16x16xi32>
    %c0_i32_1 = arith.constant 0 : i32
    %6 = vector.broadcast %c0_i32_1 : i32 to vector<16x16xi32>
    %7 = arith.cmpi ne, %5, %6 : vector<16x16xi32>
    %c0_i32_2 = arith.constant 0 : i32
    %8 = vector.broadcast %c0_i32_2 : i32 to vector<16x16xi32>
    %9 = arith.cmpi slt, %5, %8 : vector<16x16xi32>
    %c0_i32_3 = arith.constant 0 : i32
    %10 = arith.cmpi slt, %3, %c0_i32_3 : i32
    %11 = vector.broadcast %10 : i1 to vector<16x16xi1>
    %12 = vector.broadcast %11 : vector<16x16xi1> to vector<16x16xi1>
    %13 = arith.xori %9, %12 : vector<16x16xi1>
    %14 = arith.andi %13, %7 : vector<16x16xi1>
    %15 = vector.broadcast %3 : i32 to vector<16x16xi32>
    %16 = arith.addi %5, %15 : vector<16x16xi32>
    %17 = arith.select %14, %16, %5 : vector<16x16xi1>, vector<16x16xi32>
    %18 = tpu.iota {dimensions = array<i32: 1>} : vector<16x16xi32>
    %c2_i32_4 = arith.constant 2 : i32
    %c0_i32_5 = arith.constant 0 : i32
    %19 = arith.cmpi eq, %c2_i32_4, %c0_i32_5 : i32
    %c1_i32_6 = arith.constant 1 : i32
    %20 = arith.select %19, %c1_i32_6, %c2_i32_4 : i32
    %21 = vector.broadcast %20 : i32 to vector<16x16xi32>
    %22 = arith.remsi %18, %21 : vector<16x16xi32>
    %c0_i32_7 = arith.constant 0 : i32
    %23 = vector.broadcast %c0_i32_7 : i32 to vector<16x16xi32>
    %24 = arith.cmpi ne, %22, %23 : vector<16x16xi32>
    %c0_i32_8 = arith.constant 0 : i32
    %25 = vector.broadcast %c0_i32_8 : i32 to vector<16x16xi32>
    %26 = arith.cmpi slt, %22, %25 : vector<16x16xi32>
    %c0_i32_9 = arith.constant 0 : i32
    %27 = arith.cmpi slt, %20, %c0_i32_9 : i32
    %28 = vector.broadcast %27 : i1 to vector<16x16xi1>
    %29 = vector.broadcast %28 : vector<16x16xi1> to vector<16x16xi1>
    %30 = arith.xori %26, %29 : vector<16x16xi1>
    %31 = arith.andi %30, %24 : vector<16x16xi1>
    %32 = vector.broadcast %20 : i32 to vector<16x16xi32>
    %33 = arith.addi %22, %32 : vector<16x16xi32>
    %34 = arith.select %31, %33, %22 : vector<16x16xi1>, vector<16x16xi32>
    %35 = arith.cmpi eq, %17, %34 : vector<16x16xi32>
    %cst = arith.constant 0.000000e+00 : f32
    %cst_10 = arith.constant -1.000000e+30 : f32
    %36 = vector.broadcast %cst : f32 to vector<16x16xf32>
    %37 = vector.broadcast %cst_10 : f32 to vector<16x16xf32>
    %38 = arith.select %35, %36, %37 : vector<16x16xi1>, vector<16x16xf32>
    %c0_11 = arith.constant 0 : index
    %c0_12 = arith.constant 0 : index
    %39 = vector.load %arg0[%c0_11, %c0_12] : memref<16x32xf32, #tpu.memory_space<vmem>>, vector<16x32xf32>
    %c0_13 = arith.constant 0 : index
    %c0_14 = arith.constant 0 : index
    %c0_15 = arith.constant 0 : index
    %40 = vector.load %arg1[%c0_13, %c0_14, %c0_15] : memref<17x32x32xbf16, #tpu.memory_space<vmem>>, vector<1x32x32xbf16>
    %41 = vector.shape_cast %40 : vector<1x32x32xbf16> to vector<32x32xbf16>
    %c1 = arith.constant 1 : index
    %c0_16 = arith.constant 0 : index
    %c0_17 = arith.constant 0 : index
    %42 = vector.load %arg1[%c1, %c0_16, %c0_17] : memref<17x32x32xbf16, #tpu.memory_space<vmem>>, vector<1x32x32xbf16>
    %43 = vector.shape_cast %42 : vector<1x32x32xbf16> to vector<32x32xbf16>
    %c2 = arith.constant 2 : index
    %c0_18 = arith.constant 0 : index
    %c0_19 = arith.constant 0 : index
    %44 = vector.load %arg1[%c2, %c0_18, %c0_19] : memref<17x32x32xbf16, #tpu.memory_space<vmem>>, vector<1x32x32xbf16>
    %45 = vector.shape_cast %44 : vector<1x32x32xbf16> to vector<32x32xbf16>
    %46 = vector.extract_strided_slice %0 {offsets = [0, 0], sizes = [1, 32], strides = [1, 1]} : vector<27x32xf32> to vector<1x32xf32>
    %47 = vector.extract_strided_slice %0 {offsets = [1, 0], sizes = [1, 32], strides = [1, 1]} : vector<27x32xf32> to vector<1x32xf32>
    %48 = vector.extract_strided_slice %0 {offsets = [2, 0], sizes = [1, 32], strides = [1, 1]} : vector<27x32xf32> to vector<1x32xf32>
    %c3 = arith.constant 3 : index
    %c0_20 = arith.constant 0 : index
    %c0_21 = arith.constant 0 : index
    %49 = vector.load %arg1[%c3, %c0_20, %c0_21] : memref<17x32x32xbf16, #tpu.memory_space<vmem>>, vector<1x32x32xbf16>
    %50 = vector.shape_cast %49 : vector<1x32x32xbf16> to vector<32x32xbf16>
    %51 = vector.extract_strided_slice %0 {offsets = [3, 0], sizes = [1, 32], strides = [1, 1]} : vector<27x32xf32> to vector<1x32xf32>
    %52 = arith.truncf %39 : vector<16x32xf32> to vector<16x32xbf16>
    %cst_22 = arith.constant dense<0.000000e+00> : vector<16x32xf32>
    %53 = tpu.matmul %52, %41, %cst_22 {dimension_numbers = #tpu.dot_dimension_numbers<[1], [0], [0], [1], [0, 0, 1, 1], [], []>} : vector<16x32xbf16>, vector<32x32xbf16>, vector<16x32xf32> -> vector<16x32xf32>
    %54 = vector.broadcast %46 : vector<1x32xf32> to vector<16x32xf32>
    %55 = arith.addf %53, %54 : vector<16x32xf32>
    %cst_23 = arith.constant 0.353553385 : f32
    %56 = vector.broadcast %cst_23 : f32 to vector<16x32xf32>
    %57 = arith.mulf %55, %56 : vector<16x32xf32>
    %58 = arith.truncf %39 : vector<16x32xf32> to vector<16x32xbf16>
    %cst_24 = arith.constant dense<0.000000e+00> : vector<16x32xf32>
    %59 = tpu.matmul %58, %43, %cst_24 {dimension_numbers = #tpu.dot_dimension_numbers<[1], [0], [0], [1], [0, 0, 1, 1], [], []>} : vector<16x32xbf16>, vector<32x32xbf16>, vector<16x32xf32> -> vector<16x32xf32>
    %60 = vector.broadcast %47 : vector<1x32xf32> to vector<16x32xf32>
    %61 = arith.addf %59, %60 : vector<16x32xf32>
    %62 = arith.truncf %39 : vector<16x32xf32> to vector<16x32xbf16>
    %cst_25 = arith.constant dense<0.000000e+00> : vector<16x32xf32>
    %63 = tpu.matmul %62, %45, %cst_25 {dimension_numbers = #tpu.dot_dimension_numbers<[1], [0], [0], [1], [0, 0, 1, 1], [], []>} : vector<16x32xbf16>, vector<32x32xbf16>, vector<16x32xf32> -> vector<16x32xf32>
    %64 = vector.broadcast %48 : vector<1x32xf32> to vector<16x32xf32>
    %65 = arith.addf %63, %64 : vector<16x32xf32>
    %66 = vector.shape_cast %57 : vector<16x32xf32> to vector<16x4x8xf32>
    %67 = tpu.transpose %66, [1, 0, 2] : vector<16x4x8xf32> -> vector<4x16x8xf32>
    %68 = arith.truncf %67 : vector<4x16x8xf32> to vector<4x16x8xbf16>
    %69 = vector.shape_cast %61 : vector<16x32xf32> to vector<16x4x8xf32>
    %70 = tpu.transpose %69, [1, 0, 2] : vector<16x4x8xf32> -> vector<4x16x8xf32>
    %71 = arith.truncf %70 : vector<4x16x8xf32> to vector<4x16x8xbf16>
    %72 = vector.shape_cast %65 : vector<16x32xf32> to vector<16x4x8xf32>
    %73 = tpu.transpose %72, [1, 0, 2] : vector<16x4x8xf32> -> vector<4x16x8xf32>
    %74 = arith.truncf %73 : vector<4x16x8xf32> to vector<4x16x8xbf16>
    "tpu.trace_start"() <{level = 10 : i32, message = "hqd,hkd->hqk"}> : () -> ()
    %cst_26 = arith.constant dense<0.000000e+00> : vector<4x16x16xf32>
    %75 = tpu.matmul %68, %71, %cst_26 {dimension_numbers = #tpu.dot_dimension_numbers<[2], [2], [1], [1], [0, 0, 0, 1, 1, 1], [0], [0]>} : vector<4x16x8xbf16>, vector<4x16x8xbf16>, vector<4x16x16xf32> -> vector<4x16x16xf32>
    "tpu.trace_stop"() : () -> ()
    %76 = vector.shape_cast %38 : vector<16x16xf32> to vector<1x16x16xf32>
    %77 = vector.broadcast %76 : vector<1x16x16xf32> to vector<4x16x16xf32>
    %78 = arith.addf %75, %77 : vector<4x16x16xf32>
    %cst_27 = arith.constant dense<0xFF800000> : vector<4x16xf32>
    %79 = vector.multi_reduction <maximumf>, %78, %cst_27 [2] : vector<4x16x16xf32> to vector<4x16xf32>
    %80 = vector.shape_cast %79 : vector<4x16xf32> to vector<4x16x1xf32>
    %81 = vector.broadcast %80 : vector<4x16x1xf32> to vector<4x16x16xf32>
    %82 = arith.subf %78, %81 : vector<4x16x16xf32>
    %83 = math.exp %82 : vector<4x16x16xf32>
    %cst_28 = arith.constant dense<0.000000e+00> : vector<4x16xf32>
    %84 = vector.multi_reduction <add>, %83, %cst_28 [2] : vector<4x16x16xf32> to vector<4x16xf32>
    %85 = vector.shape_cast %84 : vector<4x16xf32> to vector<4x16x1xf32>
    %86 = vector.broadcast %85 : vector<4x16x1xf32> to vector<4x16x16xf32>
    %87 = arith.divf %83, %86 : vector<4x16x16xf32>
    %88 = arith.truncf %87 : vector<4x16x16xf32> to vector<4x16x16xbf16>
    "tpu.trace_start"() <{level = 10 : i32, message = "hqk,hkd->hqd"}> : () -> ()
    %cst_29 = arith.constant dense<0.000000e+00> : vector<4x16x8xf32>
    %89 = tpu.matmul %88, %74, %cst_29 {dimension_numbers = #tpu.dot_dimension_numbers<[2], [1], [1], [2], [0, 0, 0, 1, 1, 2], [0], [0]>} : vector<4x16x16xbf16>, vector<4x16x8xbf16>, vector<4x16x8xf32> -> vector<4x16x8xf32>
    "tpu.trace_stop"() : () -> ()
    %90 = tpu.transpose %89, [1, 0, 2] : vector<4x16x8xf32> -> vector<16x4x8xf32>
    %91 = vector.shape_cast %90 : vector<16x4x8xf32> to vector<16x32xf32>
    %92 = arith.truncf %91 : vector<16x32xf32> to vector<16x32xbf16>
    %cst_30 = arith.constant dense<0.000000e+00> : vector<16x32xf32>
    %93 = tpu.matmul %92, %50, %cst_30 {dimension_numbers = #tpu.dot_dimension_numbers<[1], [0], [0], [1], [0, 0, 1, 1], [], []>} : vector<16x32xbf16>, vector<32x32xbf16>, vector<16x32xf32> -> vector<16x32xf32>
    %94 = vector.broadcast %51 : vector<1x32xf32> to vector<16x32xf32>
    %95 = arith.addf %93, %94 : vector<16x32xf32>
    %96 = arith.addf %39, %95 : vector<16x32xf32>
    %97 = vector.extract_strided_slice %0 {offsets = [4, 0], sizes = [1, 32], strides = [1, 1]} : vector<27x32xf32> to vector<1x32xf32>
    %98 = vector.extract_strided_slice %0 {offsets = [5, 0], sizes = [1, 32], strides = [1, 1]} : vector<27x32xf32> to vector<1x32xf32>
    %cst_31 = arith.constant dense<0.000000e+00> : vector<16xf32>
    %99 = vector.multi_reduction <add>, %96, %cst_31 [1] : vector<16x32xf32> to vector<16xf32>
    %100 = vector.shape_cast %99 : vector<16xf32> to vector<16x1xf32>
    %cst_32 = arith.constant 3.200000e+01 : f32
    %101 = vector.broadcast %cst_32 : f32 to vector<16x1xf32>
    %102 = arith.divf %100, %101 : vector<16x1xf32>
    %103 = vector.broadcast %102 : vector<16x1xf32> to vector<16x32xf32>
    %104 = arith.subf %96, %103 : vector<16x32xf32>
    %105 = arith.mulf %104, %104 : vector<16x32xf32>
    %cst_33 = arith.constant dense<0.000000e+00> : vector<16xf32>
    %106 = vector.multi_reduction <add>, %105, %cst_33 [1] : vector<16x32xf32> to vector<16xf32>
    %107 = vector.shape_cast %106 : vector<16xf32> to vector<16x1xf32>
    %cst_34 = arith.constant 3.200000e+01 : f32
    %108 = vector.broadcast %cst_34 : f32 to vector<16x1xf32>
    %109 = arith.divf %107, %108 : vector<16x1xf32>
    %110 = vector.broadcast %102 : vector<16x1xf32> to vector<16x32xf32>
    %111 = arith.subf %96, %110 : vector<16x32xf32>
    %cst_35 = arith.constant 9.99999974E-6 : f32
    %112 = vector.broadcast %cst_35 : f32 to vector<16x1xf32>
    %113 = arith.addf %109, %112 : vector<16x1xf32>
    %114 = math.rsqrt %113 : vector<16x1xf32>
    %115 = vector.broadcast %114 : vector<16x1xf32> to vector<16x32xf32>
    %116 = arith.mulf %111, %115 : vector<16x32xf32>
    %117 = vector.broadcast %97 : vector<1x32xf32> to vector<16x32xf32>
    %118 = arith.mulf %116, %117 : vector<16x32xf32>
    %119 = vector.broadcast %98 : vector<1x32xf32> to vector<16x32xf32>
    %120 = arith.addf %118, %119 : vector<16x32xf32>
    %c4 = arith.constant 4 : index
    %c0_36 = arith.constant 0 : index
    %c0_37 = arith.constant 0 : index
    %121 = vector.load %arg1[%c4, %c0_36, %c0_37] : memref<17x32x32xbf16, #tpu.memory_space<vmem>>, vector<1x32x32xbf16>
    %122 = vector.shape_cast %121 : vector<1x32x32xbf16> to vector<32x32xbf16>
    %123 = vector.extract_strided_slice %0 {offsets = [6, 0], sizes = [1, 32], strides = [1, 1]} : vector<27x32xf32> to vector<1x32xf32>
    %c5 = arith.constant 5 : index
    %c0_38 = arith.constant 0 : index
    %c0_39 = arith.constant 0 : index
    %124 = vector.load %arg1[%c5, %c0_38, %c0_39] : memref<17x32x32xbf16, #tpu.memory_space<vmem>>, vector<1x32x32xbf16>
    %125 = vector.shape_cast %124 : vector<1x32x32xbf16> to vector<32x32xbf16>
    %126 = vector.extract_strided_slice %0 {offsets = [7, 0], sizes = [1, 32], strides = [1, 1]} : vector<27x32xf32> to vector<1x32xf32>
    %127 = arith.truncf %120 : vector<16x32xf32> to vector<16x32xbf16>
    %cst_40 = arith.constant dense<0.000000e+00> : vector<16x32xf32>
    %128 = tpu.matmul %127, %122, %cst_40 {dimension_numbers = #tpu.dot_dimension_numbers<[1], [0], [0], [1], [0, 0, 1, 1], [], []>} : vector<16x32xbf16>, vector<32x32xbf16>, vector<16x32xf32> -> vector<16x32xf32>
    %129 = vector.broadcast %123 : vector<1x32xf32> to vector<16x32xf32>
    %130 = arith.addf %128, %129 : vector<16x32xf32>
    %cst_41 = arith.constant 0.000000e+00 : f32
    %131 = vector.broadcast %cst_41 : f32 to vector<16x32xf32>
    %132 = arith.maximumf %130, %131 : vector<16x32xf32>
    %133 = arith.truncf %132 : vector<16x32xf32> to vector<16x32xbf16>
    %cst_42 = arith.constant dense<0.000000e+00> : vector<16x32xf32>
    %134 = tpu.matmul %133, %125, %cst_42 {dimension_numbers = #tpu.dot_dimension_numbers<[1], [0], [0], [1], [0, 0, 1, 1], [], []>} : vector<16x32xbf16>, vector<32x32xbf16>, vector<16x32xf32> -> vector<16x32xf32>
    %135 = vector.broadcast %126 : vector<1x32xf32> to vector<16x32xf32>
    %136 = arith.addf %134, %135 : vector<16x32xf32>
    %137 = arith.addf %120, %136 : vector<16x32xf32>
    %138 = vector.extract_strided_slice %0 {offsets = [8, 0], sizes = [1, 32], strides = [1, 1]} : vector<27x32xf32> to vector<1x32xf32>
    %139 = vector.extract_strided_slice %0 {offsets = [9, 0], sizes = [1, 32], strides = [1, 1]} : vector<27x32xf32> to vector<1x32xf32>
    %cst_43 = arith.constant dense<0.000000e+00> : vector<16xf32>
    %140 = vector.multi_reduction <add>, %137, %cst_43 [1] : vector<16x32xf32> to vector<16xf32>
    %141 = vector.shape_cast %140 : vector<16xf32> to vector<16x1xf32>
    %cst_44 = arith.constant 3.200000e+01 : f32
    %142 = vector.broadcast %cst_44 : f32 to vector<16x1xf32>
    %143 = arith.divf %141, %142 : vector<16x1xf32>
    %144 = vector.broadcast %143 : vector<16x1xf32> to vector<16x32xf32>
    %145 = arith.subf %137, %144 : vector<16x32xf32>
    %146 = arith.mulf %145, %145 : vector<16x32xf32>
    %cst_45 = arith.constant dense<0.000000e+00> : vector<16xf32>
    %147 = vector.multi_reduction <add>, %146, %cst_45 [1] : vector<16x32xf32> to vector<16xf32>
    %148 = vector.shape_cast %147 : vector<16xf32> to vector<16x1xf32>
    %cst_46 = arith.constant 3.200000e+01 : f32
    %149 = vector.broadcast %cst_46 : f32 to vector<16x1xf32>
    %150 = arith.divf %148, %149 : vector<16x1xf32>
    %151 = vector.broadcast %143 : vector<16x1xf32> to vector<16x32xf32>
    %152 = arith.subf %137, %151 : vector<16x32xf32>
    %cst_47 = arith.constant 9.99999974E-6 : f32
    %153 = vector.broadcast %cst_47 : f32 to vector<16x1xf32>
    %154 = arith.addf %150, %153 : vector<16x1xf32>
    %155 = math.rsqrt %154 : vector<16x1xf32>
    %156 = vector.broadcast %155 : vector<16x1xf32> to vector<16x32xf32>
    %157 = arith.mulf %152, %156 : vector<16x32xf32>
    %158 = vector.broadcast %138 : vector<1x32xf32> to vector<16x32xf32>
    %159 = arith.mulf %157, %158 : vector<16x32xf32>
    %160 = vector.broadcast %139 : vector<1x32xf32> to vector<16x32xf32>
    %161 = arith.addf %159, %160 : vector<16x32xf32>
    %c6 = arith.constant 6 : index
    %c0_48 = arith.constant 0 : index
    %c0_49 = arith.constant 0 : index
    %162 = vector.load %arg1[%c6, %c0_48, %c0_49] : memref<17x32x32xbf16, #tpu.memory_space<vmem>>, vector<1x32x32xbf16>
    %163 = vector.shape_cast %162 : vector<1x32x32xbf16> to vector<32x32xbf16>
    %c7 = arith.constant 7 : index
    %c0_50 = arith.constant 0 : index
    %c0_51 = arith.constant 0 : index
    %164 = vector.load %arg1[%c7, %c0_50, %c0_51] : memref<17x32x32xbf16, #tpu.memory_space<vmem>>, vector<1x32x32xbf16>
    %165 = vector.shape_cast %164 : vector<1x32x32xbf16> to vector<32x32xbf16>
    %c8 = arith.constant 8 : index
    %c0_52 = arith.constant 0 : index
    %c0_53 = arith.constant 0 : index
    %166 = vector.load %arg1[%c8, %c0_52, %c0_53] : memref<17x32x32xbf16, #tpu.memory_space<vmem>>, vector<1x32x32xbf16>
    %167 = vector.shape_cast %166 : vector<1x32x32xbf16> to vector<32x32xbf16>
    %168 = vector.extract_strided_slice %0 {offsets = [10, 0], sizes = [1, 32], strides = [1, 1]} : vector<27x32xf32> to vector<1x32xf32>
    %169 = vector.extract_strided_slice %0 {offsets = [11, 0], sizes = [1, 32], strides = [1, 1]} : vector<27x32xf32> to vector<1x32xf32>
    %170 = vector.extract_strided_slice %0 {offsets = [12, 0], sizes = [1, 32], strides = [1, 1]} : vector<27x32xf32> to vector<1x32xf32>
    %c9 = arith.constant 9 : index
    %c0_54 = arith.constant 0 : index
    %c0_55 = arith.constant 0 : index
    %171 = vector.load %arg1[%c9, %c0_54, %c0_55] : memref<17x32x32xbf16, #tpu.memory_space<vmem>>, vector<1x32x32xbf16>
    %172 = vector.shape_cast %171 : vector<1x32x32xbf16> to vector<32x32xbf16>
    %173 = vector.extract_strided_slice %0 {offsets = [13, 0], sizes = [1, 32], strides = [1, 1]} : vector<27x32xf32> to vector<1x32xf32>
    %174 = arith.truncf %161 : vector<16x32xf32> to vector<16x32xbf16>
    %cst_56 = arith.constant dense<0.000000e+00> : vector<16x32xf32>
    %175 = tpu.matmul %174, %163, %cst_56 {dimension_numbers = #tpu.dot_dimension_numbers<[1], [0], [0], [1], [0, 0, 1, 1], [], []>} : vector<16x32xbf16>, vector<32x32xbf16>, vector<16x32xf32> -> vector<16x32xf32>
    %176 = vector.broadcast %168 : vector<1x32xf32> to vector<16x32xf32>
    %177 = arith.addf %175, %176 : vector<16x32xf32>
    %cst_57 = arith.constant 0.353553385 : f32
    %178 = vector.broadcast %cst_57 : f32 to vector<16x32xf32>
    %179 = arith.mulf %177, %178 : vector<16x32xf32>
    %180 = arith.truncf %161 : vector<16x32xf32> to vector<16x32xbf16>
    %cst_58 = arith.constant dense<0.000000e+00> : vector<16x32xf32>
    %181 = tpu.matmul %180, %165, %cst_58 {dimension_numbers = #tpu.dot_dimension_numbers<[1], [0], [0], [1], [0, 0, 1, 1], [], []>} : vector<16x32xbf16>, vector<32x32xbf16>, vector<16x32xf32> -> vector<16x32xf32>
    %182 = vector.broadcast %169 : vector<1x32xf32> to vector<16x32xf32>
    %183 = arith.addf %181, %182 : vector<16x32xf32>
    %184 = arith.truncf %161 : vector<16x32xf32> to vector<16x32xbf16>
    %cst_59 = arith.constant dense<0.000000e+00> : vector<16x32xf32>
    %185 = tpu.matmul %184, %167, %cst_59 {dimension_numbers = #tpu.dot_dimension_numbers<[1], [0], [0], [1], [0, 0, 1, 1], [], []>} : vector<16x32xbf16>, vector<32x32xbf16>, vector<16x32xf32> -> vector<16x32xf32>
    %186 = vector.broadcast %170 : vector<1x32xf32> to vector<16x32xf32>
    %187 = arith.addf %185, %186 : vector<16x32xf32>
    %188 = vector.shape_cast %179 : vector<16x32xf32> to vector<16x4x8xf32>
    %189 = tpu.transpose %188, [1, 0, 2] : vector<16x4x8xf32> -> vector<4x16x8xf32>
    %190 = arith.truncf %189 : vector<4x16x8xf32> to vector<4x16x8xbf16>
    %191 = vector.shape_cast %183 : vector<16x32xf32> to vector<16x4x8xf32>
    %192 = tpu.transpose %191, [1, 0, 2] : vector<16x4x8xf32> -> vector<4x16x8xf32>
    %193 = arith.truncf %192 : vector<4x16x8xf32> to vector<4x16x8xbf16>
    %194 = vector.shape_cast %187 : vector<16x32xf32> to vector<16x4x8xf32>
    %195 = tpu.transpose %194, [1, 0, 2] : vector<16x4x8xf32> -> vector<4x16x8xf32>
    %196 = arith.truncf %195 : vector<4x16x8xf32> to vector<4x16x8xbf16>
    "tpu.trace_start"() <{level = 10 : i32, message = "hqd,hkd->hqk"}> : () -> ()
    %cst_60 = arith.constant dense<0.000000e+00> : vector<4x16x16xf32>
    %197 = tpu.matmul %190, %193, %cst_60 {dimension_numbers = #tpu.dot_dimension_numbers<[2], [2], [1], [1], [0, 0, 0, 1, 1, 1], [0], [0]>} : vector<4x16x8xbf16>, vector<4x16x8xbf16>, vector<4x16x16xf32> -> vector<4x16x16xf32>
    "tpu.trace_stop"() : () -> ()
    %198 = vector.shape_cast %38 : vector<16x16xf32> to vector<1x16x16xf32>
    %199 = vector.broadcast %198 : vector<1x16x16xf32> to vector<4x16x16xf32>
    %200 = arith.addf %197, %199 : vector<4x16x16xf32>
    %cst_61 = arith.constant dense<0xFF800000> : vector<4x16xf32>
    %201 = vector.multi_reduction <maximumf>, %200, %cst_61 [2] : vector<4x16x16xf32> to vector<4x16xf32>
    %202 = vector.shape_cast %201 : vector<4x16xf32> to vector<4x16x1xf32>
    %203 = vector.broadcast %202 : vector<4x16x1xf32> to vector<4x16x16xf32>
    %204 = arith.subf %200, %203 : vector<4x16x16xf32>
    %205 = math.exp %204 : vector<4x16x16xf32>
    %cst_62 = arith.constant dense<0.000000e+00> : vector<4x16xf32>
    %206 = vector.multi_reduction <add>, %205, %cst_62 [2] : vector<4x16x16xf32> to vector<4x16xf32>
    %207 = vector.shape_cast %206 : vector<4x16xf32> to vector<4x16x1xf32>
    %208 = vector.broadcast %207 : vector<4x16x1xf32> to vector<4x16x16xf32>
    %209 = arith.divf %205, %208 : vector<4x16x16xf32>
    %210 = arith.truncf %209 : vector<4x16x16xf32> to vector<4x16x16xbf16>
    "tpu.trace_start"() <{level = 10 : i32, message = "hqk,hkd->hqd"}> : () -> ()
    %cst_63 = arith.constant dense<0.000000e+00> : vector<4x16x8xf32>
    %211 = tpu.matmul %210, %196, %cst_63 {dimension_numbers = #tpu.dot_dimension_numbers<[2], [1], [1], [2], [0, 0, 0, 1, 1, 2], [0], [0]>} : vector<4x16x16xbf16>, vector<4x16x8xbf16>, vector<4x16x8xf32> -> vector<4x16x8xf32>
    "tpu.trace_stop"() : () -> ()
    %212 = tpu.transpose %211, [1, 0, 2] : vector<4x16x8xf32> -> vector<16x4x8xf32>
    %213 = vector.shape_cast %212 : vector<16x4x8xf32> to vector<16x32xf32>
    %214 = arith.truncf %213 : vector<16x32xf32> to vector<16x32xbf16>
    %cst_64 = arith.constant dense<0.000000e+00> : vector<16x32xf32>
    %215 = tpu.matmul %214, %172, %cst_64 {dimension_numbers = #tpu.dot_dimension_numbers<[1], [0], [0], [1], [0, 0, 1, 1], [], []>} : vector<16x32xbf16>, vector<32x32xbf16>, vector<16x32xf32> -> vector<16x32xf32>
    %216 = vector.broadcast %173 : vector<1x32xf32> to vector<16x32xf32>
    %217 = arith.addf %215, %216 : vector<16x32xf32>
    %218 = arith.addf %161, %217 : vector<16x32xf32>
    %219 = vector.extract_strided_slice %0 {offsets = [14, 0], sizes = [1, 32], strides = [1, 1]} : vector<27x32xf32> to vector<1x32xf32>
    %220 = vector.extract_strided_slice %0 {offsets = [15, 0], sizes = [1, 32], strides = [1, 1]} : vector<27x32xf32> to vector<1x32xf32>
    %cst_65 = arith.constant dense<0.000000e+00> : vector<16xf32>
    %221 = vector.multi_reduction <add>, %218, %cst_65 [1] : vector<16x32xf32> to vector<16xf32>
    %222 = vector.shape_cast %221 : vector<16xf32> to vector<16x1xf32>
    %cst_66 = arith.constant 3.200000e+01 : f32
    %223 = vector.broadcast %cst_66 : f32 to vector<16x1xf32>
    %224 = arith.divf %222, %223 : vector<16x1xf32>
    %225 = vector.broadcast %224 : vector<16x1xf32> to vector<16x32xf32>
    %226 = arith.subf %218, %225 : vector<16x32xf32>
    %227 = arith.mulf %226, %226 : vector<16x32xf32>
    %cst_67 = arith.constant dense<0.000000e+00> : vector<16xf32>
    %228 = vector.multi_reduction <add>, %227, %cst_67 [1] : vector<16x32xf32> to vector<16xf32>
    %229 = vector.shape_cast %228 : vector<16xf32> to vector<16x1xf32>
    %cst_68 = arith.constant 3.200000e+01 : f32
    %230 = vector.broadcast %cst_68 : f32 to vector<16x1xf32>
    %231 = arith.divf %229, %230 : vector<16x1xf32>
    %232 = vector.broadcast %224 : vector<16x1xf32> to vector<16x32xf32>
    %233 = arith.subf %218, %232 : vector<16x32xf32>
    %cst_69 = arith.constant 9.99999974E-6 : f32
    %234 = vector.broadcast %cst_69 : f32 to vector<16x1xf32>
    %235 = arith.addf %231, %234 : vector<16x1xf32>
    %236 = math.rsqrt %235 : vector<16x1xf32>
    %237 = vector.broadcast %236 : vector<16x1xf32> to vector<16x32xf32>
    %238 = arith.mulf %233, %237 : vector<16x32xf32>
    %239 = vector.broadcast %219 : vector<1x32xf32> to vector<16x32xf32>
    %240 = arith.mulf %238, %239 : vector<16x32xf32>
    %241 = vector.broadcast %220 : vector<1x32xf32> to vector<16x32xf32>
    %242 = arith.addf %240, %241 : vector<16x32xf32>
    %c10 = arith.constant 10 : index
    %c0_70 = arith.constant 0 : index
    %c0_71 = arith.constant 0 : index
    %243 = vector.load %arg1[%c10, %c0_70, %c0_71] : memref<17x32x32xbf16, #tpu.memory_space<vmem>>, vector<1x32x32xbf16>
    %244 = vector.shape_cast %243 : vector<1x32x32xbf16> to vector<32x32xbf16>
    %c11 = arith.constant 11 : index
    %c0_72 = arith.constant 0 : index
    %c0_73 = arith.constant 0 : index
    %245 = vector.load %arg1[%c11, %c0_72, %c0_73] : memref<17x32x32xbf16, #tpu.memory_space<vmem>>, vector<1x32x32xbf16>
    %246 = vector.shape_cast %245 : vector<1x32x32xbf16> to vector<32x32xbf16>
    %c12 = arith.constant 12 : index
    %c0_74 = arith.constant 0 : index
    %c0_75 = arith.constant 0 : index
    %247 = vector.load %arg1[%c12, %c0_74, %c0_75] : memref<17x32x32xbf16, #tpu.memory_space<vmem>>, vector<1x32x32xbf16>
    %248 = vector.shape_cast %247 : vector<1x32x32xbf16> to vector<32x32xbf16>
    %249 = vector.extract_strided_slice %0 {offsets = [16, 0], sizes = [1, 32], strides = [1, 1]} : vector<27x32xf32> to vector<1x32xf32>
    %250 = vector.extract_strided_slice %0 {offsets = [17, 0], sizes = [1, 32], strides = [1, 1]} : vector<27x32xf32> to vector<1x32xf32>
    %251 = vector.extract_strided_slice %0 {offsets = [18, 0], sizes = [1, 32], strides = [1, 1]} : vector<27x32xf32> to vector<1x32xf32>
    %c13 = arith.constant 13 : index
    %c0_76 = arith.constant 0 : index
    %c0_77 = arith.constant 0 : index
    %252 = vector.load %arg1[%c13, %c0_76, %c0_77] : memref<17x32x32xbf16, #tpu.memory_space<vmem>>, vector<1x32x32xbf16>
    %253 = vector.shape_cast %252 : vector<1x32x32xbf16> to vector<32x32xbf16>
    %254 = vector.extract_strided_slice %0 {offsets = [19, 0], sizes = [1, 32], strides = [1, 1]} : vector<27x32xf32> to vector<1x32xf32>
    %255 = arith.truncf %242 : vector<16x32xf32> to vector<16x32xbf16>
    %cst_78 = arith.constant dense<0.000000e+00> : vector<16x32xf32>
    %256 = tpu.matmul %255, %244, %cst_78 {dimension_numbers = #tpu.dot_dimension_numbers<[1], [0], [0], [1], [0, 0, 1, 1], [], []>} : vector<16x32xbf16>, vector<32x32xbf16>, vector<16x32xf32> -> vector<16x32xf32>
    %257 = vector.broadcast %249 : vector<1x32xf32> to vector<16x32xf32>
    %258 = arith.addf %256, %257 : vector<16x32xf32>
    %cst_79 = arith.constant 0.353553385 : f32
    %259 = vector.broadcast %cst_79 : f32 to vector<16x32xf32>
    %260 = arith.mulf %258, %259 : vector<16x32xf32>
    %261 = arith.truncf %161 : vector<16x32xf32> to vector<16x32xbf16>
    %cst_80 = arith.constant dense<0.000000e+00> : vector<16x32xf32>
    %262 = tpu.matmul %261, %246, %cst_80 {dimension_numbers = #tpu.dot_dimension_numbers<[1], [0], [0], [1], [0, 0, 1, 1], [], []>} : vector<16x32xbf16>, vector<32x32xbf16>, vector<16x32xf32> -> vector<16x32xf32>
    %263 = vector.broadcast %250 : vector<1x32xf32> to vector<16x32xf32>
    %264 = arith.addf %262, %263 : vector<16x32xf32>
    %265 = arith.truncf %161 : vector<16x32xf32> to vector<16x32xbf16>
    %cst_81 = arith.constant dense<0.000000e+00> : vector<16x32xf32>
    %266 = tpu.matmul %265, %248, %cst_81 {dimension_numbers = #tpu.dot_dimension_numbers<[1], [0], [0], [1], [0, 0, 1, 1], [], []>} : vector<16x32xbf16>, vector<32x32xbf16>, vector<16x32xf32> -> vector<16x32xf32>
    %267 = vector.broadcast %251 : vector<1x32xf32> to vector<16x32xf32>
    %268 = arith.addf %266, %267 : vector<16x32xf32>
    %269 = vector.shape_cast %260 : vector<16x32xf32> to vector<16x4x8xf32>
    %270 = tpu.transpose %269, [1, 0, 2] : vector<16x4x8xf32> -> vector<4x16x8xf32>
    %271 = arith.truncf %270 : vector<4x16x8xf32> to vector<4x16x8xbf16>
    %272 = vector.shape_cast %264 : vector<16x32xf32> to vector<16x4x8xf32>
    %273 = tpu.transpose %272, [1, 0, 2] : vector<16x4x8xf32> -> vector<4x16x8xf32>
    %274 = arith.truncf %273 : vector<4x16x8xf32> to vector<4x16x8xbf16>
    %275 = vector.shape_cast %268 : vector<16x32xf32> to vector<16x4x8xf32>
    %276 = tpu.transpose %275, [1, 0, 2] : vector<16x4x8xf32> -> vector<4x16x8xf32>
    %277 = arith.truncf %276 : vector<4x16x8xf32> to vector<4x16x8xbf16>
    "tpu.trace_start"() <{level = 10 : i32, message = "hqd,hkd->hqk"}> : () -> ()
    %cst_82 = arith.constant dense<0.000000e+00> : vector<4x16x16xf32>
    %278 = tpu.matmul %271, %274, %cst_82 {dimension_numbers = #tpu.dot_dimension_numbers<[2], [2], [1], [1], [0, 0, 0, 1, 1, 1], [0], [0]>} : vector<4x16x8xbf16>, vector<4x16x8xbf16>, vector<4x16x16xf32> -> vector<4x16x16xf32>
    "tpu.trace_stop"() : () -> ()
    %279 = vector.shape_cast %38 : vector<16x16xf32> to vector<1x16x16xf32>
    %280 = vector.broadcast %279 : vector<1x16x16xf32> to vector<4x16x16xf32>
    %281 = arith.addf %278, %280 : vector<4x16x16xf32>
    %cst_83 = arith.constant dense<0xFF800000> : vector<4x16xf32>
    %282 = vector.multi_reduction <maximumf>, %281, %cst_83 [2] : vector<4x16x16xf32> to vector<4x16xf32>
    %283 = vector.shape_cast %282 : vector<4x16xf32> to vector<4x16x1xf32>
    %284 = vector.broadcast %283 : vector<4x16x1xf32> to vector<4x16x16xf32>
    %285 = arith.subf %281, %284 : vector<4x16x16xf32>
    %286 = math.exp %285 : vector<4x16x16xf32>
    %cst_84 = arith.constant dense<0.000000e+00> : vector<4x16xf32>
    %287 = vector.multi_reduction <add>, %286, %cst_84 [2] : vector<4x16x16xf32> to vector<4x16xf32>
    %288 = vector.shape_cast %287 : vector<4x16xf32> to vector<4x16x1xf32>
    %289 = vector.broadcast %288 : vector<4x16x1xf32> to vector<4x16x16xf32>
    %290 = arith.divf %286, %289 : vector<4x16x16xf32>
    %291 = arith.truncf %290 : vector<4x16x16xf32> to vector<4x16x16xbf16>
    "tpu.trace_start"() <{level = 10 : i32, message = "hqk,hkd->hqd"}> : () -> ()
    %cst_85 = arith.constant dense<0.000000e+00> : vector<4x16x8xf32>
    %292 = tpu.matmul %291, %277, %cst_85 {dimension_numbers = #tpu.dot_dimension_numbers<[2], [1], [1], [2], [0, 0, 0, 1, 1, 2], [0], [0]>} : vector<4x16x16xbf16>, vector<4x16x8xbf16>, vector<4x16x8xf32> -> vector<4x16x8xf32>
    "tpu.trace_stop"() : () -> ()
    %293 = tpu.transpose %292, [1, 0, 2] : vector<4x16x8xf32> -> vector<16x4x8xf32>
    %294 = vector.shape_cast %293 : vector<16x4x8xf32> to vector<16x32xf32>
    %295 = arith.truncf %294 : vector<16x32xf32> to vector<16x32xbf16>
    %cst_86 = arith.constant dense<0.000000e+00> : vector<16x32xf32>
    %296 = tpu.matmul %295, %253, %cst_86 {dimension_numbers = #tpu.dot_dimension_numbers<[1], [0], [0], [1], [0, 0, 1, 1], [], []>} : vector<16x32xbf16>, vector<32x32xbf16>, vector<16x32xf32> -> vector<16x32xf32>
    %297 = vector.broadcast %254 : vector<1x32xf32> to vector<16x32xf32>
    %298 = arith.addf %296, %297 : vector<16x32xf32>
    %299 = arith.addf %242, %298 : vector<16x32xf32>
    %300 = vector.extract_strided_slice %0 {offsets = [20, 0], sizes = [1, 32], strides = [1, 1]} : vector<27x32xf32> to vector<1x32xf32>
    %301 = vector.extract_strided_slice %0 {offsets = [21, 0], sizes = [1, 32], strides = [1, 1]} : vector<27x32xf32> to vector<1x32xf32>
    %cst_87 = arith.constant dense<0.000000e+00> : vector<16xf32>
    %302 = vector.multi_reduction <add>, %299, %cst_87 [1] : vector<16x32xf32> to vector<16xf32>
    %303 = vector.shape_cast %302 : vector<16xf32> to vector<16x1xf32>
    %cst_88 = arith.constant 3.200000e+01 : f32
    %304 = vector.broadcast %cst_88 : f32 to vector<16x1xf32>
    %305 = arith.divf %303, %304 : vector<16x1xf32>
    %306 = vector.broadcast %305 : vector<16x1xf32> to vector<16x32xf32>
    %307 = arith.subf %299, %306 : vector<16x32xf32>
    %308 = arith.mulf %307, %307 : vector<16x32xf32>
    %cst_89 = arith.constant dense<0.000000e+00> : vector<16xf32>
    %309 = vector.multi_reduction <add>, %308, %cst_89 [1] : vector<16x32xf32> to vector<16xf32>
    %310 = vector.shape_cast %309 : vector<16xf32> to vector<16x1xf32>
    %cst_90 = arith.constant 3.200000e+01 : f32
    %311 = vector.broadcast %cst_90 : f32 to vector<16x1xf32>
    %312 = arith.divf %310, %311 : vector<16x1xf32>
    %313 = vector.broadcast %305 : vector<16x1xf32> to vector<16x32xf32>
    %314 = arith.subf %299, %313 : vector<16x32xf32>
    %cst_91 = arith.constant 9.99999974E-6 : f32
    %315 = vector.broadcast %cst_91 : f32 to vector<16x1xf32>
    %316 = arith.addf %312, %315 : vector<16x1xf32>
    %317 = math.rsqrt %316 : vector<16x1xf32>
    %318 = vector.broadcast %317 : vector<16x1xf32> to vector<16x32xf32>
    %319 = arith.mulf %314, %318 : vector<16x32xf32>
    %320 = vector.broadcast %300 : vector<1x32xf32> to vector<16x32xf32>
    %321 = arith.mulf %319, %320 : vector<16x32xf32>
    %322 = vector.broadcast %301 : vector<1x32xf32> to vector<16x32xf32>
    %323 = arith.addf %321, %322 : vector<16x32xf32>
    %c14 = arith.constant 14 : index
    %c0_92 = arith.constant 0 : index
    %c0_93 = arith.constant 0 : index
    %324 = vector.load %arg1[%c14, %c0_92, %c0_93] : memref<17x32x32xbf16, #tpu.memory_space<vmem>>, vector<1x32x32xbf16>
    %325 = vector.shape_cast %324 : vector<1x32x32xbf16> to vector<32x32xbf16>
    %326 = vector.extract_strided_slice %0 {offsets = [22, 0], sizes = [1, 32], strides = [1, 1]} : vector<27x32xf32> to vector<1x32xf32>
    %c15 = arith.constant 15 : index
    %c0_94 = arith.constant 0 : index
    %c0_95 = arith.constant 0 : index
    %327 = vector.load %arg1[%c15, %c0_94, %c0_95] : memref<17x32x32xbf16, #tpu.memory_space<vmem>>, vector<1x32x32xbf16>
    %328 = vector.shape_cast %327 : vector<1x32x32xbf16> to vector<32x32xbf16>
    %329 = vector.extract_strided_slice %0 {offsets = [23, 0], sizes = [1, 32], strides = [1, 1]} : vector<27x32xf32> to vector<1x32xf32>
    %330 = arith.truncf %323 : vector<16x32xf32> to vector<16x32xbf16>
    %cst_96 = arith.constant dense<0.000000e+00> : vector<16x32xf32>
    %331 = tpu.matmul %330, %325, %cst_96 {dimension_numbers = #tpu.dot_dimension_numbers<[1], [0], [0], [1], [0, 0, 1, 1], [], []>} : vector<16x32xbf16>, vector<32x32xbf16>, vector<16x32xf32> -> vector<16x32xf32>
    %332 = vector.broadcast %326 : vector<1x32xf32> to vector<16x32xf32>
    %333 = arith.addf %331, %332 : vector<16x32xf32>
    %cst_97 = arith.constant 0.000000e+00 : f32
    %334 = vector.broadcast %cst_97 : f32 to vector<16x32xf32>
    %335 = arith.maximumf %333, %334 : vector<16x32xf32>
    %336 = arith.truncf %335 : vector<16x32xf32> to vector<16x32xbf16>
    %cst_98 = arith.constant dense<0.000000e+00> : vector<16x32xf32>
    %337 = tpu.matmul %336, %328, %cst_98 {dimension_numbers = #tpu.dot_dimension_numbers<[1], [0], [0], [1], [0, 0, 1, 1], [], []>} : vector<16x32xbf16>, vector<32x32xbf16>, vector<16x32xf32> -> vector<16x32xf32>
    %338 = vector.broadcast %329 : vector<1x32xf32> to vector<16x32xf32>
    %339 = arith.addf %337, %338 : vector<16x32xf32>
    %340 = arith.addf %323, %339 : vector<16x32xf32>
    %341 = vector.extract_strided_slice %0 {offsets = [24, 0], sizes = [1, 32], strides = [1, 1]} : vector<27x32xf32> to vector<1x32xf32>
    %342 = vector.extract_strided_slice %0 {offsets = [25, 0], sizes = [1, 32], strides = [1, 1]} : vector<27x32xf32> to vector<1x32xf32>
    %cst_99 = arith.constant dense<0.000000e+00> : vector<16xf32>
    %343 = vector.multi_reduction <add>, %340, %cst_99 [1] : vector<16x32xf32> to vector<16xf32>
    %344 = vector.shape_cast %343 : vector<16xf32> to vector<16x1xf32>
    %cst_100 = arith.constant 3.200000e+01 : f32
    %345 = vector.broadcast %cst_100 : f32 to vector<16x1xf32>
    %346 = arith.divf %344, %345 : vector<16x1xf32>
    %347 = vector.broadcast %346 : vector<16x1xf32> to vector<16x32xf32>
    %348 = arith.subf %340, %347 : vector<16x32xf32>
    %349 = arith.mulf %348, %348 : vector<16x32xf32>
    %cst_101 = arith.constant dense<0.000000e+00> : vector<16xf32>
    %350 = vector.multi_reduction <add>, %349, %cst_101 [1] : vector<16x32xf32> to vector<16xf32>
    %351 = vector.shape_cast %350 : vector<16xf32> to vector<16x1xf32>
    %cst_102 = arith.constant 3.200000e+01 : f32
    %352 = vector.broadcast %cst_102 : f32 to vector<16x1xf32>
    %353 = arith.divf %351, %352 : vector<16x1xf32>
    %354 = vector.broadcast %346 : vector<16x1xf32> to vector<16x32xf32>
    %355 = arith.subf %340, %354 : vector<16x32xf32>
    %cst_103 = arith.constant 9.99999974E-6 : f32
    %356 = vector.broadcast %cst_103 : f32 to vector<16x1xf32>
    %357 = arith.addf %353, %356 : vector<16x1xf32>
    %358 = math.rsqrt %357 : vector<16x1xf32>
    %359 = vector.broadcast %358 : vector<16x1xf32> to vector<16x32xf32>
    %360 = arith.mulf %355, %359 : vector<16x32xf32>
    %361 = vector.broadcast %341 : vector<1x32xf32> to vector<16x32xf32>
    %362 = arith.mulf %360, %361 : vector<16x32xf32>
    %363 = vector.broadcast %342 : vector<1x32xf32> to vector<16x32xf32>
    %364 = arith.addf %362, %363 : vector<16x32xf32>
    %c16 = arith.constant 16 : index
    %c0_104 = arith.constant 0 : index
    %c0_105 = arith.constant 0 : index
    %365 = vector.load %arg1[%c16, %c0_104, %c0_105] : memref<17x32x32xbf16, #tpu.memory_space<vmem>>, vector<1x32x32xbf16>
    %366 = vector.shape_cast %365 : vector<1x32x32xbf16> to vector<32x32xbf16>
    %367 = arith.truncf %364 : vector<16x32xf32> to vector<16x32xbf16>
    %cst_106 = arith.constant dense<0.000000e+00> : vector<16x32xf32>
    %368 = tpu.matmul %367, %366, %cst_106 {dimension_numbers = #tpu.dot_dimension_numbers<[1], [0], [0], [1], [0, 0, 1, 1], [], []>} : vector<16x32xbf16>, vector<32x32xbf16>, vector<16x32xf32> -> vector<16x32xf32>
    %369 = vector.extract_strided_slice %0 {offsets = [26, 0], sizes = [1, 32], strides = [1, 1]} : vector<27x32xf32> to vector<1x32xf32>
    %370 = vector.broadcast %369 : vector<1x32xf32> to vector<16x32xf32>
    %371 = arith.addf %368, %370 : vector<16x32xf32>
    %372 = vector.shape_cast %371 : vector<16x32xf32> to vector<8x2x32xf32>
    %cst_107 = arith.constant dense<0xFF800000> : vector<8x32xf32>
    %373 = vector.multi_reduction <maximumf>, %372, %cst_107 [1] : vector<8x2x32xf32> to vector<8x32xf32>
    %374 = vector.shape_cast %373 : vector<8x32xf32> to vector<8x1x32xf32>
    %375 = vector.broadcast %374 : vector<8x1x32xf32> to vector<8x2x32xf32>
    %376 = arith.subf %372, %375 : vector<8x2x32xf32>
    %377 = math.exp %376 : vector<8x2x32xf32>
    %cst_108 = arith.constant dense<0.000000e+00> : vector<8x32xf32>
    %378 = vector.multi_reduction <add>, %377, %cst_108 [1] : vector<8x2x32xf32> to vector<8x32xf32>
    %379 = vector.shape_cast %378 : vector<8x32xf32> to vector<8x1x32xf32>
    %380 = vector.broadcast %379 : vector<8x1x32xf32> to vector<8x2x32xf32>
    %381 = arith.divf %377, %380 : vector<8x2x32xf32>
    %c0_109 = arith.constant 0 : index
    %c0_110 = arith.constant 0 : index
    %c0_111 = arith.constant 0 : index
    %382 = vector.load %arg3[%c0_109, %c0_110, %c0_111] : memref<8x2x32xf32, #tpu.memory_space<vmem>>, vector<8x2x32xf32>
    tpu.vector_store %arg3[%c0_109, %c0_110, %c0_111], %381 {strides = array<i32>} : memref<8x2x32xf32, #tpu.memory_space<vmem>>, vector<8x2x32xf32>,
    return
  }
}

</mosaic_0001>

<llo_original>
// kernel: galactic_transformer.1
$region0: #{galactic_transformer.1}
  #allocation0 [shape = 'u32[]', space=smem, size = 0x4, offset = 0x4, fixed_abs, tag = 'smem constant byte address 0x4 - core index']
  #allocation1 [shape = 'u32[144,128]{1,0:T(1,128)}', space=vmem, size = 0x12000, scoped, tag = 'internal scratch']
  %s0 = inlined_call_operand.hbm [shape: f32[16,32], index: 0, kind: input, shape index: {}]
  %s1 = inlined_call_operand.hbm [shape: bf16[17,32,32], index: 1, kind: input, shape index: {}]
  %s2 = inlined_call_operand.hbm [shape: f32[27,32], index: 2, kind: input, shape index: {}]
  %s3 = inlined_call_operand.hbm [shape: f32[8,2,32], index: 3, kind: output, shape index: {}]
  %s4 = sld [smem:[#allocation0]]
  $region34: #{galactic_transformer.1} parent=0
    _
  %s6 = ssub.s32 1, %s4
  %s7 = scalar_select 0, %s6, %s4
  $region1: #{galactic_transformer.1} parent=0
    #allocation2 [shape = 'u8[8192]{0}', space=vmem, size = 0x2000, scoped, tag = 'input window, operand 0, single buffered']
    #allocation3 [shape = 's32[1]{0}', space=sflag, size = 0x4, scoped, tag = 'scoped memory for galactic_transformer.1']
    #allocation4 [shape = 's32[1]{0}', space=sflag, size = 0x4, scoped, tag = 'scoped memory for galactic_transformer.1']
    #allocation5 [shape = 'u8[139264]{0}', space=vmem, size = 0x22000, scoped, tag = 'input window, operand 1, single buffered']
    #allocation6 [shape = 's32[1]{0}', space=sflag, size = 0x4, scoped, tag = 'scoped memory for galactic_transformer.1']
    #allocation7 [shape = 'u8[16384]{0}', space=vmem, size = 0x4000, scoped, tag = 'input window, operand 2, single buffered']
    #allocation8 [shape = 'u8[8192]{0}', space=vmem, size = 0x2000, scoped, tag = 'output window, operand 0, single buffered']
    %8 = vsyncpa [#allocation3], 0
    %9 = vsyncpa [#allocation6], 0
    %10 = vsyncpa [#allocation4], 0
    // Predicated region
    $region2: #{galactic_transformer.1} parent=1 // pred_check
      _
    $region3: #{galactic_transformer.1} parent=1 // pred_check_branch
      %12 = sbr.rel (0) target = $region5
    $region4: #{galactic_transformer.1} parent=1 // pred_region
      %s14 = ssub.s32 256, 256
      %15 = vsyncadd [#allocation3], %s14
      %s16 = sshll.u32 [#allocation2], 4
      %s17 = int_to_ptr.vmem [resolvable:$true] %s16
      %22 = dma.hbm_to_vmem [thread:$0]  %s0, 256, %s17, [#allocation3], 128, 128, 8
    $region5: #{galactic_transformer.1} parent=1 // pred_fallthru
      _
    // Predicated region
    $region6: #{galactic_transformer.1} parent=1 // pred_check
      _
    $region7: #{galactic_transformer.1} parent=1 // pred_check_branch
      %24 = sbr.rel (0) target = $region9
    $region8: #{galactic_transformer.1} parent=1 // pred_region
      %s26 = ssub.s32 4352, 4352
      %27 = vsyncadd [#allocation6], %s26
      %s28 = sshll.u32 [#allocation5], 4
      %s29 = int_to_ptr.vmem [resolvable:$true] %s28
      %34 = dma.hbm_to_vmem [thread:$0]  %s1, 4352, %s29, [#allocation6], 64, 64, 4
    $region9: #{galactic_transformer.1} parent=1 // pred_fallthru
      _
    // Predicated region
    $region10: #{galactic_transformer.1} parent=1 // pred_check
      _
    $region11: #{galactic_transformer.1} parent=1 // pred_check_branch
      %36 = sbr.rel (0) target = $region13
    $region12: #{galactic_transformer.1} parent=1 // pred_region
      %s38 = ssub.s32 512, 512
      %39 = vsyncadd [#allocation6], %s38
      %s40 = sshll.u32 [#allocation7], 4
      %s41 = int_to_ptr.vmem [resolvable:$true] %s40
      %46 = dma.hbm_to_vmem [thread:$0]  %s2, 512, %s41, [#allocation6], 128, 128, 8
    $region13: #{galactic_transformer.1} parent=1 // pred_fallthru
      _
    // Predicated region
    $region14: #{galactic_transformer.1} parent=1 // pred_check
      _
    $region15: #{galactic_transformer.1} parent=1 // pred_check_branch
      %48 = sbr.rel (0) target = $region17
    $region16: #{galactic_transformer.1} parent=1 // pred_region
      %49 = dma.done [#allocation3], 256
    $region17: #{galactic_transformer.1} parent=1 // pred_fallthru
      _
    // Predicated region
    $region18: #{galactic_transformer.1} parent=1 // pred_check
      _
    $region19: #{galactic_transformer.1} parent=1 // pred_check_branch
      %51 = sbr.rel (0) target = $region21
    $region20: #{galactic_transformer.1} parent=1 // pred_region
      %52 = dma.done [#allocation6], 4352
    $region21: #{galactic_transformer.1} parent=1 // pred_fallthru
      _
    // Predicated region
    $region22: #{galactic_transformer.1} parent=1 // pred_check
      _
    $region23: #{galactic_transformer.1} parent=1 // pred_check_branch
      %54 = sbr.rel (0) target = $region25
    $region24: #{galactic_transformer.1} parent=1 // pred_region
      %55 = dma.done [#allocation6], 512
    $region25: #{galactic_transformer.1} parent=1 // pred_fallthru
      _
    %v57 = vld [vmem:[#allocation7] sm:$0xff]
    %v58 = vld [vmem:[#allocation7 + $0x8] sm:$0xff]
    %v59 = vld [vmem:[#allocation7 + $0x10] sm:$0xff]
    %v60 = vld [vmem:[#allocation7 + $0x18] sm:$0x7]
    %v61 = vlaneseq
    %v62 = vshrl.u32 %v61, 7
    %v63 = vadd.s32 %v62, 8
    %vm64 = vcmp.lt.s32.totalorder %v62, 0
    %v65 = vsub.s32 0, %v62
    %v66 = vsel %vm64, %v65, %v62
    %v67 = vshrl.u32 %v66, 1
    %v68 = vand.u32 %v66, 1
    %v69 = vsub.s32 0, %v68
    %v70 = vsel %vm64, %v69, %v68
    %vm71 = vcmp.lt.s32.totalorder %v63, 0
    %v72 = vsub.s32 0, %v63
    %v73 = vsel %vm71, %v72, %v63
    %v74 = vshrl.u32 %v73, 1
    %v75 = vand.u32 %v73, 1
    %v76 = vsub.s32 0, %v75
    %v77 = vsel %vm71, %v76, %v75
    %vm78 = vcmp.ne.s32.totalorder %v70, 0
    %vm79 = vcmp.ne.s32.totalorder %v77, 0
    %vm80 = vcmp.lt.s32.totalorder %v70, 0
    %vm81 = vcmp.lt.s32.totalorder %v77, 0
    %vm82 = vmand %vm80, %vm78
    %vm83 = vmand %vm81, %vm79
    %v84 = vadd.s32 %v70, 2
    %v85 = vadd.s32 %v77, 2
    %v86 = vsel %vm82, %v84, %v70
    %v87 = vsel %vm83, %v85, %v77
    %v88 = vlaneseq
    %v89 = vand.u32 %v88, 127
    %vm90 = vcmp.lt.s32.totalorder %v89, 0
    %v91 = vsub.s32 0, %v89
    %v92 = vsel %vm90, %v91, %v89
    %v93 = vshrl.u32 %v92, 1
    %v94 = vand.u32 %v92, 1
    %v95 = vsub.s32 0, %v94
    %v96 = vsel %vm90, %v95, %v94
    %vm97 = vcmp.ne.s32.totalorder %v96, 0
    %vm98 = vcmp.lt.s32.totalorder %v96, 0
    %vm99 = vmand %vm98, %vm97
    %v100 = vadd.s32 %v96, 2
    %v101 = vsel %vm99, %v100, %v96
    %vm102 = vcmp.eq.s32.totalorder %v86, %v101
    %vm103 = vcmp.eq.s32.totalorder %v87, %v101
    %v104 = vsel %vm102, 0.0, -1e+30
    %v105 = vsel %vm103, 0.0, -1e+30
    %v106 = vld [vmem:[#allocation2] sm:$0xff]
    %v107 = vld [vmem:[#allocation2 + $0x8] sm:$0xff]
    %v108 = vld [vmem:[#allocation5] sm:$0xf]
    %v109 = vld [vmem:[#allocation5 + $0x4] sm:$0xf]
    %v110 = vld [vmem:[#allocation5 + $0x8] sm:$0xf]
    %v111 = vld [vmem:[#allocation5 + $0xc] sm:$0xf]
    %s112 = scalar_lea.vmem [#allocation5], 16
    %v113 = vld [vmem:[%s112] sm:$0xf]
    %v114 = vld [vmem:[%s112 + $0x4] sm:$0xf]
    %v115 = vld [vmem:[%s112 + $0x8] sm:$0xf]
    %v116 = vld [vmem:[%s112 + $0xc] sm:$0xf]
    %s117 = scalar_lea.vmem [#allocation5], 32
    %v118 = vld [vmem:[%s117] sm:$0xf]
    %v119 = vld [vmem:[%s117 + $0x4] sm:$0xf]
    %v120 = vld [vmem:[%s117 + $0x8] sm:$0xf]
    %v121 = vld [vmem:[%s117 + $0xc] sm:$0xf]
    %s122 = scalar_lea.vmem [#allocation5], 48
    %v123 = vld [vmem:[%s122] sm:$0xf]
    %v124 = vld [vmem:[%s122 + $0x4] sm:$0xf]
    %v125 = vld [vmem:[%s122 + $0x8] sm:$0xf]
    %v126 = vld [vmem:[%s122 + $0xc] sm:$0xf]
    %v127 = vpack.c.bf16 %v107, %v106
    %v128 = vlaneseq
    %v129 = vshrl.u32 %v128, 7
    %v130 = vsub.s32 0, %v129
    %v131 = vrot.slane %v57, %v130
    %v136 = vunpack.c.l.b16 %v108
    %v137 = vunpack.c.l.b16 %v109
    %v138 = vunpack.c.l.b16 %v110
    %v139 = vunpack.c.l.b16 %v111
    %v140 = vpack.c.b16 %v137, %v136
    %v141 = vpack.c.b16 %v139, %v138
    %vm144 = vcmask 261120
    %v146 = vsel %vm144, %v127, 0
    %148 = vmatprep.subr.bf16.mxu0 0
    %149 = vmatpush1.bf16.msra.mxu0 0
    %150 = vmatprep.subr.bf16.mxu0 0
    %151 = vmatpush1.bf16.msra.mxu0 0
    %152 = vmatprep.subr.bf16.mxu0 0
    %153 = vmatpush1.bf16.msra.mxu0 0
    %154 = vmatprep.subr.bf16.mxu0 0
    %155 = vmatpush1.bf16.msra.mxu0 0
    %156 = vmatprep.subr.bf16.mxu0 0
    %157 = vmatpush1.bf16.msra.mxu0 0
    %158 = vmatprep.subr.bf16.mxu0 0
    %159 = vmatpush1.bf16.msra.mxu0 0
    %160 = vmatprep.subr.bf16.mxu0 0
    %161 = vmatpush1.bf16.msra.mxu0 %v141
    %162 = vmatprep.subr.bf16.mxu0 0
    %163 = vmatpush1.bf16.msra.mxu0 %v140
    %164 = vmatprep.subr.bf16.mxu0 0
    %165 = vmatpush2.bf16.msra.mxu0 0
    %166 = vmatprep.subr.bf16.mxu0 0
    %167 = vmatpush2.bf16.msra.mxu0 0
    %168 = vmatprep.subr.bf16.mxu0 0
    %169 = vmatpush2.bf16.msra.mxu0 0
    %170 = vmatprep.subr.bf16.mxu0 0
    %171 = vmatpush2.bf16.msra.mxu0 0
    %172 = vmatprep.subr.bf16.mxu0 0
    %173 = vmatpush2.bf16.msra.mxu0 0
    %174 = vmatprep.subr.bf16.mxu0 0
    %175 = vmatpush2.bf16.msra.mxu0 0
    %176 = vmatprep.subr.bf16.mxu0 0
    %177 = vmatpush2.bf16.msra.mxu0 0
    %178 = vmatprep.subr.bf16.mxu0 0
    %179 = vmatpush2.bf16.msra.mxu0 0
    %180 = vmatprep.mubr.bf16.mxu0 0
    %181 = vmatmul.mubr.bf16.gmra.mxu0 %v146
    %v182 = vpop.f32.mrf.mxu0
    %v183 = vadd.f32 %v131, %v182
    %v184 = vpop.f32.mrf.mxu0
    %v185 = vpop.f32.mrf.mxu0
    %v186 = vadd.f32 %v131, %v185
    %v187 = vpop.f32.mrf.mxu0
    %188 = vdwg.mxu0
    %v189 = vmul.f32 %v183, 0.35355338
    %v190 = vmul.f32 %v186, 0.35355338
    %v191 = vlaneseq
    %v192 = vshrl.u32 %v191, 7
    %v193 = vsub.s32 1, %v192
    %v194 = vrot.slane %v57, %v193
    %v199 = vunpack.c.l.b16 %v113
    %v200 = vunpack.c.l.b16 %v114
    %v201 = vunpack.c.l.b16 %v115
    %v202 = vunpack.c.l.b16 %v116
    %v203 = vpack.c.b16 %v200, %v199
    %v204 = vpack.c.b16 %v202, %v201
    %207 = vmatprep.subr.bf16.mxu0 0
    %208 = vmatpush1.bf16.msra.mxu0 0
    %209 = vmatprep.subr.bf16.mxu0 0
    %210 = vmatpush1.bf16.msra.mxu0 0
    %211 = vmatprep.subr.bf16.mxu0 0
    %212 = vmatpush1.bf16.msra.mxu0 0
    %213 = vmatprep.subr.bf16.mxu0 0
    %214 = vmatpush1.bf16.msra.mxu0 0
    %215 = vmatprep.subr.bf16.mxu0 0
    %216 = vmatpush1.bf16.msra.mxu0 0
    %217 = vmatprep.subr.bf16.mxu0 0
    %218 = vmatpush1.bf16.msra.mxu0 0
    %219 = vmatprep.subr.bf16.mxu0 0
    %220 = vmatpush1.bf16.msra.mxu0 %v204
    %221 = vmatprep.subr.bf16.mxu0 0
    %222 = vmatpush1.bf16.msra.mxu0 %v203
    %223 = vmatprep.subr.bf16.mxu0 0
    %224 = vmatpush2.bf16.msra.mxu0 0
    %225 = vmatprep.subr.bf16.mxu0 0
    %226 = vmatpush2.bf16.msra.mxu0 0
    %227 = vmatprep.subr.bf16.mxu0 0
    %228 = vmatpush2.bf16.msra.mxu0 0
    %229 = vmatprep.subr.bf16.mxu0 0
    %230 = vmatpush2.bf16.msra.mxu0 0
    %231 = vmatprep.subr.bf16.mxu0 0
    %232 = vmatpush2.bf16.msra.mxu0 0
    %233 = vmatprep.subr.bf16.mxu0 0
    %234 = vmatpush2.bf16.msra.mxu0 0
    %235 = vmatprep.subr.bf16.mxu0 0
    %236 = vmatpush2.bf16.msra.mxu0 0
    %237 = vmatprep.subr.bf16.mxu0 0
    %238 = vmatpush2.bf16.msra.mxu0 0
    %239 = vmatprep.mubr.bf16.mxu0 0
    %240 = vmatmul.mubr.bf16.gmra.mxu0 %v146
    %v241 = vpop.f32.mrf.mxu0
    %v242 = vadd.f32 %v194, %v241
    %v243 = vpop.f32.mrf.mxu0
    %v244 = vpop.f32.mrf.mxu0
    %v245 = vadd.f32 %v194, %v244
    %v246 = vpop.f32.mrf.mxu0
    %247 = vdwg.mxu0
    %v248 = vlaneseq
    %v249 = vshrl.u32 %v248, 7
    %v250 = vsub.s32 2, %v249
    %v251 = vrot.slane %v57, %v250
    %v256 = vunpack.c.l.b16 %v118
    %v257 = vunpack.c.l.b16 %v119
    %v258 = vunpack.c.l.b16 %v120
    %v259 = vunpack.c.l.b16 %v121
    %v260 = vpack.c.b16 %v257, %v256
    %v261 = vpack.c.b16 %v259, %v258
    %264 = vmatprep.subr.bf16.mxu0 0
    %265 = vmatpush1.bf16.msra.mxu0 0
    %266 = vmatprep.subr.bf16.mxu0 0
    %267 = vmatpush1.bf16.msra.mxu0 0
    %268 = vmatprep.subr.bf16.mxu0 0
    %269 = vmatpush1.bf16.msra.mxu0 0
    %270 = vmatprep.subr.bf16.mxu0 0
    %271 = vmatpush1.bf16.msra.mxu0 0
    %272 = vmatprep.subr.bf16.mxu0 0
    %273 = vmatpush1.bf16.msra.mxu0 0
    %274 = vmatprep.subr.bf16.mxu0 0
    %275 = vmatpush1.bf16.msra.mxu0 0
    %276 = vmatprep.subr.bf16.mxu0 0
    %277 = vmatpush1.bf16.msra.mxu0 %v261
    %278 = vmatprep.subr.bf16.mxu0 0
    %279 = vmatpush1.bf16.msra.mxu0 %v260
    %280 = vmatprep.subr.bf16.mxu0 0
    %281 = vmatpush2.bf16.msra.mxu0 0
    %282 = vmatprep.subr.bf16.mxu0 0
    %283 = vmatpush2.bf16.msra.mxu0 0
    %284 = vmatprep.subr.bf16.mxu0 0
    %285 = vmatpush2.bf16.msra.mxu0 0
    %286 = vmatprep.subr.bf16.mxu0 0
    %287 = vmatpush2.bf16.msra.mxu0 0
    %288 = vmatprep.subr.bf16.mxu0 0
    %289 = vmatpush2.bf16.msra.mxu0 0
    %290 = vmatprep.subr.bf16.mxu0 0
    %291 = vmatpush2.bf16.msra.mxu0 0
    %292 = vmatprep.subr.bf16.mxu0 0
    %293 = vmatpush2.bf16.msra.mxu0 0
    %294 = vmatprep.subr.bf16.mxu0 0
    %295 = vmatpush2.bf16.msra.mxu0 0
    %296 = vmatprep.mubr.bf16.mxu0 0
    %297 = vmatmul.mubr.bf16.gmra.mxu0 %v146
    %v298 = vpop.f32.mrf.mxu0
    %v299 = vadd.f32 %v251, %v298
    %v300 = vpop.f32.mrf.mxu0
    %v301 = vpop.f32.mrf.mxu0
    %v302 = vadd.f32 %v251, %v301
    %v303 = vpop.f32.mrf.mxu0
    %304 = vdwg.mxu0
    %307 = vrot.lane.b32.xlu0 %v189, 120
    %v308 = vpop.permute.xlu0 %307
    %309 = vrot.lane.b32.xlu0 %v190, 120
    %v310 = vpop.permute.xlu0 %309
    %313 = vrot.lane.b32.xlu0 %v189, 112
    %v314 = vpop.permute.xlu0 %313
    %315 = vrot.lane.b32.xlu0 %v190, 112
    %v316 = vpop.permute.xlu0 %315
    %319 = vrot.lane.b32.xlu0 %v189, 104
    %v320 = vpop.permute.xlu0 %319
    %321 = vrot.lane.b32.xlu0 %v190, 104
    %v322 = vpop.permute.xlu0 %321
    %v325 = vcombine.low %v189, %v314
    %v326 = vcombine.high %v189, %v314
    %v328 = vunpack.c.l.s4 1983009808
    %v329 = vunpack.c.0.s8 %v328
    %v330 = vlaneseq
    %v331 = vshrl.u32 %v330, 7
    %v332 = vsub.s32 %v329, %v331
    %v333 = vrot.slane %v325, %v332
    %v335 = vunpack.c.l.s4 1983009808
    %v336 = vunpack.c.0.s8 %v335
    %v337 = vlaneseq
    %v338 = vshrl.u32 %v337, 7
    %v339 = vsub.s32 %v336, %v338
    %v340 = vrot.slane %v326, %v339
    %v341 = vcombine.low %v308, %v320
    %v342 = vcombine.high %v308, %v320
    %v344 = vunpack.c.l.s4 1983009808
    %v345 = vunpack.c.0.s8 %v344
    %v346 = vlaneseq
    %v347 = vshrl.u32 %v346, 7
    %v348 = vsub.s32 %v345, %v347
    %v349 = vrot.slane %v341, %v348
    %v351 = vunpack.c.l.s4 1983009808
    %v352 = vunpack.c.0.s8 %v351
    %v353 = vlaneseq
    %v354 = vshrl.u32 %v353, 7
    %v355 = vsub.s32 %v352, %v354
    %v356 = vrot.slane %v342, %v355
    %v357 = vcombine.low %v333, %v349
    %v358 = vcombine.high %v333, %v349
    %v360 = vunpack.c.l.s4 1934713408
    %v361 = vunpack.c.0.s8 %v360
    %v362 = vlaneseq
    %v363 = vshrl.u32 %v362, 7
    %v364 = vsub.s32 %v361, %v363
    %v365 = vrot.slane %v357, %v364
    %v367 = vunpack.c.l.s4 1934713408
    %v368 = vunpack.c.0.s8 %v367
    %v369 = vlaneseq
    %v370 = vshrl.u32 %v369, 7
    %v371 = vsub.s32 %v368, %v370
    %v372 = vrot.slane %v358, %v371
    %v373 = vcombine.low %v340, %v356
    %v374 = vcombine.high %v340, %v356
    %v376 = vunpack.c.l.s4 1934713408
    %v377 = vunpack.c.0.s8 %v376
    %v378 = vlaneseq
    %v379 = vshrl.u32 %v378, 7
    %v380 = vsub.s32 %v377, %v379
    %v381 = vrot.slane %v373, %v380
    %v383 = vunpack.c.l.s4 1934713408
    %v384 = vunpack.c.0.s8 %v383
    %v385 = vlaneseq
    %v386 = vshrl.u32 %v385, 7
    %v387 = vsub.s32 %v384, %v386
    %v388 = vrot.slane %v374, %v387
    %v389 = vcombine.high %v365, 0.0
    %v390 = vcombine.high %v372, 0.0
    %v391 = vcombine.high %v381, 0.0
    %v392 = vcombine.high %v388, 0.0
    %v393 = vcombine.low %v190, %v316
    %v394 = vcombine.high %v190, %v316
    %v396 = vunpack.c.l.s4 1983009808
    %v397 = vunpack.c.0.s8 %v396
    %v398 = vlaneseq
    %v399 = vshrl.u32 %v398, 7
    %v400 = vsub.s32 %v397, %v399
    %v401 = vrot.slane %v393, %v400
    %v403 = vunpack.c.l.s4 1983009808
    %v404 = vunpack.c.0.s8 %v403
    %v405 = vlaneseq
    %v406 = vshrl.u32 %v405, 7
    %v407 = vsub.s32 %v404, %v406
    %v408 = vrot.slane %v394, %v407
    %v409 = vcombine.low %v310, %v322
    %v410 = vcombine.high %v310, %v322
    %v412 = vunpack.c.l.s4 1983009808
    %v413 = vunpack.c.0.s8 %v412
    %v414 = vlaneseq
    %v415 = vshrl.u32 %v414, 7
    %v416 = vsub.s32 %v413, %v415
    %v417 = vrot.slane %v409, %v416
    %v419 = vunpack.c.l.s4 1983009808
    %v420 = vunpack.c.0.s8 %v419
    %v421 = vlaneseq
    %v422 = vshrl.u32 %v421, 7
    %v423 = vsub.s32 %v420, %v422
    %v424 = vrot.slane %v410, %v423
    %v425 = vcombine.low %v401, %v417
    %v426 = vcombine.high %v401, %v417
    %v428 = vunpack.c.l.s4 1934713408
    %v429 = vunpack.c.0.s8 %v428
    %v430 = vlaneseq
    %v431 = vshrl.u32 %v430, 7
    %v432 = vsub.s32 %v429, %v431
    %v433 = vrot.slane %v425, %v432
    %v435 = vunpack.c.l.s4 1934713408
    %v436 = vunpack.c.0.s8 %v435
    %v437 = vlaneseq
    %v438 = vshrl.u32 %v437, 7
    %v439 = vsub.s32 %v436, %v438
    %v440 = vrot.slane %v426, %v439
    %v441 = vcombine.low %v408, %v424
    %v442 = vcombine.high %v408, %v424
    %v444 = vunpack.c.l.s4 1934713408
    %v445 = vunpack.c.0.s8 %v444
    %v446 = vlaneseq
    %v447 = vshrl.u32 %v446, 7
    %v448 = vsub.s32 %v445, %v447
    %v449 = vrot.slane %v441, %v448
    %v451 = vunpack.c.l.s4 1934713408
    %v452 = vunpack.c.0.s8 %v451
    %v453 = vlaneseq
    %v454 = vshrl.u32 %v453, 7
    %v455 = vsub.s32 %v452, %v454
    %v456 = vrot.slane %v442, %v455
    %v457 = vcombine.high %v433, 0.0
    %v458 = vcombine.high %v440, 0.0
    %v459 = vcombine.high %v449, 0.0
    %v460 = vcombine.high %v456, 0.0
    %v461 = vcombine.low %v365, %v372
    %v463 = vunpack.c.l.s4 1983009808
    %v464 = vunpack.c.0.s8 %v463
    %v465 = vlaneseq
    %v466 = vshrl.u32 %v465, 7
    %v467 = vsub.s32 %v464, %v466
    %v468 = vrot.slane %v461, %v467
    %v469 = vcombine.low %v389, %v390
    %v471 = vunpack.c.l.s4 1983009808
    %v472 = vunpack.c.0.s8 %v471
    %v473 = vlaneseq
    %v474 = vshrl.u32 %v473, 7
    %v475 = vsub.s32 %v472, %v474
    %v476 = vrot.slane %v469, %v475
    %v477 = vcombine.low %v381, %v388
    %v479 = vunpack.c.l.s4 1983009808
    %v480 = vunpack.c.0.s8 %v479
    %v481 = vlaneseq
    %v482 = vshrl.u32 %v481, 7
    %v483 = vsub.s32 %v480, %v482
    %v484 = vrot.slane %v477, %v483
    %v485 = vcombine.low %v391, %v392
    %v487 = vunpack.c.l.s4 1983009808
    %v488 = vunpack.c.0.s8 %v487
    %v489 = vlaneseq
    %v490 = vshrl.u32 %v489, 7
    %v491 = vsub.s32 %v488, %v490
    %v492 = vrot.slane %v485, %v491
    %v493 = vcombine.low %v468, %v476
    %v494 = vcombine.high %v468, %v476
    %v496 = vunpack.c.l.s4 1934713408
    %v497 = vunpack.c.0.s8 %v496
    %v498 = vlaneseq
    %v499 = vshrl.u32 %v498, 7
    %v500 = vsub.s32 %v497, %v499
    %v501 = vrot.slane %v493, %v500
    %v503 = vunpack.c.l.s4 1934713408
    %v504 = vunpack.c.0.s8 %v503
    %v505 = vlaneseq
    %v506 = vshrl.u32 %v505, 7
    %v507 = vsub.s32 %v504, %v506
    %v508 = vrot.slane %v494, %v507
    %v509 = vcombine.low %v484, %v492
    %v510 = vcombine.high %v484, %v492
    %v512 = vunpack.c.l.s4 1934713408
    %v513 = vunpack.c.0.s8 %v512
    %v514 = vlaneseq
    %v515 = vshrl.u32 %v514, 7
    %v516 = vsub.s32 %v513, %v515
    %v517 = vrot.slane %v509, %v516
    %v519 = vunpack.c.l.s4 1934713408
    %v520 = vunpack.c.0.s8 %v519
    %v521 = vlaneseq
    %v522 = vshrl.u32 %v521, 7
    %v523 = vsub.s32 %v520, %v522
    %v524 = vrot.slane %v510, %v523
    %v525 = vcombine.low %v501, %v517
    %v526 = vcombine.high %v501, %v517
    %v527 = vcombine.low %v508, %v524
    %v528 = vcombine.high %v508, %v524
    %v529 = vcombine.low %v433, %v440
    %v531 = vunpack.c.l.s4 1983009808
    %v532 = vunpack.c.0.s8 %v531
    %v533 = vlaneseq
    %v534 = vshrl.u32 %v533, 7
    %v535 = vsub.s32 %v532, %v534
    %v536 = vrot.slane %v529, %v535
    %v537 = vcombine.low %v457, %v458
    %v539 = vunpack.c.l.s4 1983009808
    %v540 = vunpack.c.0.s8 %v539
    %v541 = vlaneseq
    %v542 = vshrl.u32 %v541, 7
    %v543 = vsub.s32 %v540, %v542
    %v544 = vrot.slane %v537, %v543
    %v545 = vcombine.low %v449, %v456
    %v547 = vunpack.c.l.s4 1983009808
    %v548 = vunpack.c.0.s8 %v547
    %v549 = vlaneseq
    %v550 = vshrl.u32 %v549, 7
    %v551 = vsub.s32 %v548, %v550
    %v552 = vrot.slane %v545, %v551
    %v553 = vcombine.low %v459, %v460
    %v555 = vunpack.c.l.s4 1983009808
    %v556 = vunpack.c.0.s8 %v555
    %v557 = vlaneseq
    %v558 = vshrl.u32 %v557, 7
    %v559 = vsub.s32 %v556, %v558
    %v560 = vrot.slane %v553, %v559
    %v561 = vcombine.low %v536, %v544
    %v562 = vcombine.high %v536, %v544
    %v564 = vunpack.c.l.s4 1934713408
    %v565 = vunpack.c.0.s8 %v564
    %v566 = vlaneseq
    %v567 = vshrl.u32 %v566, 7
    %v568 = vsub.s32 %v565, %v567
    %v569 = vrot.slane %v561, %v568
    %v571 = vunpack.c.l.s4 1934713408
    %v572 = vunpack.c.0.s8 %v571
    %v573 = vlaneseq
    %v574 = vshrl.u32 %v573, 7
    %v575 = vsub.s32 %v572, %v574
    %v576 = vrot.slane %v562, %v575
    %v577 = vcombine.low %v552, %v560
    %v578 = vcombine.high %v552, %v560
    %v580 = vunpack.c.l.s4 1934713408
    %v581 = vunpack.c.0.s8 %v580
    %v582 = vlaneseq
    %v583 = vshrl.u32 %v582, 7
    %v584 = vsub.s32 %v581, %v583
    %v585 = vrot.slane %v577, %v584
    %v587 = vunpack.c.l.s4 1934713408
    %v588 = vunpack.c.0.s8 %v587
    %v589 = vlaneseq
    %v590 = vshrl.u32 %v589, 7
    %v591 = vsub.s32 %v588, %v590
    %v592 = vrot.slane %v578, %v591
    %v593 = vcombine.low %v569, %v585
    %v594 = vcombine.high %v569, %v585
    %v595 = vcombine.low %v576, %v592
    %v596 = vcombine.high %v576, %v592
    %v597 = vpack.c.bf16 %v593, %v525
    %v598 = vpack.c.bf16 %v594, %v526
    %v599 = vpack.c.bf16 %v595, %v527
    %v600 = vpack.c.bf16 %v596, %v528
    %603 = vrot.lane.b32.xlu0 %v242, 120
    %v604 = vpop.permute.xlu0 %603
    %605 = vrot.lane.b32.xlu0 %v245, 120
    %v606 = vpop.permute.xlu0 %605
    %609 = vrot.lane.b32.xlu0 %v242, 112
    %v610 = vpop.permute.xlu0 %609
    %611 = vrot.lane.b32.xlu0 %v245, 112
    %v612 = vpop.permute.xlu0 %611
    %615 = vrot.lane.b32.xlu0 %v242, 104
    %v616 = vpop.permute.xlu0 %615
    %617 = vrot.lane.b32.xlu0 %v245, 104
    %v618 = vpop.permute.xlu0 %617
    %v621 = vcombine.low %v242, %v610
    %v622 = vcombine.high %v242, %v610
    %v624 = vunpack.c.l.s4 1983009808
    %v625 = vunpack.c.0.s8 %v624
    %v626 = vlaneseq
    %v627 = vshrl.u32 %v626, 7
    %v628 = vsub.s32 %v625, %v627
    %v629 = vrot.slane %v621, %v628
    %v631 = vunpack.c.l.s4 1983009808
    %v632 = vunpack.c.0.s8 %v631
    %v633 = vlaneseq
    %v634 = vshrl.u32 %v633, 7
    %v635 = vsub.s32 %v632, %v634
    %v636 = vrot.slane %v622, %v635
    %v637 = vcombine.low %v604, %v616
    %v638 = vcombine.high %v604, %v616
    %v640 = vunpack.c.l.s4 1983009808
    %v641 = vunpack.c.0.s8 %v640
    %v642 = vlaneseq
    %v643 = vshrl.u32 %v642, 7
    %v644 = vsub.s32 %v641, %v643
    %v645 = vrot.slane %v637, %v644
    %v647 = vunpack.c.l.s4 1983009808
    %v648 = vunpack.c.0.s8 %v647
    %v649 = vlaneseq
    %v650 = vshrl.u32 %v649, 7
    %v651 = vsub.s32 %v648, %v650
    %v652 = vrot.slane %v638, %v651
    %v653 = vcombine.low %v629, %v645
    %v654 = vcombine.high %v629, %v645
    %v656 = vunpack.c.l.s4 1934713408
    %v657 = vunpack.c.0.s8 %v656
    %v658 = vlaneseq
    %v659 = vshrl.u32 %v658, 7
    %v660 = vsub.s32 %v657, %v659
    %v661 = vrot.slane %v653, %v660
    %v663 = vunpack.c.l.s4 1934713408
    %v664 = vunpack.c.0.s8 %v663
    %v665 = vlaneseq
    %v666 = vshrl.u32 %v665, 7
    %v667 = vsub.s32 %v664, %v666
    %v668 = vrot.slane %v654, %v667
    %v669 = vcombine.low %v636, %v652
    %v670 = vcombine.high %v636, %v652
    %v672 = vunpack.c.l.s4 1934713408
    %v673 = vunpack.c.0.s8 %v672
    %v674 = vlaneseq
    %v675 = vshrl.u32 %v674, 7
    %v676 = vsub.s32 %v673, %v675
    %v677 = vrot.slane %v669, %v676
    %v679 = vunpack.c.l.s4 1934713408
    %v680 = vunpack.c.0.s8 %v679
    %v681 = vlaneseq
    %v682 = vshrl.u32 %v681, 7
    %v683 = vsub.s32 %v680, %v682
    %v684 = vrot.slane %v670, %v683
    %v685 = vcombine.high %v661, 0.0
    %v686 = vcombine.high %v668, 0.0
    %v687 = vcombine.high %v677, 0.0
    %v688 = vcombine.high %v684, 0.0
    %v689 = vcombine.low %v245, %v612
    %v690 = vcombine.high %v245, %v612
    %v692 = vunpack.c.l.s4 1983009808
    %v693 = vunpack.c.0.s8 %v692
    %v694 = vlaneseq
    %v695 = vshrl.u32 %v694, 7
    %v696 = vsub.s32 %v693, %v695
    %v697 = vrot.slane %v689, %v696
    %v699 = vunpack.c.l.s4 1983009808
    %v700 = vunpack.c.0.s8 %v699
    %v701 = vlaneseq
    %v702 = vshrl.u32 %v701, 7
    %v703 = vsub.s32 %v700, %v702
    %v704 = vrot.slane %v690, %v703
    %v705 = vcombine.low %v606, %v618
    %v706 = vcombine.high %v606, %v618
    %v708 = vunpack.c.l.s4 1983009808
    %v709 = vunpack.c.0.s8 %v708
    %v710 = vlaneseq
    %v711 = vshrl.u32 %v710, 7
    %v712 = vsub.s32 %v709, %v711
    %v713 = vrot.slane %v705, %v712
    %v715 = vunpack.c.l.s4 1983009808
    %v716 = vunpack.c.0.s8 %v715
    %v717 = vlaneseq
    %v718 = vshrl.u32 %v717, 7
    %v719 = vsub.s32 %v716, %v718
    %v720 = vrot.slane %v706, %v719
    %v721 = vcombine.low %v697, %v713
    %v722 = vcombine.high %v697, %v713
    %v724 = vunpack.c.l.s4 1934713408
    %v725 = vunpack.c.0.s8 %v724
    %v726 = vlaneseq
    %v727 = vshrl.u32 %v726, 7
    %v728 = vsub.s32 %v725, %v727
    %v729 = vrot.slane %v721, %v728
    %v731 = vunpack.c.l.s4 1934713408
    %v732 = vunpack.c.0.s8 %v731
    %v733 = vlaneseq
    %v734 = vshrl.u32 %v733, 7
    %v735 = vsub.s32 %v732, %v734
    %v736 = vrot.slane %v722, %v735
    %v737 = vcombine.low %v704, %v720
    %v738 = vcombine.high %v704, %v720
    %v740 = vunpack.c.l.s4 1934713408
    %v741 = vunpack.c.0.s8 %v740
    %v742 = vlaneseq
    %v743 = vshrl.u32 %v742, 7
    %v744 = vsub.s32 %v741, %v743
    %v745 = vrot.slane %v737, %v744
    %v747 = vunpack.c.l.s4 1934713408
    %v748 = vunpack.c.0.s8 %v747
    %v749 = vlaneseq
    %v750 = vshrl.u32 %v749, 7
    %v751 = vsub.s32 %v748, %v750
    %v752 = vrot.slane %v738, %v751
    %v753 = vcombine.high %v729, 0.0
    %v754 = vcombine.high %v736, 0.0
    %v755 = vcombine.high %v745, 0.0
    %v756 = vcombine.high %v752, 0.0
    %v757 = vcombine.low %v661, %v668
    %v759 = vunpack.c.l.s4 1983009808
    %v760 = vunpack.c.0.s8 %v759
    %v761 = vlaneseq
    %v762 = vshrl.u32 %v761, 7
    %v763 = vsub.s32 %v760, %v762
    %v764 = vrot.slane %v757, %v763
    %v765 = vcombine.low %v685, %v686
    %v767 = vunpack.c.l.s4 1983009808
    %v768 = vunpack.c.0.s8 %v767
    %v769 = vlaneseq
    %v770 = vshrl.u32 %v769, 7
    %v771 = vsub.s32 %v768, %v770
    %v772 = vrot.slane %v765, %v771
    %v773 = vcombine.low %v677, %v684
    %v775 = vunpack.c.l.s4 1983009808
    %v776 = vunpack.c.0.s8 %v775
    %v777 = vlaneseq
    %v778 = vshrl.u32 %v777, 7
    %v779 = vsub.s32 %v776, %v778
    %v780 = vrot.slane %v773, %v779
    %v781 = vcombine.low %v687, %v688
    %v783 = vunpack.c.l.s4 1983009808
    %v784 = vunpack.c.0.s8 %v783
    %v785 = vlaneseq
    %v786 = vshrl.u32 %v785, 7
    %v787 = vsub.s32 %v784, %v786
    %v788 = vrot.slane %v781, %v787
    %v789 = vcombine.low %v764, %v772
    %v790 = vcombine.high %v764, %v772
    %v792 = vunpack.c.l.s4 1934713408
    %v793 = vunpack.c.0.s8 %v792
    %v794 = vlaneseq
    %v795 = vshrl.u32 %v794, 7
    %v796 = vsub.s32 %v793, %v795
    %v797 = vrot.slane %v789, %v796
    %v799 = vunpack.c.l.s4 1934713408
    %v800 = vunpack.c.0.s8 %v799
    %v801 = vlaneseq
    %v802 = vshrl.u32 %v801, 7
    %v803 = vsub.s32 %v800, %v802
    %v804 = vrot.slane %v790, %v803
    %v805 = vcombine.low %v780, %v788
    %v806 = vcombine.high %v780, %v788
    %v808 = vunpack.c.l.s4 1934713408
    %v809 = vunpack.c.0.s8 %v808
    %v810 = vlaneseq
    %v811 = vshrl.u32 %v810, 7
    %v812 = vsub.s32 %v809, %v811
    %v813 = vrot.slane %v805, %v812
    %v815 = vunpack.c.l.s4 1934713408
    %v816 = vunpack.c.0.s8 %v815
    %v817 = vlaneseq
    %v818 = vshrl.u32 %v817, 7
    %v819 = vsub.s32 %v816, %v818
    %v820 = vrot.slane %v806, %v819
    %v821 = vcombine.low %v797, %v813
    %v822 = vcombine.high %v797, %v813
    %v823 = vcombine.low %v804, %v820
    %v824 = vcombine.high %v804, %v820
    %v825 = vcombine.low %v729, %v736
    %v827 = vunpack.c.l.s4 1983009808
    %v828 = vunpack.c.0.s8 %v827
    %v829 = vlaneseq
    %v830 = vshrl.u32 %v829, 7
    %v831 = vsub.s32 %v828, %v830
    %v832 = vrot.slane %v825, %v831
    %v833 = vcombine.low %v753, %v754
    %v835 = vunpack.c.l.s4 1983009808
    %v836 = vunpack.c.0.s8 %v835
    %v837 = vlaneseq
    %v838 = vshrl.u32 %v837, 7
    %v839 = vsub.s32 %v836, %v838
    %v840 = vrot.slane %v833, %v839
    %v841 = vcombine.low %v745, %v752
    %v843 = vunpack.c.l.s4 1983009808
    %v844 = vunpack.c.0.s8 %v843
    %v845 = vlaneseq
    %v846 = vshrl.u32 %v845, 7
    %v847 = vsub.s32 %v844, %v846
    %v848 = vrot.slane %v841, %v847
    %v849 = vcombine.low %v755, %v756
    %v851 = vunpack.c.l.s4 1983009808
    %v852 = vunpack.c.0.s8 %v851
    %v853 = vlaneseq
    %v854 = vshrl.u32 %v853, 7
    %v855 = vsub.s32 %v852, %v854
    %v856 = vrot.slane %v849, %v855
    %v857 = vcombine.low %v832, %v840
    %v858 = vcombine.high %v832, %v840
    %v860 = vunpack.c.l.s4 1934713408
    %v861 = vunpack.c.0.s8 %v860
    %v862 = vlaneseq
    %v863 = vshrl.u32 %v862, 7
    %v864 = vsub.s32 %v861, %v863
    %v865 = vrot.slane %v857, %v864
    %v867 = vunpack.c.l.s4 1934713408
    %v868 = vunpack.c.0.s8 %v867
    %v869 = vlaneseq
    %v870 = vshrl.u32 %v869, 7
    %v871 = vsub.s32 %v868, %v870
    %v872 = vrot.slane %v858, %v871
    %v873 = vcombine.low %v848, %v856
    %v874 = vcombine.high %v848, %v856
    %v876 = vunpack.c.l.s4 1934713408
    %v877 = vunpack.c.0.s8 %v876
    %v878 = vlaneseq
    %v879 = vshrl.u32 %v878, 7
    %v880 = vsub.s32 %v877, %v879
    %v881 = vrot.slane %v873, %v880
    %v883 = vunpack.c.l.s4 1934713408
    %v884 = vunpack.c.0.s8 %v883
    %v885 = vlaneseq
    %v886 = vshrl.u32 %v885, 7
    %v887 = vsub.s32 %v884, %v886
    %v888 = vrot.slane %v874, %v887
    %v889 = vcombine.low %v865, %v881
    %v890 = vcombine.high %v865, %v881
    %v891 = vcombine.low %v872, %v888
    %v892 = vcombine.high %v872, %v888
    %v893 = vpack.c.bf16 %v889, %v821
    %v894 = vpack.c.bf16 %v890, %v822
    %v895 = vpack.c.bf16 %v891, %v823
    %v896 = vpack.c.bf16 %v892, %v824
    %899 = vrot.lane.b32.xlu0 %v299, 120
    %v900 = vpop.permute.xlu0 %899
    %901 = vrot.lane.b32.xlu0 %v302, 120
    %v902 = vpop.permute.xlu0 %901
    %905 = vrot.lane.b32.xlu0 %v299, 112
    %v906 = vpop.permute.xlu0 %905
    %907 = vrot.lane.b32.xlu0 %v302, 112
    %v908 = vpop.permute.xlu0 %907
    %911 = vrot.lane.b32.xlu0 %v299, 104
    %v912 = vpop.permute.xlu0 %911
    %913 = vrot.lane.b32.xlu0 %v302, 104
    %v914 = vpop.permute.xlu0 %913
    %v917 = vcombine.low %v299, %v906
    %v918 = vcombine.high %v299, %v906
    %v920 = vunpack.c.l.s4 1983009808
    %v921 = vunpack.c.0.s8 %v920
    %v922 = vlaneseq
    %v923 = vshrl.u32 %v922, 7
    %v924 = vsub.s32 %v921, %v923
    %v925 = vrot.slane %v917, %v924
    %v927 = vunpack.c.l.s4 1983009808
    %v928 = vunpack.c.0.s8 %v927
    %v929 = vlaneseq
    %v930 = vshrl.u32 %v929, 7
    %v931 = vsub.s32 %v928, %v930
    %v932 = vrot.slane %v918, %v931
    %v933 = vcombine.low %v900, %v912
    %v934 = vcombine.high %v900, %v912
    %v936 = vunpack.c.l.s4 1983009808
    %v937 = vunpack.c.0.s8 %v936
    %v938 = vlaneseq
    %v939 = vshrl.u32 %v938, 7
    %v940 = vsub.s32 %v937, %v939
    %v941 = vrot.slane %v933, %v940
    %v943 = vunpack.c.l.s4 1983009808
    %v944 = vunpack.c.0.s8 %v943
    %v945 = vlaneseq
    %v946 = vshrl.u32 %v945, 7
    %v947 = vsub.s32 %v944, %v946
    %v948 = vrot.slane %v934, %v947
    %v949 = vcombine.low %v925, %v941
    %v950 = vcombine.high %v925, %v941
    %v952 = vunpack.c.l.s4 1934713408
    %v953 = vunpack.c.0.s8 %v952
    %v954 = vlaneseq
    %v955 = vshrl.u32 %v954, 7
    %v956 = vsub.s32 %v953, %v955
    %v957 = vrot.slane %v949, %v956
    %v959 = vunpack.c.l.s4 1934713408
    %v960 = vunpack.c.0.s8 %v959
    %v961 = vlaneseq
    %v962 = vshrl.u32 %v961, 7
    %v963 = vsub.s32 %v960, %v962
    %v964 = vrot.slane %v950, %v963
    %v965 = vcombine.low %v932, %v948
    %v966 = vcombine.high %v932, %v948
    %v968 = vunpack.c.l.s4 1934713408
    %v969 = vunpack.c.0.s8 %v968
    %v970 = vlaneseq
    %v971 = vshrl.u32 %v970, 7
    %v972 = vsub.s32 %v969, %v971
    %v973 = vrot.slane %v965, %v972
    %v975 = vunpack.c.l.s4 1934713408
    %v976 = vunpack.c.0.s8 %v975
    %v977 = vlaneseq
    %v978 = vshrl.u32 %v977, 7
    %v979 = vsub.s32 %v976, %v978
    %v980 = vrot.slane %v966, %v979
    %v981 = vcombine.high %v957, 0.0
    %v982 = vcombine.high %v964, 0.0
    %v983 = vcombine.high %v973, 0.0
    %v984 = vcombine.high %v980, 0.0
    %v985 = vcombine.low %v302, %v908
    %v986 = vcombine.high %v302, %v908
    %v988 = vunpack.c.l.s4 1983009808
    %v989 = vunpack.c.0.s8 %v988
    %v990 = vlaneseq
    %v991 = vshrl.u32 %v990, 7
    %v992 = vsub.s32 %v989, %v991
    %v993 = vrot.slane %v985, %v992
    %v995 = vunpack.c.l.s4 1983009808
    %v996 = vunpack.c.0.s8 %v995
    %v997 = vlaneseq
    %v998 = vshrl.u32 %v997, 7
    %v999 = vsub.s32 %v996, %v998
    %v1000 = vrot.slane %v986, %v999
    %v1001 = vcombine.low %v902, %v914
    %v1002 = vcombine.high %v902, %v914
    %v1004 = vunpack.c.l.s4 1983009808
    %v1005 = vunpack.c.0.s8 %v1004
    %v1006 = vlaneseq
    %v1007 = vshrl.u32 %v1006, 7
    %v1008 = vsub.s32 %v1005, %v1007
    %v1009 = vrot.slane %v1001, %v1008
    %v1011 = vunpack.c.l.s4 1983009808
    %v1012 = vunpack.c.0.s8 %v1011
    %v1013 = vlaneseq
    %v1014 = vshrl.u32 %v1013, 7
    %v1015 = vsub.s32 %v1012, %v1014
    %v1016 = vrot.slane %v1002, %v1015
    %v1017 = vcombine.low %v993, %v1009
    %v1018 = vcombine.high %v993, %v1009
    %v1020 = vunpack.c.l.s4 1934713408
    %v1021 = vunpack.c.0.s8 %v1020
    %v1022 = vlaneseq
    %v1023 = vshrl.u32 %v1022, 7
    %v1024 = vsub.s32 %v1021, %v1023
    %v1025 = vrot.slane %v1017, %v1024
    %v1027 = vunpack.c.l.s4 1934713408
    %v1028 = vunpack.c.0.s8 %v1027
    %v1029 = vlaneseq
    %v1030 = vshrl.u32 %v1029, 7
    %v1031 = vsub.s32 %v1028, %v1030
    %v1032 = vrot.slane %v1018, %v1031
    %v1033 = vcombine.low %v1000, %v1016
    %v1034 = vcombine.high %v1000, %v1016
    %v1036 = vunpack.c.l.s4 1934713408
    %v1037 = vunpack.c.0.s8 %v1036
    %v1038 = vlaneseq
    %v1039 = vshrl.u32 %v1038, 7
    %v1040 = vsub.s32 %v1037, %v1039
    %v1041 = vrot.slane %v1033, %v1040
    %v1043 = vunpack.c.l.s4 1934713408
    %v1044 = vunpack.c.0.s8 %v1043
    %v1045 = vlaneseq
    %v1046 = vshrl.u32 %v1045, 7
    %v1047 = vsub.s32 %v1044, %v1046
    %v1048 = vrot.slane %v1034, %v1047
    %v1049 = vcombine.high %v1025, 0.0
    %v1050 = vcombine.high %v1032, 0.0
    %v1051 = vcombine.high %v1041, 0.0
    %v1052 = vcombine.high %v1048, 0.0
    %v1053 = vcombine.low %v957, %v964
    %v1055 = vunpack.c.l.s4 1983009808
    %v1056 = vunpack.c.0.s8 %v1055
    %v1057 = vlaneseq
    %v1058 = vshrl.u32 %v1057, 7
    %v1059 = vsub.s32 %v1056, %v1058
    %v1060 = vrot.slane %v1053, %v1059
    %v1061 = vcombine.low %v981, %v982
    %v1063 = vunpack.c.l.s4 1983009808
    %v1064 = vunpack.c.0.s8 %v1063
    %v1065 = vlaneseq
    %v1066 = vshrl.u32 %v1065, 7
    %v1067 = vsub.s32 %v1064, %v1066
    %v1068 = vrot.slane %v1061, %v1067
    %v1069 = vcombine.low %v973, %v980
    %v1071 = vunpack.c.l.s4 1983009808
    %v1072 = vunpack.c.0.s8 %v1071
    %v1073 = vlaneseq
    %v1074 = vshrl.u32 %v1073, 7
    %v1075 = vsub.s32 %v1072, %v1074
    %v1076 = vrot.slane %v1069, %v1075
    %v1077 = vcombine.low %v983, %v984
    %v1079 = vunpack.c.l.s4 1983009808
    %v1080 = vunpack.c.0.s8 %v1079
    %v1081 = vlaneseq
    %v1082 = vshrl.u32 %v1081, 7
    %v1083 = vsub.s32 %v1080, %v1082
    %v1084 = vrot.slane %v1077, %v1083
    %v1085 = vcombine.low %v1060, %v1068
    %v1086 = vcombine.high %v1060, %v1068
    %v1088 = vunpack.c.l.s4 1934713408
    %v1089 = vunpack.c.0.s8 %v1088
    %v1090 = vlaneseq
    %v1091 = vshrl.u32 %v1090, 7
    %v1092 = vsub.s32 %v1089, %v1091
    %v1093 = vrot.slane %v1085, %v1092
    %v1095 = vunpack.c.l.s4 1934713408
    %v1096 = vunpack.c.0.s8 %v1095
    %v1097 = vlaneseq
    %v1098 = vshrl.u32 %v1097, 7
    %v1099 = vsub.s32 %v1096, %v1098
    %v1100 = vrot.slane %v1086, %v1099
    %v1101 = vcombine.low %v1076, %v1084
    %v1102 = vcombine.high %v1076, %v1084
    %v1104 = vunpack.c.l.s4 1934713408
    %v1105 = vunpack.c.0.s8 %v1104
    %v1106 = vlaneseq
    %v1107 = vshrl.u32 %v1106, 7
    %v1108 = vsub.s32 %v1105, %v1107
    %v1109 = vrot.slane %v1101, %v1108
    %v1111 = vunpack.c.l.s4 1934713408
    %v1112 = vunpack.c.0.s8 %v1111
    %v1113 = vlaneseq
    %v1114 = vshrl.u32 %v1113, 7
    %v1115 = vsub.s32 %v1112, %v1114
    %v1116 = vrot.slane %v1102, %v1115
    %v1117 = vcombine.low %v1093, %v1109
    %v1118 = vcombine.high %v1093, %v1109
    %v1119 = vcombine.low %v1100, %v1116
    %v1120 = vcombine.high %v1100, %v1116
    %v1121 = vcombine.low %v1025, %v1032
    %v1123 = vunpack.c.l.s4 1983009808
    %v1124 = vunpack.c.0.s8 %v1123
    %v1125 = vlaneseq
    %v1126 = vshrl.u32 %v1125, 7
    %v1127 = vsub.s32 %v1124, %v1126
    %v1128 = vrot.slane %v1121, %v1127
    %v1129 = vcombine.low %v1049, %v1050
    %v1131 = vunpack.c.l.s4 1983009808
    %v1132 = vunpack.c.0.s8 %v1131
    %v1133 = vlaneseq
    %v1134 = vshrl.u32 %v1133, 7
    %v1135 = vsub.s32 %v1132, %v1134
    %v1136 = vrot.slane %v1129, %v1135
    %v1137 = vcombine.low %v1041, %v1048
    %v1139 = vunpack.c.l.s4 1983009808
    %v1140 = vunpack.c.0.s8 %v1139
    %v1141 = vlaneseq
    %v1142 = vshrl.u32 %v1141, 7
    %v1143 = vsub.s32 %v1140, %v1142
    %v1144 = vrot.slane %v1137, %v1143
    %v1145 = vcombine.low %v1051, %v1052
    %v1147 = vunpack.c.l.s4 1983009808
    %v1148 = vunpack.c.0.s8 %v1147
    %v1149 = vlaneseq
    %v1150 = vshrl.u32 %v1149, 7
    %v1151 = vsub.s32 %v1148, %v1150
    %v1152 = vrot.slane %v1145, %v1151
    %v1153 = vcombine.low %v1128, %v1136
    %v1154 = vcombine.high %v1128, %v1136
    %v1156 = vunpack.c.l.s4 1934713408
    %v1157 = vunpack.c.0.s8 %v1156
    %v1158 = vlaneseq
    %v1159 = vshrl.u32 %v1158, 7
    %v1160 = vsub.s32 %v1157, %v1159
    %v1161 = vrot.slane %v1153, %v1160
    %v1163 = vunpack.c.l.s4 1934713408
    %v1164 = vunpack.c.0.s8 %v1163
    %v1165 = vlaneseq
    %v1166 = vshrl.u32 %v1165, 7
    %v1167 = vsub.s32 %v1164, %v1166
    %v1168 = vrot.slane %v1154, %v1167
    %v1169 = vcombine.low %v1144, %v1152
    %v1170 = vcombine.high %v1144, %v1152
    %v1172 = vunpack.c.l.s4 1934713408
    %v1173 = vunpack.c.0.s8 %v1172
    %v1174 = vlaneseq
    %v1175 = vshrl.u32 %v1174, 7
    %v1176 = vsub.s32 %v1173, %v1175
    %v1177 = vrot.slane %v1169, %v1176
    %v1179 = vunpack.c.l.s4 1934713408
    %v1180 = vunpack.c.0.s8 %v1179
    %v1181 = vlaneseq
    %v1182 = vshrl.u32 %v1181, 7
    %v1183 = vsub.s32 %v1180, %v1182
    %v1184 = vrot.slane %v1170, %v1183
    %v1185 = vcombine.low %v1161, %v1177
    %v1186 = vcombine.high %v1161, %v1177
    %v1187 = vcombine.low %v1168, %v1184
    %v1188 = vcombine.high %v1168, %v1184
    %v1189 = vpack.c.bf16 %v1185, %v1117
    %v1190 = vpack.c.bf16 %v1186, %v1118
    %v1191 = vpack.c.bf16 %v1187, %v1119
    %v1192 = vpack.c.bf16 %v1188, %v1120
    %vm1193 = vcmask 64512
    %v1195 = vsel %vm1193, %v597, 0
    %v1198 = vsel %vm1193, %v893, 0
    %1200 = vmatprep.subr.bf16.mxu0 0
    %1201 = vmatpush1.bf16.xpose.msra.mxu0 0
    %1202 = vmatprep.subr.bf16.mxu0 0
    %1203 = vmatpush1.bf16.xpose.msra.mxu0 0
    %1204 = vmatprep.subr.bf16.mxu0 0
    %1205 = vmatpush1.bf16.xpose.msra.mxu0 0
    %1206 = vmatprep.subr.bf16.mxu0 0
    %1207 = vmatpush1.bf16.xpose.msra.mxu0 0
    %1208 = vmatprep.subr.bf16.mxu0 0
    %1209 = vmatpush1.bf16.xpose.msra.mxu0 0
    %1210 = vmatprep.subr.bf16.mxu0 0
    %1211 = vmatpush1.bf16.xpose.msra.mxu0 0
    %1212 = vmatprep.subr.bf16.mxu0 0
    %1213 = vmatpush1.bf16.xpose.msra.mxu0 0
    %1214 = vmatprep.subr.bf16.mxu0 0
    %1215 = vmatpush1.bf16.xpose.msra.mxu0 %v1198
    %1216 = vmatprep.subr.bf16.mxu0 0
    %1217 = vmatpush2.bf16.xpose.msra.mxu0 0
    %1218 = vmatprep.subr.bf16.mxu0 0
    %1219 = vmatpush2.bf16.xpose.msra.mxu0 0
    %1220 = vmatprep.subr.bf16.mxu0 0
    %1221 = vmatpush2.bf16.xpose.msra.mxu0 0
    %1222 = vmatprep.subr.bf16.mxu0 0
    %1223 = vmatpush2.bf16.xpose.msra.mxu0 0
    %1224 = vmatprep.subr.bf16.mxu0 0
    %1225 = vmatpush2.bf16.xpose.msra.mxu0 0
    %1226 = vmatprep.subr.bf16.mxu0 0
    %1227 = vmatpush2.bf16.xpose.msra.mxu0 0
    %1228 = vmatprep.subr.bf16.mxu0 0
    %1229 = vmatpush2.bf16.xpose.msra.mxu0 0
    %1230 = vmatprep.subr.bf16.mxu0 0
    %1231 = vmatpush2.bf16.xpose.msra.mxu0 0
    %1232 = vmatprep.mubr.bf16.mxu0 0
    %1233 = vmatmul.mubr.bf16.gmra.mxu0 %v1195
    %v1234 = vpop.f32.mrf.mxu0
    %v1235 = vadd.f32 %v104, %v1234
    %v1236 = vpop.f32.mrf.mxu0
    %v1237 = vpop.f32.mrf.mxu0
    %v1238 = vadd.f32 %v105, %v1237
    %v1239 = vpop.f32.mrf.mxu0
    %1240 = vdwg.mxu0
    %v1242 = vsel %vm1193, %v598, 0
    %v1245 = vsel %vm1193, %v894, 0
    %1247 = vmatprep.subr.bf16.mxu0 0
    %1248 = vmatpush1.bf16.xpose.msra.mxu0 0
    %1249 = vmatprep.subr.bf16.mxu0 0
    %1250 = vmatpush1.bf16.xpose.msra.mxu0 0
    %1251 = vmatprep.subr.bf16.mxu0 0
    %1252 = vmatpush1.bf16.xpose.msra.mxu0 0
    %1253 = vmatprep.subr.bf16.mxu0 0
    %1254 = vmatpush1.bf16.xpose.msra.mxu0 0
    %1255 = vmatprep.subr.bf16.mxu0 0
    %1256 = vmatpush1.bf16.xpose.msra.mxu0 0
    %1257 = vmatprep.subr.bf16.mxu0 0
    %1258 = vmatpush1.bf16.xpose.msra.mxu0 0
    %1259 = vmatprep.subr.bf16.mxu0 0
    %1260 = vmatpush1.bf16.xpose.msra.mxu0 0
    %1261 = vmatprep.subr.bf16.mxu0 0
    %1262 = vmatpush1.bf16.xpose.msra.mxu0 %v1245
    %1263 = vmatprep.subr.bf16.mxu0 0
    %1264 = vmatpush2.bf16.xpose.msra.mxu0 0
    %1265 = vmatprep.subr.bf16.mxu0 0
    %1266 = vmatpush2.bf16.xpose.msra.mxu0 0
    %1267 = vmatprep.subr.bf16.mxu0 0
    %1268 = vmatpush2.bf16.xpose.msra.mxu0 0
    %1269 = vmatprep.subr.bf16.mxu0 0
    %1270 = vmatpush2.bf16.xpose.msra.mxu0 0
    %1271 = vmatprep.subr.bf16.mxu0 0
    %1272 = vmatpush2.bf16.xpose.msra.mxu0 0
    %1273 = vmatprep.subr.bf16.mxu0 0
    %1274 = vmatpush2.bf16.xpose.msra.mxu0 0
    %1275 = vmatprep.subr.bf16.mxu0 0
    %1276 = vmatpush2.bf16.xpose.msra.mxu0 0
    %1277 = vmatprep.subr.bf16.mxu0 0
    %1278 = vmatpush2.bf16.xpose.msra.mxu0 0
    %1279 = vmatprep.mubr.bf16.mxu0 0
    %1280 = vmatmul.mubr.bf16.gmra.mxu0 %v1242
    %v1281 = vpop.f32.mrf.mxu0
    %v1282 = vadd.f32 %v104, %v1281
    %v1283 = vpop.f32.mrf.mxu0
    %v1284 = vpop.f32.mrf.mxu0
    %v1285 = vadd.f32 %v105, %v1284
    %v1286 = vpop.f32.mrf.mxu0
    %1287 = vdwg.mxu0
    %v1289 = vsel %vm1193, %v599, 0
    %v1292 = vsel %vm1193, %v895, 0
    %1294 = vmatprep.subr.bf16.mxu0 0
    %1295 = vmatpush1.bf16.xpose.msra.mxu0 0
    %1296 = vmatprep.subr.bf16.mxu0 0
    %1297 = vmatpush1.bf16.xpose.msra.mxu0 0
    %1298 = vmatprep.subr.bf16.mxu0 0
    %1299 = vmatpush1.bf16.xpose.msra.mxu0 0
    %1300 = vmatprep.subr.bf16.mxu0 0
    %1301 = vmatpush1.bf16.xpose.msra.mxu0 0
    %1302 = vmatprep.subr.bf16.mxu0 0
    %1303 = vmatpush1.bf16.xpose.msra.mxu0 0
    %1304 = vmatprep.subr.bf16.mxu0 0
    %1305 = vmatpush1.bf16.xpose.msra.mxu0 0
    %1306 = vmatprep.subr.bf16.mxu0 0
    %1307 = vmatpush1.bf16.xpose.msra.mxu0 0
    %1308 = vmatprep.subr.bf16.mxu0 0
    %1309 = vmatpush1.bf16.xpose.msra.mxu0 %v1292
    %1310 = vmatprep.subr.bf16.mxu0 0
    %1311 = vmatpush2.bf16.xpose.msra.mxu0 0
    %1312 = vmatprep.subr.bf16.mxu0 0
    %1313 = vmatpush2.bf16.xpose.msra.mxu0 0
    %1314 = vmatprep.subr.bf16.mxu0 0
    %1315 = vmatpush2.bf16.xpose.msra.mxu0 0
    %1316 = vmatprep.subr.bf16.mxu0 0
    %1317 = vmatpush2.bf16.xpose.msra.mxu0 0
    %1318 = vmatprep.subr.bf16.mxu0 0
    %1319 = vmatpush2.bf16.xpose.msra.mxu0 0
    %1320 = vmatprep.subr.bf16.mxu0 0
    %1321 = vmatpush2.bf16.xpose.msra.mxu0 0
    %1322 = vmatprep.subr.bf16.mxu0 0
    %1323 = vmatpush2.bf16.xpose.msra.mxu0 0
    %1324 = vmatprep.subr.bf16.mxu0 0
    %1325 = vmatpush2.bf16.xpose.msra.mxu0 0
    %1326 = vmatprep.mubr.bf16.mxu0 0
    %1327 = vmatmul.mubr.bf16.gmra.mxu0 %v1289
    %v1328 = vpop.f32.mrf.mxu0
    %v1329 = vadd.f32 %v104, %v1328
    %v1330 = vpop.f32.mrf.mxu0
    %v1331 = vpop.f32.mrf.mxu0
    %v1332 = vadd.f32 %v105, %v1331
    %v1333 = vpop.f32.mrf.mxu0
    %1334 = vdwg.mxu0
    %v1336 = vsel %vm1193, %v600, 0
    %v1339 = vsel %vm1193, %v896, 0
    %1341 = vmatprep.subr.bf16.mxu0 0
    %1342 = vmatpush1.bf16.xpose.msra.mxu0 0
    %1343 = vmatprep.subr.bf16.mxu0 0
    %1344 = vmatpush1.bf16.xpose.msra.mxu0 0
    %1345 = vmatprep.subr.bf16.mxu0 0
    %1346 = vmatpush1.bf16.xpose.msra.mxu0 0
    %1347 = vmatprep.subr.bf16.mxu0 0
    %1348 = vmatpush1.bf16.xpose.msra.mxu0 0
    %1349 = vmatprep.subr.bf16.mxu0 0
    %1350 = vmatpush1.bf16.xpose.msra.mxu0 0
    %1351 = vmatprep.subr.bf16.mxu0 0
    %1352 = vmatpush1.bf16.xpose.msra.mxu0 0
    %1353 = vmatprep.subr.bf16.mxu0 0
    %1354 = vmatpush1.bf16.xpose.msra.mxu0 0
    %1355 = vmatprep.subr.bf16.mxu0 0
    %1356 = vmatpush1.bf16.xpose.msra.mxu0 %v1339
    %1357 = vmatprep.subr.bf16.mxu0 0
    %1358 = vmatpush2.bf16.xpose.msra.mxu0 0
    %1359 = vmatprep.subr.bf16.mxu0 0
    %1360 = vmatpush2.bf16.xpose.msra.mxu0 0
    %1361 = vmatprep.subr.bf16.mxu0 0
    %1362 = vmatpush2.bf16.xpose.msra.mxu0 0
    %1363 = vmatprep.subr.bf16.mxu0 0
    %1364 = vmatpush2.bf16.xpose.msra.mxu0 0
    %1365 = vmatprep.subr.bf16.mxu0 0
    %1366 = vmatpush2.bf16.xpose.msra.mxu0 0
    %1367 = vmatprep.subr.bf16.mxu0 0
    %1368 = vmatpush2.bf16.xpose.msra.mxu0 0
    %1369 = vmatprep.subr.bf16.mxu0 0
    %1370 = vmatpush2.bf16.xpose.msra.mxu0 0
    %1371 = vmatprep.subr.bf16.mxu0 0
    %1372 = vmatpush2.bf16.xpose.msra.mxu0 0
    %1373 = vmatprep.mubr.bf16.mxu0 0
    %1374 = vmatmul.mubr.bf16.gmra.mxu0 %v1336
    %v1375 = vpop.f32.mrf.mxu0
    %v1376 = vadd.f32 %v104, %v1375
    %v1377 = vpop.f32.mrf.mxu0
    %v1378 = vpop.f32.mrf.mxu0
    %v1379 = vadd.f32 %v105, %v1378
    %v1380 = vpop.f32.mrf.mxu0
    %1381 = vdwg.mxu0
    %vm1382 = vcmask 130048
    %v1383 = vsel %vm1382, %v1235, -inf
    %1384 = vmax.xlane.f32.xlu0 %v1383
    %v1385 = vpop.xlane.xlu0 %1384
    %v1386 = vsel %vm1382, %v1238, -inf
    %1387 = vmax.xlane.f32.xlu0 %v1386
    %v1388 = vpop.xlane.xlu0 %1387
    %v1389 = vsel %vm1382, %v1282, -inf
    %1390 = vmax.xlane.f32.xlu0 %v1389
    %v1391 = vpop.xlane.xlu0 %1390
    %v1392 = vsel %vm1382, %v1285, -inf
    %1393 = vmax.xlane.f32.xlu0 %v1392
    %v1394 = vpop.xlane.xlu0 %1393
    %v1395 = vsel %vm1382, %v1329, -inf
    %1396 = vmax.xlane.f32.xlu0 %v1395
    %v1397 = vpop.xlane.xlu0 %1396
    %v1398 = vsel %vm1382, %v1332, -inf
    %1399 = vmax.xlane.f32.xlu0 %v1398
    %v1400 = vpop.xlane.xlu0 %1399
    %v1401 = vsel %vm1382, %v1376, -inf
    %1402 = vmax.xlane.f32.xlu0 %v1401
    %v1403 = vpop.xlane.xlu0 %1402
    %v1404 = vsel %vm1382, %v1379, -inf
    %1405 = vmax.xlane.f32.xlu0 %v1404
    %v1406 = vpop.xlane.xlu0 %1405
    %v1407 = vsub.f32 %v1235, %v1385
    %v1408 = vsub.f32 %v1238, %v1388
    %v1409 = vsub.f32 %v1282, %v1391
    %v1410 = vsub.f32 %v1285, %v1394
    %v1411 = vsub.f32 %v1329, %v1397
    %v1412 = vsub.f32 %v1332, %v1400
    %v1413 = vsub.f32 %v1376, %v1403
    %v1414 = vsub.f32 %v1379, %v1406
    %v1415 = vmul.f32 %v1407, 1.442695
    %v1416 = vpow.pop %v1415
    %v1417 = vmul.f32 %v1408, 1.442695
    %v1418 = vpow.pop %v1417
    %v1419 = vmul.f32 %v1409, 1.442695
    %v1420 = vpow.pop %v1419
    %v1421 = vmul.f32 %v1410, 1.442695
    %v1422 = vpow.pop %v1421
    %v1423 = vmul.f32 %v1411, 1.442695
    %v1424 = vpow.pop %v1423
    %v1425 = vmul.f32 %v1412, 1.442695
    %v1426 = vpow.pop %v1425
    %v1427 = vmul.f32 %v1413, 1.442695
    %v1428 = vpow.pop %v1427
    %v1429 = vmul.f32 %v1414, 1.442695
    %v1430 = vpow.pop %v1429
    %v1431 = vsel %vm1382, %v1416, 0.0
    %1432 = vadd.xlane.f32.xlu0 %v1431
    %v1433 = vpop.xlane.xlu0 %1432
    %v1434 = vsel %vm1382, %v1418, 0.0
    %1435 = vadd.xlane.f32.xlu0 %v1434
    %v1436 = vpop.xlane.xlu0 %1435
    %v1437 = vsel %vm1382, %v1420, 0.0
    %1438 = vadd.xlane.f32.xlu0 %v1437
    %v1439 = vpop.xlane.xlu0 %1438
    %v1440 = vsel %vm1382, %v1422, 0.0
    %1441 = vadd.xlane.f32.xlu0 %v1440
    %v1442 = vpop.xlane.xlu0 %1441
    %v1443 = vsel %vm1382, %v1424, 0.0
    %1444 = vadd.xlane.f32.xlu0 %v1443
    %v1445 = vpop.xlane.xlu0 %1444
    %v1446 = vsel %vm1382, %v1426, 0.0
    %1447 = vadd.xlane.f32.xlu0 %v1446
    %v1448 = vpop.xlane.xlu0 %1447
    %v1449 = vsel %vm1382, %v1428, 0.0
    %1450 = vadd.xlane.f32.xlu0 %v1449
    %v1451 = vpop.xlane.xlu0 %1450
    %v1452 = vsel %vm1382, %v1430, 0.0
    %1453 = vadd.xlane.f32.xlu0 %v1452
    %v1454 = vpop.xlane.xlu0 %1453
    %v1455 = vrcp.pop %v1433
    %v1456 = vmul.f32 %v1416, %v1455
    %v1457 = vrcp.pop %v1436
    %v1458 = vmul.f32 %v1418, %v1457
    %v1459 = vrcp.pop %v1439
    %v1460 = vmul.f32 %v1420, %v1459
    %v1461 = vrcp.pop %v1442
    %v1462 = vmul.f32 %v1422, %v1461
    %v1463 = vrcp.pop %v1445
    %v1464 = vmul.f32 %v1424, %v1463
    %v1465 = vrcp.pop %v1448
    %v1466 = vmul.f32 %v1426, %v1465
    %v1467 = vrcp.pop %v1451
    %v1468 = vmul.f32 %v1428, %v1467
    %v1469 = vrcp.pop %v1454
    %v1470 = vmul.f32 %v1430, %v1469
    %v1471 = vpack.c.bf16 %v1458, %v1456
    %v1472 = vpack.c.bf16 %v1462, %v1460
    %v1473 = vpack.c.bf16 %v1466, %v1464
    %v1474 = vpack.c.bf16 %v1470, %v1468
    %v1476 = vsel %vm1382, %v1471, 0
    %1478 = vmatprep.subr.bf16.mxu0 0
    %1479 = vmatpush1.bf16.msra.mxu0 0
    %1480 = vmatprep.subr.bf16.mxu0 0
    %1481 = vmatpush1.bf16.msra.mxu0 0
    %1482 = vmatprep.subr.bf16.mxu0 0
    %1483 = vmatpush1.bf16.msra.mxu0 0
    %1484 = vmatprep.subr.bf16.mxu0 0
    %1485 = vmatpush1.bf16.msra.mxu0 0
    %1486 = vmatprep.subr.bf16.mxu0 0
    %1487 = vmatpush1.bf16.msra.mxu0 0
    %1488 = vmatprep.subr.bf16.mxu0 0
    %1489 = vmatpush1.bf16.msra.mxu0 0
    %1490 = vmatprep.subr.bf16.mxu0 0
    %1491 = vmatpush1.bf16.msra.mxu0 0
    %1492 = vmatprep.subr.bf16.mxu0 0
    %1493 = vmatpush1.bf16.msra.mxu0 %v1189
    %1494 = vmatprep.subr.bf16.mxu0 0
    %1495 = vmatpush2.bf16.msra.mxu0 0
    %1496 = vmatprep.subr.bf16.mxu0 0
    %1497 = vmatpush2.bf16.msra.mxu0 0
    %1498 = vmatprep.subr.bf16.mxu0 0
    %1499 = vmatpush2.bf16.msra.mxu0 0
    %1500 = vmatprep.subr.bf16.mxu0 0
    %1501 = vmatpush2.bf16.msra.mxu0 0
    %1502 = vmatprep.subr.bf16.mxu0 0
    %1503 = vmatpush2.bf16.msra.mxu0 0
    %1504 = vmatprep.subr.bf16.mxu0 0
    %1505 = vmatpush2.bf16.msra.mxu0 0
    %1506 = vmatprep.subr.bf16.mxu0 0
    %1507 = vmatpush2.bf16.msra.mxu0 0
    %1508 = vmatprep.subr.bf16.mxu0 0
    %1509 = vmatpush2.bf16.msra.mxu0 0
    %1510 = vmatprep.mubr.bf16.mxu0 0
    %1511 = vmatmul.mubr.bf16.gmra.mxu0 %v1476
    %v1512 = vpop.f32.mrf.mxu0
    %v1513 = vadd.f32 0.0, %v1512
    %v1514 = vpop.f32.mrf.mxu0
    %v1515 = vpop.f32.mrf.mxu0
    %v1516 = vadd.f32 0.0, %v1515
    %v1517 = vpop.f32.mrf.mxu0
    %1518 = vdwg.mxu0
    %v1520 = vsel %vm1382, %v1472, 0
    %1522 = vmatprep.subr.bf16.mxu0 0
    %1523 = vmatpush1.bf16.msra.mxu0 0
    %1524 = vmatprep.subr.bf16.mxu0 0
    %1525 = vmatpush1.bf16.msra.mxu0 0
    %1526 = vmatprep.subr.bf16.mxu0 0
    %1527 = vmatpush1.bf16.msra.mxu0 0
    %1528 = vmatprep.subr.bf16.mxu0 0
    %1529 = vmatpush1.bf16.msra.mxu0 0
    %1530 = vmatprep.subr.bf16.mxu0 0
    %1531 = vmatpush1.bf16.msra.mxu0 0
    %1532 = vmatprep.subr.bf16.mxu0 0
    %1533 = vmatpush1.bf16.msra.mxu0 0
    %1534 = vmatprep.subr.bf16.mxu0 0
    %1535 = vmatpush1.bf16.msra.mxu0 0
    %1536 = vmatprep.subr.bf16.mxu0 0
    %1537 = vmatpush1.bf16.msra.mxu0 %v1190
    %1538 = vmatprep.subr.bf16.mxu0 0
    %1539 = vmatpush2.bf16.msra.mxu0 0
    %1540 = vmatprep.subr.bf16.mxu0 0
    %1541 = vmatpush2.bf16.msra.mxu0 0
    %1542 = vmatprep.subr.bf16.mxu0 0
    %1543 = vmatpush2.bf16.msra.mxu0 0
    %1544 = vmatprep.subr.bf16.mxu0 0
    %1545 = vmatpush2.bf16.msra.mxu0 0
    %1546 = vmatprep.subr.bf16.mxu0 0
    %1547 = vmatpush2.bf16.msra.mxu0 0
    %1548 = vmatprep.subr.bf16.mxu0 0
    %1549 = vmatpush2.bf16.msra.mxu0 0
    %1550 = vmatprep.subr.bf16.mxu0 0
    %1551 = vmatpush2.bf16.msra.mxu0 0
    %1552 = vmatprep.subr.bf16.mxu0 0
    %1553 = vmatpush2.bf16.msra.mxu0 0
    %1554 = vmatprep.mubr.bf16.mxu0 0
    %1555 = vmatmul.mubr.bf16.gmra.mxu0 %v1520
    %v1556 = vpop.f32.mrf.mxu0
    %v1557 = vadd.f32 0.0, %v1556
    %v1558 = vpop.f32.mrf.mxu0
    %v1559 = vpop.f32.mrf.mxu0
    %v1560 = vadd.f32 0.0, %v1559
    %v1561 = vpop.f32.mrf.mxu0
    %1562 = vdwg.mxu0
    %v1564 = vsel %vm1382, %v1473, 0
    %1566 = vmatprep.subr.bf16.mxu0 0
    %1567 = vmatpush1.bf16.msra.mxu0 0
    %1568 = vmatprep.subr.bf16.mxu0 0
    %1569 = vmatpush1.bf16.msra.mxu0 0
    %1570 = vmatprep.subr.bf16.mxu0 0
    %1571 = vmatpush1.bf16.msra.mxu0 0
    %1572 = vmatprep.subr.bf16.mxu0 0
    %1573 = vmatpush1.bf16.msra.mxu0 0
    %1574 = vmatprep.subr.bf16.mxu0 0
    %1575 = vmatpush1.bf16.msra.mxu0 0
    %1576 = vmatprep.subr.bf16.mxu0 0
    %1577 = vmatpush1.bf16.msra.mxu0 0
    %1578 = vmatprep.subr.bf16.mxu0 0
    %1579 = vmatpush1.bf16.msra.mxu0 0
    %1580 = vmatprep.subr.bf16.mxu0 0
    %1581 = vmatpush1.bf16.msra.mxu0 %v1191
    %1582 = vmatprep.subr.bf16.mxu0 0
    %1583 = vmatpush2.bf16.msra.mxu0 0
    %1584 = vmatprep.subr.bf16.mxu0 0
    %1585 = vmatpush2.bf16.msra.mxu0 0
    %1586 = vmatprep.subr.bf16.mxu0 0
    %1587 = vmatpush2.bf16.msra.mxu0 0
    %1588 = vmatprep.subr.bf16.mxu0 0
    %1589 = vmatpush2.bf16.msra.mxu0 0
    %1590 = vmatprep.subr.bf16.mxu0 0
    %1591 = vmatpush2.bf16.msra.mxu0 0
    %1592 = vmatprep.subr.bf16.mxu0 0
    %1593 = vmatpush2.bf16.msra.mxu0 0
    %1594 = vmatprep.subr.bf16.mxu0 0
    %1595 = vmatpush2.bf16.msra.mxu0 0
    %1596 = vmatprep.subr.bf16.mxu0 0
    %1597 = vmatpush2.bf16.msra.mxu0 0
    %1598 = vmatprep.mubr.bf16.mxu0 0
    %1599 = vmatmul.mubr.bf16.gmra.mxu0 %v1564
    %v1600 = vpop.f32.mrf.mxu0
    %v1601 = vadd.f32 0.0, %v1600
    %v1602 = vpop.f32.mrf.mxu0
    %v1603 = vpop.f32.mrf.mxu0
    %v1604 = vadd.f32 0.0, %v1603
    %v1605 = vpop.f32.mrf.mxu0
    %1606 = vdwg.mxu0
    %v1608 = vsel %vm1382, %v1474, 0
    %1610 = vmatprep.subr.bf16.mxu0 0
    %1611 = vmatpush1.bf16.msra.mxu0 0
    %1612 = vmatprep.subr.bf16.mxu0 0
    %1613 = vmatpush1.bf16.msra.mxu0 0
    %1614 = vmatprep.subr.bf16.mxu0 0
    %1615 = vmatpush1.bf16.msra.mxu0 0
    %1616 = vmatprep.subr.bf16.mxu0 0
    %1617 = vmatpush1.bf16.msra.mxu0 0
    %1618 = vmatprep.subr.bf16.mxu0 0
    %1619 = vmatpush1.bf16.msra.mxu0 0
    %1620 = vmatprep.subr.bf16.mxu0 0
    %1621 = vmatpush1.bf16.msra.mxu0 0
    %1622 = vmatprep.subr.bf16.mxu0 0
    %1623 = vmatpush1.bf16.msra.mxu0 0
    %1624 = vmatprep.subr.bf16.mxu0 0
    %1625 = vmatpush1.bf16.msra.mxu0 %v1192
    %1626 = vmatprep.subr.bf16.mxu0 0
    %1627 = vmatpush2.bf16.msra.mxu0 0
    %1628 = vmatprep.subr.bf16.mxu0 0
    %1629 = vmatpush2.bf16.msra.mxu0 0
    %1630 = vmatprep.subr.bf16.mxu0 0
    %1631 = vmatpush2.bf16.msra.mxu0 0
    %1632 = vmatprep.subr.bf16.mxu0 0
    %1633 = vmatpush2.bf16.msra.mxu0 0
    %1634 = vmatprep.subr.bf16.mxu0 0
    %1635 = vmatpush2.bf16.msra.mxu0 0
    %1636 = vmatprep.subr.bf16.mxu0 0
    %1637 = vmatpush2.bf16.msra.mxu0 0
    %1638 = vmatprep.subr.bf16.mxu0 0
    %1639 = vmatpush2.bf16.msra.mxu0 0
    %1640 = vmatprep.subr.bf16.mxu0 0
    %1641 = vmatpush2.bf16.msra.mxu0 0
    %1642 = vmatprep.mubr.bf16.mxu0 0
    %1643 = vmatmul.mubr.bf16.gmra.mxu0 %v1608
    %v1644 = vpop.f32.mrf.mxu0
    %v1645 = vadd.f32 0.0, %v1644
    %v1646 = vpop.f32.mrf.mxu0
    %v1647 = vpop.f32.mrf.mxu0
    %v1648 = vadd.f32 0.0, %v1647
    %v1649 = vpop.f32.mrf.mxu0
    %1650 = vdwg.mxu0
    %v1651 = vcombine.low %v1513, %v1601
    %v1652 = vcombine.high %v1513, %v1601
    %v1654 = vunpack.c.l.s4 1983009808
    %v1655 = vunpack.c.0.s8 %v1654
    %v1656 = vlaneseq
    %v1657 = vshrl.u32 %v1656, 7
    %v1658 = vsub.s32 %v1655, %v1657
    %v1659 = vrot.slane %v1651, %v1658
    %v1661 = vunpack.c.l.s4 1983009808
    %v1662 = vunpack.c.0.s8 %v1661
    %v1663 = vlaneseq
    %v1664 = vshrl.u32 %v1663, 7
    %v1665 = vsub.s32 %v1662, %v1664
    %v1666 = vrot.slane %v1652, %v1665
    %v1667 = vcombine.low %v1557, %v1645
    %v1668 = vcombine.high %v1557, %v1645
    %v1670 = vunpack.c.l.s4 1983009808
    %v1671 = vunpack.c.0.s8 %v1670
    %v1672 = vlaneseq
    %v1673 = vshrl.u32 %v1672, 7
    %v1674 = vsub.s32 %v1671, %v1673
    %v1675 = vrot.slane %v1667, %v1674
    %v1677 = vunpack.c.l.s4 1983009808
    %v1678 = vunpack.c.0.s8 %v1677
    %v1679 = vlaneseq
    %v1680 = vshrl.u32 %v1679, 7
    %v1681 = vsub.s32 %v1678, %v1680
    %v1682 = vrot.slane %v1668, %v1681
    %v1683 = vcombine.low %v1659, %v1675
    %v1684 = vcombine.high %v1659, %v1675
    %v1686 = vunpack.c.l.s4 1934713408
    %v1687 = vunpack.c.0.s8 %v1686
    %v1688 = vlaneseq
    %v1689 = vshrl.u32 %v1688, 7
    %v1690 = vsub.s32 %v1687, %v1689
    %v1691 = vrot.slane %v1683, %v1690
    %v1693 = vunpack.c.l.s4 1934713408
    %v1694 = vunpack.c.0.s8 %v1693
    %v1695 = vlaneseq
    %v1696 = vshrl.u32 %v1695, 7
    %v1697 = vsub.s32 %v1694, %v1696
    %v1698 = vrot.slane %v1684, %v1697
    %v1699 = vcombine.low %v1666, %v1682
    %v1700 = vcombine.high %v1666, %v1682
    %v1702 = vunpack.c.l.s4 1934713408
    %v1703 = vunpack.c.0.s8 %v1702
    %v1704 = vlaneseq
    %v1705 = vshrl.u32 %v1704, 7
    %v1706 = vsub.s32 %v1703, %v1705
    %v1707 = vrot.slane %v1699, %v1706
    %v1709 = vunpack.c.l.s4 1934713408
    %v1710 = vunpack.c.0.s8 %v1709
    %v1711 = vlaneseq
    %v1712 = vshrl.u32 %v1711, 7
    %v1713 = vsub.s32 %v1710, %v1712
    %v1714 = vrot.slane %v1700, %v1713
    %v1715 = vcombine.high %v1691, 0.0
    %v1716 = vcombine.high %v1698, 0.0
    %v1717 = vcombine.high %v1707, 0.0
    %v1718 = vcombine.high %v1714, 0.0
    %v1719 = vcombine.low %v1516, %v1604
    %v1720 = vcombine.high %v1516, %v1604
    %v1722 = vunpack.c.l.s4 1983009808
    %v1723 = vunpack.c.0.s8 %v1722
    %v1724 = vlaneseq
    %v1725 = vshrl.u32 %v1724, 7
    %v1726 = vsub.s32 %v1723, %v1725
    %v1727 = vrot.slane %v1719, %v1726
    %v1729 = vunpack.c.l.s4 1983009808
    %v1730 = vunpack.c.0.s8 %v1729
    %v1731 = vlaneseq
    %v1732 = vshrl.u32 %v1731, 7
    %v1733 = vsub.s32 %v1730, %v1732
    %v1734 = vrot.slane %v1720, %v1733
    %v1735 = vcombine.low %v1560, %v1648
    %v1736 = vcombine.high %v1560, %v1648
    %v1738 = vunpack.c.l.s4 1983009808
    %v1739 = vunpack.c.0.s8 %v1738
    %v1740 = vlaneseq
    %v1741 = vshrl.u32 %v1740, 7
    %v1742 = vsub.s32 %v1739, %v1741
    %v1743 = vrot.slane %v1735, %v1742
    %v1745 = vunpack.c.l.s4 1983009808
    %v1746 = vunpack.c.0.s8 %v1745
    %v1747 = vlaneseq
    %v1748 = vshrl.u32 %v1747, 7
    %v1749 = vsub.s32 %v1746, %v1748
    %v1750 = vrot.slane %v1736, %v1749
    %v1751 = vcombine.low %v1727, %v1743
    %v1752 = vcombine.high %v1727, %v1743
    %v1754 = vunpack.c.l.s4 1934713408
    %v1755 = vunpack.c.0.s8 %v1754
    %v1756 = vlaneseq
    %v1757 = vshrl.u32 %v1756, 7
    %v1758 = vsub.s32 %v1755, %v1757
    %v1759 = vrot.slane %v1751, %v1758
    %v1761 = vunpack.c.l.s4 1934713408
    %v1762 = vunpack.c.0.s8 %v1761
    %v1763 = vlaneseq
    %v1764 = vshrl.u32 %v1763, 7
    %v1765 = vsub.s32 %v1762, %v1764
    %v1766 = vrot.slane %v1752, %v1765
    %v1767 = vcombine.low %v1734, %v1750
    %v1768 = vcombine.high %v1734, %v1750
    %v1770 = vunpack.c.l.s4 1934713408
    %v1771 = vunpack.c.0.s8 %v1770
    %v1772 = vlaneseq
    %v1773 = vshrl.u32 %v1772, 7
    %v1774 = vsub.s32 %v1771, %v1773
    %v1775 = vrot.slane %v1767, %v1774
    %v1777 = vunpack.c.l.s4 1934713408
    %v1778 = vunpack.c.0.s8 %v1777
    %v1779 = vlaneseq
    %v1780 = vshrl.u32 %v1779, 7
    %v1781 = vsub.s32 %v1778, %v1780
    %v1782 = vrot.slane %v1768, %v1781
    %v1783 = vcombine.high %v1759, 0.0
    %v1784 = vcombine.high %v1766, 0.0
    %v1785 = vcombine.high %v1775, 0.0
    %v1786 = vcombine.high %v1782, 0.0
    %v1787 = vcombine.low %v1691, %v1698
    %v1789 = vunpack.c.l.s4 1983009808
    %v1790 = vunpack.c.0.s8 %v1789
    %v1791 = vlaneseq
    %v1792 = vshrl.u32 %v1791, 7
    %v1793 = vsub.s32 %v1790, %v1792
    %v1794 = vrot.slane %v1787, %v1793
    %v1795 = vcombine.low %v1715, %v1716
    %v1797 = vunpack.c.l.s4 1983009808
    %v1798 = vunpack.c.0.s8 %v1797
    %v1799 = vlaneseq
    %v1800 = vshrl.u32 %v1799, 7
    %v1801 = vsub.s32 %v1798, %v1800
    %v1802 = vrot.slane %v1795, %v1801
    %v1803 = vcombine.low %v1707, %v1714
    %v1805 = vunpack.c.l.s4 1983009808
    %v1806 = vunpack.c.0.s8 %v1805
    %v1807 = vlaneseq
    %v1808 = vshrl.u32 %v1807, 7
    %v1809 = vsub.s32 %v1806, %v1808
    %v1810 = vrot.slane %v1803, %v1809
    %v1811 = vcombine.low %v1717, %v1718
    %v1813 = vunpack.c.l.s4 1983009808
    %v1814 = vunpack.c.0.s8 %v1813
    %v1815 = vlaneseq
    %v1816 = vshrl.u32 %v1815, 7
    %v1817 = vsub.s32 %v1814, %v1816
    %v1818 = vrot.slane %v1811, %v1817
    %v1819 = vcombine.low %v1794, %v1802
    %v1820 = vcombine.high %v1794, %v1802
    %v1822 = vunpack.c.l.s4 1934713408
    %v1823 = vunpack.c.0.s8 %v1822
    %v1824 = vlaneseq
    %v1825 = vshrl.u32 %v1824, 7
    %v1826 = vsub.s32 %v1823, %v1825
    %v1827 = vrot.slane %v1819, %v1826
    %v1829 = vunpack.c.l.s4 1934713408
    %v1830 = vunpack.c.0.s8 %v1829
    %v1831 = vlaneseq
    %v1832 = vshrl.u32 %v1831, 7
    %v1833 = vsub.s32 %v1830, %v1832
    %v1834 = vrot.slane %v1820, %v1833
    %v1835 = vcombine.low %v1810, %v1818
    %v1836 = vcombine.high %v1810, %v1818
    %v1838 = vunpack.c.l.s4 1934713408
    %v1839 = vunpack.c.0.s8 %v1838
    %v1840 = vlaneseq
    %v1841 = vshrl.u32 %v1840, 7
    %v1842 = vsub.s32 %v1839, %v1841
    %v1843 = vrot.slane %v1835, %v1842
    %v1845 = vunpack.c.l.s4 1934713408
    %v1846 = vunpack.c.0.s8 %v1845
    %v1847 = vlaneseq
    %v1848 = vshrl.u32 %v1847, 7
    %v1849 = vsub.s32 %v1846, %v1848
    %v1850 = vrot.slane %v1836, %v1849
    %v1851 = vcombine.low %v1827, %v1843
    %v1852 = vcombine.high %v1827, %v1843
    %v1853 = vcombine.low %v1834, %v1850
    %v1854 = vcombine.high %v1834, %v1850
    %v1855 = vcombine.low %v1759, %v1766
    %v1857 = vunpack.c.l.s4 1983009808
    %v1858 = vunpack.c.0.s8 %v1857
    %v1859 = vlaneseq
    %v1860 = vshrl.u32 %v1859, 7
    %v1861 = vsub.s32 %v1858, %v1860
    %v1862 = vrot.slane %v1855, %v1861
    %v1863 = vcombine.low %v1783, %v1784
    %v1865 = vunpack.c.l.s4 1983009808
    %v1866 = vunpack.c.0.s8 %v1865
    %v1867 = vlaneseq
    %v1868 = vshrl.u32 %v1867, 7
    %v1869 = vsub.s32 %v1866, %v1868
    %v1870 = vrot.slane %v1863, %v1869
    %v1871 = vcombine.low %v1775, %v1782
    %v1873 = vunpack.c.l.s4 1983009808
    %v1874 = vunpack.c.0.s8 %v1873
    %v1875 = vlaneseq
    %v1876 = vshrl.u32 %v1875, 7
    %v1877 = vsub.s32 %v1874, %v1876
    %v1878 = vrot.slane %v1871, %v1877
    %v1879 = vcombine.low %v1785, %v1786
    %v1881 = vunpack.c.l.s4 1983009808
    %v1882 = vunpack.c.0.s8 %v1881
    %v1883 = vlaneseq
    %v1884 = vshrl.u32 %v1883, 7
    %v1885 = vsub.s32 %v1882, %v1884
    %v1886 = vrot.slane %v1879, %v1885
    %v1887 = vcombine.low %v1862, %v1870
    %v1888 = vcombine.high %v1862, %v1870
    %v1890 = vunpack.c.l.s4 1934713408
    %v1891 = vunpack.c.0.s8 %v1890
    %v1892 = vlaneseq
    %v1893 = vshrl.u32 %v1892, 7
    %v1894 = vsub.s32 %v1891, %v1893
    %v1895 = vrot.slane %v1887, %v1894
    %v1897 = vunpack.c.l.s4 1934713408
    %v1898 = vunpack.c.0.s8 %v1897
    %v1899 = vlaneseq
    %v1900 = vshrl.u32 %v1899, 7
    %v1901 = vsub.s32 %v1898, %v1900
    %v1902 = vrot.slane %v1888, %v1901
    %v1903 = vcombine.low %v1878, %v1886
    %v1904 = vcombine.high %v1878, %v1886
    %v1906 = vunpack.c.l.s4 1934713408
    %v1907 = vunpack.c.0.s8 %v1906
    %v1908 = vlaneseq
    %v1909 = vshrl.u32 %v1908, 7
    %v1910 = vsub.s32 %v1907, %v1909
    %v1911 = vrot.slane %v1903, %v1910
    %v1913 = vunpack.c.l.s4 1934713408
    %v1914 = vunpack.c.0.s8 %v1913
    %v1915 = vlaneseq
    %v1916 = vshrl.u32 %v1915, 7
    %v1917 = vsub.s32 %v1914, %v1916
    %v1918 = vrot.slane %v1904, %v1917
    %v1919 = vcombine.low %v1895, %v1911
    %v1920 = vcombine.high %v1895, %v1911
    %v1921 = vcombine.low %v1902, %v1918
    %v1922 = vcombine.high %v1902, %v1918
    %1925 = vrot.lane.b32.xlu0 %v1852, 8
    %v1926 = vpop.permute.xlu0 %1925
    %1927 = vrot.lane.b32.xlu0 %v1920, 8
    %v1928 = vpop.permute.xlu0 %1927
    %1933 = vrot.lane.b32.xlu0 %v1853, 16
    %v1934 = vpop.permute.xlu0 %1933
    %1935 = vrot.lane.b32.xlu0 %v1921, 16
    %v1936 = vpop.permute.xlu0 %1935
    %1941 = vrot.lane.b32.xlu0 %v1854, 24
    %v1942 = vpop.permute.xlu0 %1941
    %1943 = vrot.lane.b32.xlu0 %v1922, 24
    %v1944 = vpop.permute.xlu0 %1943
    %v1947 = vsel %vm1193, %v1851, %v1926
    %v1948 = vsel %vm1193, %v1919, %v1928
    %v1949 = vsel %vm1382, %v1947, %v1934
    %v1950 = vsel %vm1382, %v1948, %v1936
    %vm1951 = vcmask 195584
    %v1952 = vsel %vm1951, %v1949, %v1942
    %v1953 = vsel %vm1951, %v1950, %v1944
    %v1954 = vpack.c.bf16 %v1953, %v1952
    %v1955 = vlaneseq
    %v1956 = vshrl.u32 %v1955, 7
    %v1957 = vsub.s32 3, %v1956
    %v1958 = vrot.slane %v57, %v1957
    %v1963 = vunpack.c.l.b16 %v123
    %v1964 = vunpack.c.l.b16 %v124
    %v1965 = vunpack.c.l.b16 %v125
    %v1966 = vunpack.c.l.b16 %v126
    %v1967 = vpack.c.b16 %v1964, %v1963
    %v1968 = vpack.c.b16 %v1966, %v1965
    %v1972 = vsel %vm144, %v1954, 0
    %1974 = vmatprep.subr.bf16.mxu0 0
    %1975 = vmatpush1.bf16.msra.mxu0 0
    %1976 = vmatprep.subr.bf16.mxu0 0
    %1977 = vmatpush1.bf16.msra.mxu0 0
    %1978 = vmatprep.subr.bf16.mxu0 0
    %1979 = vmatpush1.bf16.msra.mxu0 0
    %1980 = vmatprep.subr.bf16.mxu0 0
    %1981 = vmatpush1.bf16.msra.mxu0 0
    %1982 = vmatprep.subr.bf16.mxu0 0
    %1983 = vmatpush1.bf16.msra.mxu0 0
    %1984 = vmatprep.subr.bf16.mxu0 0
    %1985 = vmatpush1.bf16.msra.mxu0 0
    %1986 = vmatprep.subr.bf16.mxu0 0
    %1987 = vmatpush1.bf16.msra.mxu0 %v1968
    %1988 = vmatprep.subr.bf16.mxu0 0
    %1989 = vmatpush1.bf16.msra.mxu0 %v1967
    %1990 = vmatprep.subr.bf16.mxu0 0
    %1991 = vmatpush2.bf16.msra.mxu0 0
    %1992 = vmatprep.subr.bf16.mxu0 0
    %1993 = vmatpush2.bf16.msra.mxu0 0
    %1994 = vmatprep.subr.bf16.mxu0 0
    %1995 = vmatpush2.bf16.msra.mxu0 0
    %1996 = vmatprep.subr.bf16.mxu0 0
    %1997 = vmatpush2.bf16.msra.mxu0 0
    %1998 = vmatprep.subr.bf16.mxu0 0
    %1999 = vmatpush2.bf16.msra.mxu0 0
    %2000 = vmatprep.subr.bf16.mxu0 0
    %2001 = vmatpush2.bf16.msra.mxu0 0
    %2002 = vmatprep.subr.bf16.mxu0 0
    %2003 = vmatpush2.bf16.msra.mxu0 0
    %2004 = vmatprep.subr.bf16.mxu0 0
    %2005 = vmatpush2.bf16.msra.mxu0 0
    %2006 = vmatprep.mubr.bf16.mxu0 0
    %2007 = vmatmul.mubr.bf16.gmra.mxu0 %v1972
    %v2008 = vpop.f32.mrf.mxu0
    %v2009 = vadd.f32 %v1958, %v2008
    %v2010 = vpop.f32.mrf.mxu0
    %v2011 = vpop.f32.mrf.mxu0
    %v2012 = vadd.f32 %v1958, %v2011
    %v2013 = vpop.f32.mrf.mxu0
    %2014 = vdwg.mxu0
    %v2015 = vadd.f32 %v106, %v2009
    %v2016 = vadd.f32 %v107, %v2012
    %v2017 = vsel %vm144, %v2015, 0.0
    %2018 = vadd.xlane.f32.xlu0 %v2017
    %v2019 = vpop.xlane.xlu0 %2018
    %v2020 = vsel %vm144, %v2016, 0.0
    %2021 = vadd.xlane.f32.xlu0 %v2020
    %v2022 = vpop.xlane.xlu0 %2021
    %v2023 = vrcp.pop 32.0
    %v2024 = vmul.f32 %v2019, %v2023
    %v2025 = vmul.f32 %v2022, %v2023
    %v2026 = vsub.f32 %v2015, %v2024
    %v2027 = vsub.f32 %v2016, %v2025
    %v2028 = vmul.f32 %v2026, %v2026
    %v2029 = vmul.f32 %v2027, %v2027
    %v2030 = vsel %vm144, %v2028, 0.0
    %2031 = vadd.xlane.f32.xlu0 %v2030
    %v2032 = vpop.xlane.xlu0 %2031
    %v2033 = vsel %vm144, %v2029, 0.0
    %2034 = vadd.xlane.f32.xlu0 %v2033
    %v2035 = vpop.xlane.xlu0 %2034
    %v2036 = vmul.f32 %v2032, %v2023
    %v2037 = vmul.f32 %v2035, %v2023
    %v2038 = vadd.f32 %v2036, 1e-05
    %v2039 = vadd.f32 %v2037, 1e-05
    %v2040 = vrsqrt.pop %v2038
    %v2041 = vrsqrt.pop %v2039
    %v2042 = vmul.f32 %v2026, %v2040
    %v2043 = vmul.f32 %v2027, %v2041
    %v2044 = vlaneseq
    %v2045 = vshrl.u32 %v2044, 7
    %v2046 = vsub.s32 4, %v2045
    %v2047 = vrot.slane %v57, %v2046
    %v2048 = vmul.f32 %v2042, %v2047
    %v2049 = vmul.f32 %v2043, %v2047
    %v2050 = vlaneseq
    %v2051 = vshrl.u32 %v2050, 7
    %v2052 = vsub.s32 5, %v2051
    %v2053 = vrot.slane %v57, %v2052
    %v2054 = vadd.f32 %v2048, %v2053
    %v2055 = vadd.f32 %v2049, %v2053
    %s2056 = scalar_lea.vmem [#allocation5], 64
    %v2057 = vld [vmem:[%s2056] sm:$0xf]
    %v2058 = vld [vmem:[%s2056 + $0x4] sm:$0xf]
    %v2059 = vld [vmem:[%s2056 + $0x8] sm:$0xf]
    %v2060 = vld [vmem:[%s2056 + $0xc] sm:$0xf]
    %s2061 = scalar_lea.vmem [#allocation5], 80
    %v2062 = vld [vmem:[%s2061] sm:$0xf]
    %v2063 = vld [vmem:[%s2061 + $0x4] sm:$0xf]
    %v2064 = vld [vmem:[%s2061 + $0x8] sm:$0xf]
    %v2065 = vld [vmem:[%s2061 + $0xc] sm:$0xf]
    %v2066 = vpack.c.bf16 %v2055, %v2054
    %v2067 = vlaneseq
    %v2068 = vshrl.u32 %v2067, 7
    %v2069 = vsub.s32 6, %v2068
    %v2070 = vrot.slane %v57, %v2069
    %v2075 = vunpack.c.l.b16 %v2057
    %v2076 = vunpack.c.l.b16 %v2058
    %v2077 = vunpack.c.l.b16 %v2059
    %v2078 = vunpack.c.l.b16 %v2060
    %v2079 = vpack.c.b16 %v2076, %v2075
    %v2080 = vpack.c.b16 %v2078, %v2077
    %v2084 = vsel %vm144, %v2066, 0
    %2086 = vmatprep.subr.bf16.mxu0 0
    %2087 = vmatpush1.bf16.msra.mxu0 0
    %2088 = vmatprep.subr.bf16.mxu0 0
    %2089 = vmatpush1.bf16.msra.mxu0 0
    %2090 = vmatprep.subr.bf16.mxu0 0
    %2091 = vmatpush1.bf16.msra.mxu0 0
    %2092 = vmatprep.subr.bf16.mxu0 0
    %2093 = vmatpush1.bf16.msra.mxu0 0
    %2094 = vmatprep.subr.bf16.mxu0 0
    %2095 = vmatpush1.bf16.msra.mxu0 0
    %2096 = vmatprep.subr.bf16.mxu0 0
    %2097 = vmatpush1.bf16.msra.mxu0 0
    %2098 = vmatprep.subr.bf16.mxu0 0
    %2099 = vmatpush1.bf16.msra.mxu0 %v2080
    %2100 = vmatprep.subr.bf16.mxu0 0
    %2101 = vmatpush1.bf16.msra.mxu0 %v2079
    %2102 = vmatprep.subr.bf16.mxu0 0
    %2103 = vmatpush2.bf16.msra.mxu0 0
    %2104 = vmatprep.subr.bf16.mxu0 0
    %2105 = vmatpush2.bf16.msra.mxu0 0
    %2106 = vmatprep.subr.bf16.mxu0 0
    %2107 = vmatpush2.bf16.msra.mxu0 0
    %2108 = vmatprep.subr.bf16.mxu0 0
    %2109 = vmatpush2.bf16.msra.mxu0 0
    %2110 = vmatprep.subr.bf16.mxu0 0
    %2111 = vmatpush2.bf16.msra.mxu0 0
    %2112 = vmatprep.subr.bf16.mxu0 0
    %2113 = vmatpush2.bf16.msra.mxu0 0
    %2114 = vmatprep.subr.bf16.mxu0 0
    %2115 = vmatpush2.bf16.msra.mxu0 0
    %2116 = vmatprep.subr.bf16.mxu0 0
    %2117 = vmatpush2.bf16.msra.mxu0 0
    %2118 = vmatprep.mubr.bf16.mxu0 0
    %2119 = vmatmul.mubr.bf16.gmra.mxu0 %v2084
    %v2120 = vpop.f32.mrf.mxu0
    %v2121 = vadd.f32 %v2070, %v2120
    %v2122 = vpop.f32.mrf.mxu0
    %v2123 = vpop.f32.mrf.mxu0
    %v2124 = vadd.f32 %v2070, %v2123
    %v2125 = vpop.f32.mrf.mxu0
    %2126 = vdwg.mxu0
    %v2127 = vmax.f32 %v2121, 0.0
    %v2128 = vmax.f32 %v2124, 0.0
    %v2129 = vpack.c.bf16 %v2128, %v2127
    %v2130 = vlaneseq
    %v2131 = vshrl.u32 %v2130, 7
    %v2132 = vsub.s32 7, %v2131
    %v2133 = vrot.slane %v57, %v2132
    %v2138 = vunpack.c.l.b16 %v2062
    %v2139 = vunpack.c.l.b16 %v2063
    %v2140 = vunpack.c.l.b16 %v2064
    %v2141 = vunpack.c.l.b16 %v2065
    %v2142 = vpack.c.b16 %v2139, %v2138
    %v2143 = vpack.c.b16 %v2141, %v2140
    %v2147 = vsel %vm144, %v2129, 0
    %2149 = vmatprep.subr.bf16.mxu0 0
    %2150 = vmatpush1.bf16.msra.mxu0 0
    %2151 = vmatprep.subr.bf16.mxu0 0
    %2152 = vmatpush1.bf16.msra.mxu0 0
    %2153 = vmatprep.subr.bf16.mxu0 0
    %2154 = vmatpush1.bf16.msra.mxu0 0
    %2155 = vmatprep.subr.bf16.mxu0 0
    %2156 = vmatpush1.bf16.msra.mxu0 0
    %2157 = vmatprep.subr.bf16.mxu0 0
    %2158 = vmatpush1.bf16.msra.mxu0 0
    %2159 = vmatprep.subr.bf16.mxu0 0
    %2160 = vmatpush1.bf16.msra.mxu0 0
    %2161 = vmatprep.subr.bf16.mxu0 0
    %2162 = vmatpush1.bf16.msra.mxu0 %v2143
    %2163 = vmatprep.subr.bf16.mxu0 0
    %2164 = vmatpush1.bf16.msra.mxu0 %v2142
    %2165 = vmatprep.subr.bf16.mxu0 0
    %2166 = vmatpush2.bf16.msra.mxu0 0
    %2167 = vmatprep.subr.bf16.mxu0 0
    %2168 = vmatpush2.bf16.msra.mxu0 0
    %2169 = vmatprep.subr.bf16.mxu0 0
    %2170 = vmatpush2.bf16.msra.mxu0 0
    %2171 = vmatprep.subr.bf16.mxu0 0
    %2172 = vmatpush2.bf16.msra.mxu0 0
    %2173 = vmatprep.subr.bf16.mxu0 0
    %2174 = vmatpush2.bf16.msra.mxu0 0
    %2175 = vmatprep.subr.bf16.mxu0 0
    %2176 = vmatpush2.bf16.msra.mxu0 0
    %2177 = vmatprep.subr.bf16.mxu0 0
    %2178 = vmatpush2.bf16.msra.mxu0 0
    %2179 = vmatprep.subr.bf16.mxu0 0
    %2180 = vmatpush2.bf16.msra.mxu0 0
    %2181 = vmatprep.mubr.bf16.mxu0 0
    %2182 = vmatmul.mubr.bf16.gmra.mxu0 %v2147
    %v2183 = vpop.f32.mrf.mxu0
    %v2184 = vadd.f32 %v2133, %v2183
    %v2185 = vpop.f32.mrf.mxu0
    %v2186 = vpop.f32.mrf.mxu0
    %v2187 = vadd.f32 %v2133, %v2186
    %v2188 = vpop.f32.mrf.mxu0
    %2189 = vdwg.mxu0
    %v2190 = vadd.f32 %v2054, %v2184
    %v2191 = vadd.f32 %v2055, %v2187
    %v2192 = vsel %vm144, %v2190, 0.0
    %2193 = vadd.xlane.f32.xlu0 %v2192
    %v2194 = vpop.xlane.xlu0 %2193
    %v2195 = vsel %vm144, %v2191, 0.0
    %2196 = vadd.xlane.f32.xlu0 %v2195
    %v2197 = vpop.xlane.xlu0 %2196
    %v2198 = vmul.f32 %v2194, %v2023
    %v2199 = vmul.f32 %v2197, %v2023
    %v2200 = vsub.f32 %v2190, %v2198
    %v2201 = vsub.f32 %v2191, %v2199
    %v2202 = vmul.f32 %v2200, %v2200
    %v2203 = vmul.f32 %v2201, %v2201
    %v2204 = vsel %vm144, %v2202, 0.0
    %2205 = vadd.xlane.f32.xlu0 %v2204
    %v2206 = vpop.xlane.xlu0 %2205
    %v2207 = vsel %vm144, %v2203, 0.0
    %2208 = vadd.xlane.f32.xlu0 %v2207
    %v2209 = vpop.xlane.xlu0 %2208
    %v2210 = vmul.f32 %v2206, %v2023
    %v2211 = vmul.f32 %v2209, %v2023
    %v2212 = vadd.f32 %v2210, 1e-05
    %v2213 = vadd.f32 %v2211, 1e-05
    %v2214 = vrsqrt.pop %v2212
    %v2215 = vrsqrt.pop %v2213
    %v2216 = vmul.f32 %v2200, %v2214
    %v2217 = vmul.f32 %v2201, %v2215
    %v2218 = vlaneseq
    %v2219 = vshrl.u32 %v2218, 7
    %v2220 = vsub.s32 0, %v2219
    %v2221 = vrot.slane %v58, %v2220
    %v2222 = vmul.f32 %v2216, %v2221
    %v2223 = vmul.f32 %v2217, %v2221
    %v2224 = vlaneseq
    %v2225 = vshrl.u32 %v2224, 7
    %v2226 = vsub.s32 1, %v2225
    %v2227 = vrot.slane %v58, %v2226
    %v2228 = vadd.f32 %v2222, %v2227
    %v2229 = vadd.f32 %v2223, %v2227
    %s2230 = scalar_lea.vmem [#allocation5], 96
    %v2231 = vld [vmem:[%s2230] sm:$0xf]
    %v2232 = vld [vmem:[%s2230 + $0x4] sm:$0xf]
    %v2233 = vld [vmem:[%s2230 + $0x8] sm:$0xf]
    %v2234 = vld [vmem:[%s2230 + $0xc] sm:$0xf]
    %s2235 = scalar_lea.vmem [#allocation5], 112
    %v2236 = vld [vmem:[%s2235] sm:$0xf]
    %v2237 = vld [vmem:[%s2235 + $0x4] sm:$0xf]
    %v2238 = vld [vmem:[%s2235 + $0x8] sm:$0xf]
    %v2239 = vld [vmem:[%s2235 + $0xc] sm:$0xf]
    %s2240 = scalar_lea.vmem [#allocation5], 128
    %v2241 = vld [vmem:[%s2240] sm:$0xf]
    %v2242 = vld [vmem:[%s2240 + $0x4] sm:$0xf]
    %v2243 = vld [vmem:[%s2240 + $0x8] sm:$0xf]
    %v2244 = vld [vmem:[%s2240 + $0xc] sm:$0xf]
    %s2245 = scalar_lea.vmem [#allocation5], 144
    %v2246 = vld [vmem:[%s2245] sm:$0xf]
    %v2247 = vld [vmem:[%s2245 + $0x4] sm:$0xf]
    %v2248 = vld [vmem:[%s2245 + $0x8] sm:$0xf]
    %v2249 = vld [vmem:[%s2245 + $0xc] sm:$0xf]
    %v2250 = vpack.c.bf16 %v2229, %v2228
    %v2251 = vlaneseq
    %v2252 = vshrl.u32 %v2251, 7
    %v2253 = vsub.s32 2, %v2252
    %v2254 = vrot.slane %v58, %v2253
    %v2259 = vunpack.c.l.b16 %v2231
    %v2260 = vunpack.c.l.b16 %v2232
    %v2261 = vunpack.c.l.b16 %v2233
    %v2262 = vunpack.c.l.b16 %v2234
    %v2263 = vpack.c.b16 %v2260, %v2259
    %v2264 = vpack.c.b16 %v2262, %v2261
    %v2268 = vsel %vm144, %v2250, 0
    %2270 = vmatprep.subr.bf16.mxu0 0
    %2271 = vmatpush1.bf16.msra.mxu0 0
    %2272 = vmatprep.subr.bf16.mxu0 0
    %2273 = vmatpush1.bf16.msra.mxu0 0
    %2274 = vmatprep.subr.bf16.mxu0 0
    %2275 = vmatpush1.bf16.msra.mxu0 0
    %2276 = vmatprep.subr.bf16.mxu0 0
    %2277 = vmatpush1.bf16.msra.mxu0 0
    %2278 = vmatprep.subr.bf16.mxu0 0
    %2279 = vmatpush1.bf16.msra.mxu0 0
    %2280 = vmatprep.subr.bf16.mxu0 0
    %2281 = vmatpush1.bf16.msra.mxu0 0
    %2282 = vmatprep.subr.bf16.mxu0 0
    %2283 = vmatpush1.bf16.msra.mxu0 %v2264
    %2284 = vmatprep.subr.bf16.mxu0 0
    %2285 = vmatpush1.bf16.msra.mxu0 %v2263
    %2286 = vmatprep.subr.bf16.mxu0 0
    %2287 = vmatpush2.bf16.msra.mxu0 0
    %2288 = vmatprep.subr.bf16.mxu0 0
    %2289 = vmatpush2.bf16.msra.mxu0 0
    %2290 = vmatprep.subr.bf16.mxu0 0
    %2291 = vmatpush2.bf16.msra.mxu0 0
    %2292 = vmatprep.subr.bf16.mxu0 0
    %2293 = vmatpush2.bf16.msra.mxu0 0
    %2294 = vmatprep.subr.bf16.mxu0 0
    %2295 = vmatpush2.bf16.msra.mxu0 0
    %2296 = vmatprep.subr.bf16.mxu0 0
    %2297 = vmatpush2.bf16.msra.mxu0 0
    %2298 = vmatprep.subr.bf16.mxu0 0
    %2299 = vmatpush2.bf16.msra.mxu0 0
    %2300 = vmatprep.subr.bf16.mxu0 0
    %2301 = vmatpush2.bf16.msra.mxu0 0
    %2302 = vmatprep.mubr.bf16.mxu0 0
    %2303 = vmatmul.mubr.bf16.gmra.mxu0 %v2268
    %v2304 = vpop.f32.mrf.mxu0
    %v2305 = vadd.f32 %v2254, %v2304
    %v2306 = vpop.f32.mrf.mxu0
    %v2307 = vpop.f32.mrf.mxu0
    %v2308 = vadd.f32 %v2254, %v2307
    %v2309 = vpop.f32.mrf.mxu0
    %2310 = vdwg.mxu0
    %v2311 = vmul.f32 %v2305, 0.35355338
    %v2312 = vmul.f32 %v2308, 0.35355338
    %v2313 = vlaneseq
    %v2314 = vshrl.u32 %v2313, 7
    %v2315 = vsub.s32 3, %v2314
    %v2316 = vrot.slane %v58, %v2315
    %v2321 = vunpack.c.l.b16 %v2236
    %v2322 = vunpack.c.l.b16 %v2237
    %v2323 = vunpack.c.l.b16 %v2238
    %v2324 = vunpack.c.l.b16 %v2239
    %v2325 = vpack.c.b16 %v2322, %v2321
    %v2326 = vpack.c.b16 %v2324, %v2323
    %2329 = vmatprep.subr.bf16.mxu0 0
    %2330 = vmatpush1.bf16.msra.mxu0 0
    %2331 = vmatprep.subr.bf16.mxu0 0
    %2332 = vmatpush1.bf16.msra.mxu0 0
    %2333 = vmatprep.subr.bf16.mxu0 0
    %2334 = vmatpush1.bf16.msra.mxu0 0
    %2335 = vmatprep.subr.bf16.mxu0 0
    %2336 = vmatpush1.bf16.msra.mxu0 0
    %2337 = vmatprep.subr.bf16.mxu0 0
    %2338 = vmatpush1.bf16.msra.mxu0 0
    %2339 = vmatprep.subr.bf16.mxu0 0
    %2340 = vmatpush1.bf16.msra.mxu0 0
    %2341 = vmatprep.subr.bf16.mxu0 0
    %2342 = vmatpush1.bf16.msra.mxu0 %v2326
    %2343 = vmatprep.subr.bf16.mxu0 0
    %2344 = vmatpush1.bf16.msra.mxu0 %v2325
    %2345 = vmatprep.subr.bf16.mxu0 0
    %2346 = vmatpush2.bf16.msra.mxu0 0
    %2347 = vmatprep.subr.bf16.mxu0 0
    %2348 = vmatpush2.bf16.msra.mxu0 0
    %2349 = vmatprep.subr.bf16.mxu0 0
    %2350 = vmatpush2.bf16.msra.mxu0 0
    %2351 = vmatprep.subr.bf16.mxu0 0
    %2352 = vmatpush2.bf16.msra.mxu0 0
    %2353 = vmatprep.subr.bf16.mxu0 0
    %2354 = vmatpush2.bf16.msra.mxu0 0
    %2355 = vmatprep.subr.bf16.mxu0 0
    %2356 = vmatpush2.bf16.msra.mxu0 0
    %2357 = vmatprep.subr.bf16.mxu0 0
    %2358 = vmatpush2.bf16.msra.mxu0 0
    %2359 = vmatprep.subr.bf16.mxu0 0
    %2360 = vmatpush2.bf16.msra.mxu0 0
    %2361 = vmatprep.mubr.bf16.mxu0 0
    %2362 = vmatmul.mubr.bf16.gmra.mxu0 %v2268
    %v2363 = vpop.f32.mrf.mxu0
    %v2364 = vadd.f32 %v2316, %v2363
    %v2365 = vpop.f32.mrf.mxu0
    %v2366 = vpop.f32.mrf.mxu0
    %v2367 = vadd.f32 %v2316, %v2366
    %v2368 = vpop.f32.mrf.mxu0
    %2369 = vdwg.mxu0
    %v2370 = vlaneseq
    %v2371 = vshrl.u32 %v2370, 7
    %v2372 = vsub.s32 4, %v2371
    %v2373 = vrot.slane %v58, %v2372
    %v2378 = vunpack.c.l.b16 %v2241
    %v2379 = vunpack.c.l.b16 %v2242
    %v2380 = vunpack.c.l.b16 %v2243
    %v2381 = vunpack.c.l.b16 %v2244
    %v2382 = vpack.c.b16 %v2379, %v2378
    %v2383 = vpack.c.b16 %v2381, %v2380
    %2386 = vmatprep.subr.bf16.mxu0 0
    %2387 = vmatpush1.bf16.msra.mxu0 0
    %2388 = vmatprep.subr.bf16.mxu0 0
    %2389 = vmatpush1.bf16.msra.mxu0 0
    %2390 = vmatprep.subr.bf16.mxu0 0
    %2391 = vmatpush1.bf16.msra.mxu0 0
    %2392 = vmatprep.subr.bf16.mxu0 0
    %2393 = vmatpush1.bf16.msra.mxu0 0
    %2394 = vmatprep.subr.bf16.mxu0 0
    %2395 = vmatpush1.bf16.msra.mxu0 0
    %2396 = vmatprep.subr.bf16.mxu0 0
    %2397 = vmatpush1.bf16.msra.mxu0 0
    %2398 = vmatprep.subr.bf16.mxu0 0
    %2399 = vmatpush1.bf16.msra.mxu0 %v2383
    %2400 = vmatprep.subr.bf16.mxu0 0
    %2401 = vmatpush1.bf16.msra.mxu0 %v2382
    %2402 = vmatprep.subr.bf16.mxu0 0
    %2403 = vmatpush2.bf16.msra.mxu0 0
    %2404 = vmatprep.subr.bf16.mxu0 0
    %2405 = vmatpush2.bf16.msra.mxu0 0
    %2406 = vmatprep.subr.bf16.mxu0 0
    %2407 = vmatpush2.bf16.msra.mxu0 0
    %2408 = vmatprep.subr.bf16.mxu0 0
    %2409 = vmatpush2.bf16.msra.mxu0 0
    %2410 = vmatprep.subr.bf16.mxu0 0
    %2411 = vmatpush2.bf16.msra.mxu0 0
    %2412 = vmatprep.subr.bf16.mxu0 0
    %2413 = vmatpush2.bf16.msra.mxu0 0
    %2414 = vmatprep.subr.bf16.mxu0 0
    %2415 = vmatpush2.bf16.msra.mxu0 0
    %2416 = vmatprep.subr.bf16.mxu0 0
    %2417 = vmatpush2.bf16.msra.mxu0 0
    %2418 = vmatprep.mubr.bf16.mxu0 0
    %2419 = vmatmul.mubr.bf16.gmra.mxu0 %v2268
    %v2420 = vpop.f32.mrf.mxu0
    %v2421 = vadd.f32 %v2373, %v2420
    %v2422 = vpop.f32.mrf.mxu0
    %v2423 = vpop.f32.mrf.mxu0
    %v2424 = vadd.f32 %v2373, %v2423
    %v2425 = vpop.f32.mrf.mxu0
    %2426 = vdwg.mxu0
    %2429 = vrot.lane.b32.xlu0 %v2311, 120
    %v2430 = vpop.permute.xlu0 %2429
    %2431 = vrot.lane.b32.xlu0 %v2312, 120
    %v2432 = vpop.permute.xlu0 %2431
    %2435 = vrot.lane.b32.xlu0 %v2311, 112
    %v2436 = vpop.permute.xlu0 %2435
    %2437 = vrot.lane.b32.xlu0 %v2312, 112
    %v2438 = vpop.permute.xlu0 %2437
    %2441 = vrot.lane.b32.xlu0 %v2311, 104
    %v2442 = vpop.permute.xlu0 %2441
    %2443 = vrot.lane.b32.xlu0 %v2312, 104
    %v2444 = vpop.permute.xlu0 %2443
    %v2447 = vcombine.low %v2311, %v2436
    %v2448 = vcombine.high %v2311, %v2436
    %v2450 = vunpack.c.l.s4 1983009808
    %v2451 = vunpack.c.0.s8 %v2450
    %v2452 = vlaneseq
    %v2453 = vshrl.u32 %v2452, 7
    %v2454 = vsub.s32 %v2451, %v2453
    %v2455 = vrot.slane %v2447, %v2454
    %v2457 = vunpack.c.l.s4 1983009808
    %v2458 = vunpack.c.0.s8 %v2457
    %v2459 = vlaneseq
    %v2460 = vshrl.u32 %v2459, 7
    %v2461 = vsub.s32 %v2458, %v2460
    %v2462 = vrot.slane %v2448, %v2461
    %v2463 = vcombine.low %v2430, %v2442
    %v2464 = vcombine.high %v2430, %v2442
    %v2466 = vunpack.c.l.s4 1983009808
    %v2467 = vunpack.c.0.s8 %v2466
    %v2468 = vlaneseq
    %v2469 = vshrl.u32 %v2468, 7
    %v2470 = vsub.s32 %v2467, %v2469
    %v2471 = vrot.slane %v2463, %v2470
    %v2473 = vunpack.c.l.s4 1983009808
    %v2474 = vunpack.c.0.s8 %v2473
    %v2475 = vlaneseq
    %v2476 = vshrl.u32 %v2475, 7
    %v2477 = vsub.s32 %v2474, %v2476
    %v2478 = vrot.slane %v2464, %v2477
    %v2479 = vcombine.low %v2455, %v2471
    %v2480 = vcombine.high %v2455, %v2471
    %v2482 = vunpack.c.l.s4 1934713408
    %v2483 = vunpack.c.0.s8 %v2482
    %v2484 = vlaneseq
    %v2485 = vshrl.u32 %v2484, 7
    %v2486 = vsub.s32 %v2483, %v2485
    %v2487 = vrot.slane %v2479, %v2486
    %v2489 = vunpack.c.l.s4 1934713408
    %v2490 = vunpack.c.0.s8 %v2489
    %v2491 = vlaneseq
    %v2492 = vshrl.u32 %v2491, 7
    %v2493 = vsub.s32 %v2490, %v2492
    %v2494 = vrot.slane %v2480, %v2493
    %v2495 = vcombine.low %v2462, %v2478
    %v2496 = vcombine.high %v2462, %v2478
    %v2498 = vunpack.c.l.s4 1934713408
    %v2499 = vunpack.c.0.s8 %v2498
    %v2500 = vlaneseq
    %v2501 = vshrl.u32 %v2500, 7
    %v2502 = vsub.s32 %v2499, %v2501
    %v2503 = vrot.slane %v2495, %v2502
    %v2505 = vunpack.c.l.s4 1934713408
    %v2506 = vunpack.c.0.s8 %v2505
    %v2507 = vlaneseq
    %v2508 = vshrl.u32 %v2507, 7
    %v2509 = vsub.s32 %v2506, %v2508
    %v2510 = vrot.slane %v2496, %v2509
    %v2511 = vcombine.high %v2487, 0.0
    %v2512 = vcombine.high %v2494, 0.0
    %v2513 = vcombine.high %v2503, 0.0
    %v2514 = vcombine.high %v2510, 0.0
    %v2515 = vcombine.low %v2312, %v2438
    %v2516 = vcombine.high %v2312, %v2438
    %v2518 = vunpack.c.l.s4 1983009808
    %v2519 = vunpack.c.0.s8 %v2518
    %v2520 = vlaneseq
    %v2521 = vshrl.u32 %v2520, 7
    %v2522 = vsub.s32 %v2519, %v2521
    %v2523 = vrot.slane %v2515, %v2522
    %v2525 = vunpack.c.l.s4 1983009808
    %v2526 = vunpack.c.0.s8 %v2525
    %v2527 = vlaneseq
    %v2528 = vshrl.u32 %v2527, 7
    %v2529 = vsub.s32 %v2526, %v2528
    %v2530 = vrot.slane %v2516, %v2529
    %v2531 = vcombine.low %v2432, %v2444
    %v2532 = vcombine.high %v2432, %v2444
    %v2534 = vunpack.c.l.s4 1983009808
    %v2535 = vunpack.c.0.s8 %v2534
    %v2536 = vlaneseq
    %v2537 = vshrl.u32 %v2536, 7
    %v2538 = vsub.s32 %v2535, %v2537
    %v2539 = vrot.slane %v2531, %v2538
    %v2541 = vunpack.c.l.s4 1983009808
    %v2542 = vunpack.c.0.s8 %v2541
    %v2543 = vlaneseq
    %v2544 = vshrl.u32 %v2543, 7
    %v2545 = vsub.s32 %v2542, %v2544
    %v2546 = vrot.slane %v2532, %v2545
    %v2547 = vcombine.low %v2523, %v2539
    %v2548 = vcombine.high %v2523, %v2539
    %v2550 = vunpack.c.l.s4 1934713408
    %v2551 = vunpack.c.0.s8 %v2550
    %v2552 = vlaneseq
    %v2553 = vshrl.u32 %v2552, 7
    %v2554 = vsub.s32 %v2551, %v2553
    %v2555 = vrot.slane %v2547, %v2554
    %v2557 = vunpack.c.l.s4 1934713408
    %v2558 = vunpack.c.0.s8 %v2557
    %v2559 = vlaneseq
    %v2560 = vshrl.u32 %v2559, 7
    %v2561 = vsub.s32 %v2558, %v2560
    %v2562 = vrot.slane %v2548, %v2561
    %v2563 = vcombine.low %v2530, %v2546
    %v2564 = vcombine.high %v2530, %v2546
    %v2566 = vunpack.c.l.s4 1934713408
    %v2567 = vunpack.c.0.s8 %v2566
    %v2568 = vlaneseq
    %v2569 = vshrl.u32 %v2568, 7
    %v2570 = vsub.s32 %v2567, %v2569
    %v2571 = vrot.slane %v2563, %v2570
    %v2573 = vunpack.c.l.s4 1934713408
    %v2574 = vunpack.c.0.s8 %v2573
    %v2575 = vlaneseq
    %v2576 = vshrl.u32 %v2575, 7
    %v2577 = vsub.s32 %v2574, %v2576
    %v2578 = vrot.slane %v2564, %v2577
    %v2579 = vcombine.high %v2555, 0.0
    %v2580 = vcombine.high %v2562, 0.0
    %v2581 = vcombine.high %v2571, 0.0
    %v2582 = vcombine.high %v2578, 0.0
    %v2583 = vcombine.low %v2487, %v2494
    %v2585 = vunpack.c.l.s4 1983009808
    %v2586 = vunpack.c.0.s8 %v2585
    %v2587 = vlaneseq
    %v2588 = vshrl.u32 %v2587, 7
    %v2589 = vsub.s32 %v2586, %v2588
    %v2590 = vrot.slane %v2583, %v2589
    %v2591 = vcombine.low %v2511, %v2512
    %v2593 = vunpack.c.l.s4 1983009808
    %v2594 = vunpack.c.0.s8 %v2593
    %v2595 = vlaneseq
    %v2596 = vshrl.u32 %v2595, 7
    %v2597 = vsub.s32 %v2594, %v2596
    %v2598 = vrot.slane %v2591, %v2597
    %v2599 = vcombine.low %v2503, %v2510
    %v2601 = vunpack.c.l.s4 1983009808
    %v2602 = vunpack.c.0.s8 %v2601
    %v2603 = vlaneseq
    %v2604 = vshrl.u32 %v2603, 7
    %v2605 = vsub.s32 %v2602, %v2604
    %v2606 = vrot.slane %v2599, %v2605
    %v2607 = vcombine.low %v2513, %v2514
    %v2609 = vunpack.c.l.s4 1983009808
    %v2610 = vunpack.c.0.s8 %v2609
    %v2611 = vlaneseq
    %v2612 = vshrl.u32 %v2611, 7
    %v2613 = vsub.s32 %v2610, %v2612
    %v2614 = vrot.slane %v2607, %v2613
    %v2615 = vcombine.low %v2590, %v2598
    %v2616 = vcombine.high %v2590, %v2598
    %v2618 = vunpack.c.l.s4 1934713408
    %v2619 = vunpack.c.0.s8 %v2618
    %v2620 = vlaneseq
    %v2621 = vshrl.u32 %v2620, 7
    %v2622 = vsub.s32 %v2619, %v2621
    %v2623 = vrot.slane %v2615, %v2622
    %v2625 = vunpack.c.l.s4 1934713408
    %v2626 = vunpack.c.0.s8 %v2625
    %v2627 = vlaneseq
    %v2628 = vshrl.u32 %v2627, 7
    %v2629 = vsub.s32 %v2626, %v2628
    %v2630 = vrot.slane %v2616, %v2629
    %v2631 = vcombine.low %v2606, %v2614
    %v2632 = vcombine.high %v2606, %v2614
    %v2634 = vunpack.c.l.s4 1934713408
    %v2635 = vunpack.c.0.s8 %v2634
    %v2636 = vlaneseq
    %v2637 = vshrl.u32 %v2636, 7
    %v2638 = vsub.s32 %v2635, %v2637
    %v2639 = vrot.slane %v2631, %v2638
    %v2641 = vunpack.c.l.s4 1934713408
    %v2642 = vunpack.c.0.s8 %v2641
    %v2643 = vlaneseq
    %v2644 = vshrl.u32 %v2643, 7
    %v2645 = vsub.s32 %v2642, %v2644
    %v2646 = vrot.slane %v2632, %v2645
    %v2647 = vcombine.low %v2623, %v2639
    %v2648 = vcombine.high %v2623, %v2639
    %v2649 = vcombine.low %v2630, %v2646
    %v2650 = vcombine.high %v2630, %v2646
    %v2651 = vcombine.low %v2555, %v2562
    %v2653 = vunpack.c.l.s4 1983009808
    %v2654 = vunpack.c.0.s8 %v2653
    %v2655 = vlaneseq
    %v2656 = vshrl.u32 %v2655, 7
    %v2657 = vsub.s32 %v2654, %v2656
    %v2658 = vrot.slane %v2651, %v2657
    %v2659 = vcombine.low %v2579, %v2580
    %v2661 = vunpack.c.l.s4 1983009808
    %v2662 = vunpack.c.0.s8 %v2661
    %v2663 = vlaneseq
    %v2664 = vshrl.u32 %v2663, 7
    %v2665 = vsub.s32 %v2662, %v2664
    %v2666 = vrot.slane %v2659, %v2665
    %v2667 = vcombine.low %v2571, %v2578
    %v2669 = vunpack.c.l.s4 1983009808
    %v2670 = vunpack.c.0.s8 %v2669
    %v2671 = vlaneseq
    %v2672 = vshrl.u32 %v2671, 7
    %v2673 = vsub.s32 %v2670, %v2672
    %v2674 = vrot.slane %v2667, %v2673
    %v2675 = vcombine.low %v2581, %v2582
    %v2677 = vunpack.c.l.s4 1983009808
    %v2678 = vunpack.c.0.s8 %v2677
    %v2679 = vlaneseq
    %v2680 = vshrl.u32 %v2679, 7
    %v2681 = vsub.s32 %v2678, %v2680
    %v2682 = vrot.slane %v2675, %v2681
    %v2683 = vcombine.low %v2658, %v2666
    %v2684 = vcombine.high %v2658, %v2666
    %v2686 = vunpack.c.l.s4 1934713408
    %v2687 = vunpack.c.0.s8 %v2686
    %v2688 = vlaneseq
    %v2689 = vshrl.u32 %v2688, 7
    %v2690 = vsub.s32 %v2687, %v2689
    %v2691 = vrot.slane %v2683, %v2690
    %v2693 = vunpack.c.l.s4 1934713408
    %v2694 = vunpack.c.0.s8 %v2693
    %v2695 = vlaneseq
    %v2696 = vshrl.u32 %v2695, 7
    %v2697 = vsub.s32 %v2694, %v2696
    %v2698 = vrot.slane %v2684, %v2697
    %v2699 = vcombine.low %v2674, %v2682
    %v2700 = vcombine.high %v2674, %v2682
    %v2702 = vunpack.c.l.s4 1934713408
    %v2703 = vunpack.c.0.s8 %v2702
    %v2704 = vlaneseq
    %v2705 = vshrl.u32 %v2704, 7
    %v2706 = vsub.s32 %v2703, %v2705
    %v2707 = vrot.slane %v2699, %v2706
    %v2709 = vunpack.c.l.s4 1934713408
    %v2710 = vunpack.c.0.s8 %v2709
    %v2711 = vlaneseq
    %v2712 = vshrl.u32 %v2711, 7
    %v2713 = vsub.s32 %v2710, %v2712
    %v2714 = vrot.slane %v2700, %v2713
    %v2715 = vcombine.low %v2691, %v2707
    %v2716 = vcombine.high %v2691, %v2707
    %v2717 = vcombine.low %v2698, %v2714
    %v2718 = vcombine.high %v2698, %v2714
    %v2719 = vpack.c.bf16 %v2715, %v2647
    %v2720 = vpack.c.bf16 %v2716, %v2648
    %v2721 = vpack.c.bf16 %v2717, %v2649
    %v2722 = vpack.c.bf16 %v2718, %v2650
    %2725 = vrot.lane.b32.xlu0 %v2364, 120
    %v2726 = vpop.permute.xlu0 %2725
    %2727 = vrot.lane.b32.xlu0 %v2367, 120
    %v2728 = vpop.permute.xlu0 %2727
    %2731 = vrot.lane.b32.xlu0 %v2364, 112
    %v2732 = vpop.permute.xlu0 %2731
    %2733 = vrot.lane.b32.xlu0 %v2367, 112
    %v2734 = vpop.permute.xlu0 %2733
    %2737 = vrot.lane.b32.xlu0 %v2364, 104
    %v2738 = vpop.permute.xlu0 %2737
    %2739 = vrot.lane.b32.xlu0 %v2367, 104
    %v2740 = vpop.permute.xlu0 %2739
    %v2743 = vcombine.low %v2364, %v2732
    %v2744 = vcombine.high %v2364, %v2732
    %v2746 = vunpack.c.l.s4 1983009808
    %v2747 = vunpack.c.0.s8 %v2746
    %v2748 = vlaneseq
    %v2749 = vshrl.u32 %v2748, 7
    %v2750 = vsub.s32 %v2747, %v2749
    %v2751 = vrot.slane %v2743, %v2750
    %v2753 = vunpack.c.l.s4 1983009808
    %v2754 = vunpack.c.0.s8 %v2753
    %v2755 = vlaneseq
    %v2756 = vshrl.u32 %v2755, 7
    %v2757 = vsub.s32 %v2754, %v2756
    %v2758 = vrot.slane %v2744, %v2757
    %v2759 = vcombine.low %v2726, %v2738
    %v2760 = vcombine.high %v2726, %v2738
    %v2762 = vunpack.c.l.s4 1983009808
    %v2763 = vunpack.c.0.s8 %v2762
    %v2764 = vlaneseq
    %v2765 = vshrl.u32 %v2764, 7
    %v2766 = vsub.s32 %v2763, %v2765
    %v2767 = vrot.slane %v2759, %v2766
    %v2769 = vunpack.c.l.s4 1983009808
    %v2770 = vunpack.c.0.s8 %v2769
    %v2771 = vlaneseq
    %v2772 = vshrl.u32 %v2771, 7
    %v2773 = vsub.s32 %v2770, %v2772
    %v2774 = vrot.slane %v2760, %v2773
    %v2775 = vcombine.low %v2751, %v2767
    %v2776 = vcombine.high %v2751, %v2767
    %v2778 = vunpack.c.l.s4 1934713408
    %v2779 = vunpack.c.0.s8 %v2778
    %v2780 = vlaneseq
    %v2781 = vshrl.u32 %v2780, 7
    %v2782 = vsub.s32 %v2779, %v2781
    %v2783 = vrot.slane %v2775, %v2782
    %v2785 = vunpack.c.l.s4 1934713408
    %v2786 = vunpack.c.0.s8 %v2785
    %v2787 = vlaneseq
    %v2788 = vshrl.u32 %v2787, 7
    %v2789 = vsub.s32 %v2786, %v2788
    %v2790 = vrot.slane %v2776, %v2789
    %v2791 = vcombine.low %v2758, %v2774
    %v2792 = vcombine.high %v2758, %v2774
    %v2794 = vunpack.c.l.s4 1934713408
    %v2795 = vunpack.c.0.s8 %v2794
    %v2796 = vlaneseq
    %v2797 = vshrl.u32 %v2796, 7
    %v2798 = vsub.s32 %v2795, %v2797
    %v2799 = vrot.slane %v2791, %v2798
    %v2801 = vunpack.c.l.s4 1934713408
    %v2802 = vunpack.c.0.s8 %v2801
    %v2803 = vlaneseq
    %v2804 = vshrl.u32 %v2803, 7
    %v2805 = vsub.s32 %v2802, %v2804
    %v2806 = vrot.slane %v2792, %v2805
    %v2807 = vcombine.high %v2783, 0.0
    %v2808 = vcombine.high %v2790, 0.0
    %v2809 = vcombine.high %v2799, 0.0
    %v2810 = vcombine.high %v2806, 0.0
    %v2811 = vcombine.low %v2367, %v2734
    %v2812 = vcombine.high %v2367, %v2734
    %v2814 = vunpack.c.l.s4 1983009808
    %v2815 = vunpack.c.0.s8 %v2814
    %v2816 = vlaneseq
    %v2817 = vshrl.u32 %v2816, 7
    %v2818 = vsub.s32 %v2815, %v2817
    %v2819 = vrot.slane %v2811, %v2818
    %v2821 = vunpack.c.l.s4 1983009808
    %v2822 = vunpack.c.0.s8 %v2821
    %v2823 = vlaneseq
    %v2824 = vshrl.u32 %v2823, 7
    %v2825 = vsub.s32 %v2822, %v2824
    %v2826 = vrot.slane %v2812, %v2825
    %v2827 = vcombine.low %v2728, %v2740
    %v2828 = vcombine.high %v2728, %v2740
    %v2830 = vunpack.c.l.s4 1983009808
    %v2831 = vunpack.c.0.s8 %v2830
    %v2832 = vlaneseq
    %v2833 = vshrl.u32 %v2832, 7
    %v2834 = vsub.s32 %v2831, %v2833
    %v2835 = vrot.slane %v2827, %v2834
    %v2837 = vunpack.c.l.s4 1983009808
    %v2838 = vunpack.c.0.s8 %v2837
    %v2839 = vlaneseq
    %v2840 = vshrl.u32 %v2839, 7
    %v2841 = vsub.s32 %v2838, %v2840
    %v2842 = vrot.slane %v2828, %v2841
    %v2843 = vcombine.low %v2819, %v2835
    %v2844 = vcombine.high %v2819, %v2835
    %v2846 = vunpack.c.l.s4 1934713408
    %v2847 = vunpack.c.0.s8 %v2846
    %v2848 = vlaneseq
    %v2849 = vshrl.u32 %v2848, 7
    %v2850 = vsub.s32 %v2847, %v2849
    %v2851 = vrot.slane %v2843, %v2850
    %v2853 = vunpack.c.l.s4 1934713408
    %v2854 = vunpack.c.0.s8 %v2853
    %v2855 = vlaneseq
    %v2856 = vshrl.u32 %v2855, 7
    %v2857 = vsub.s32 %v2854, %v2856
    %v2858 = vrot.slane %v2844, %v2857
    %v2859 = vcombine.low %v2826, %v2842
    %v2860 = vcombine.high %v2826, %v2842
    %v2862 = vunpack.c.l.s4 1934713408
    %v2863 = vunpack.c.0.s8 %v2862
    %v2864 = vlaneseq
    %v2865 = vshrl.u32 %v2864, 7
    %v2866 = vsub.s32 %v2863, %v2865
    %v2867 = vrot.slane %v2859, %v2866
    %v2869 = vunpack.c.l.s4 1934713408
    %v2870 = vunpack.c.0.s8 %v2869
    %v2871 = vlaneseq
    %v2872 = vshrl.u32 %v2871, 7
    %v2873 = vsub.s32 %v2870, %v2872
    %v2874 = vrot.slane %v2860, %v2873
    %v2875 = vcombine.high %v2851, 0.0
    %v2876 = vcombine.high %v2858, 0.0
    %v2877 = vcombine.high %v2867, 0.0
    %v2878 = vcombine.high %v2874, 0.0
    %v2879 = vcombine.low %v2783, %v2790
    %v2881 = vunpack.c.l.s4 1983009808
    %v2882 = vunpack.c.0.s8 %v2881
    %v2883 = vlaneseq
    %v2884 = vshrl.u32 %v2883, 7
    %v2885 = vsub.s32 %v2882, %v2884
    %v2886 = vrot.slane %v2879, %v2885
    %v2887 = vcombine.low %v2807, %v2808
    %v2889 = vunpack.c.l.s4 1983009808
    %v2890 = vunpack.c.0.s8 %v2889
    %v2891 = vlaneseq
    %v2892 = vshrl.u32 %v2891, 7
    %v2893 = vsub.s32 %v2890, %v2892
    %v2894 = vrot.slane %v2887, %v2893
    %v2895 = vcombine.low %v2799, %v2806
    %v2897 = vunpack.c.l.s4 1983009808
    %v2898 = vunpack.c.0.s8 %v2897
    %v2899 = vlaneseq
    %v2900 = vshrl.u32 %v2899, 7
    %v2901 = vsub.s32 %v2898, %v2900
    %v2902 = vrot.slane %v2895, %v2901
    %v2903 = vcombine.low %v2809, %v2810
    %v2905 = vunpack.c.l.s4 1983009808
    %v2906 = vunpack.c.0.s8 %v2905
    %v2907 = vlaneseq
    %v2908 = vshrl.u32 %v2907, 7
    %v2909 = vsub.s32 %v2906, %v2908
    %v2910 = vrot.slane %v2903, %v2909
    %v2911 = vcombine.low %v2886, %v2894
    %v2912 = vcombine.high %v2886, %v2894
    %v2914 = vunpack.c.l.s4 1934713408
    %v2915 = vunpack.c.0.s8 %v2914
    %v2916 = vlaneseq
    %v2917 = vshrl.u32 %v2916, 7
    %v2918 = vsub.s32 %v2915, %v2917
    %v2919 = vrot.slane %v2911, %v2918
    %v2921 = vunpack.c.l.s4 1934713408
    %v2922 = vunpack.c.0.s8 %v2921
    %v2923 = vlaneseq
    %v2924 = vshrl.u32 %v2923, 7
    %v2925 = vsub.s32 %v2922, %v2924
    %v2926 = vrot.slane %v2912, %v2925
    %v2927 = vcombine.low %v2902, %v2910
    %v2928 = vcombine.high %v2902, %v2910
    %v2930 = vunpack.c.l.s4 1934713408
    %v2931 = vunpack.c.0.s8 %v2930
    %v2932 = vlaneseq
    %v2933 = vshrl.u32 %v2932, 7
    %v2934 = vsub.s32 %v2931, %v2933
    %v2935 = vrot.slane %v2927, %v2934
    %v2937 = vunpack.c.l.s4 1934713408
    %v2938 = vunpack.c.0.s8 %v2937
    %v2939 = vlaneseq
    %v2940 = vshrl.u32 %v2939, 7
    %v2941 = vsub.s32 %v2938, %v2940
    %v2942 = vrot.slane %v2928, %v2941
    %v2943 = vcombine.low %v2919, %v2935
    %v2944 = vcombine.high %v2919, %v2935
    %v2945 = vcombine.low %v2926, %v2942
    %v2946 = vcombine.high %v2926, %v2942
    %v2947 = vcombine.low %v2851, %v2858
    %v2949 = vunpack.c.l.s4 1983009808
    %v2950 = vunpack.c.0.s8 %v2949
    %v2951 = vlaneseq
    %v2952 = vshrl.u32 %v2951, 7
    %v2953 = vsub.s32 %v2950, %v2952
    %v2954 = vrot.slane %v2947, %v2953
    %v2955 = vcombine.low %v2875, %v2876
    %v2957 = vunpack.c.l.s4 1983009808
    %v2958 = vunpack.c.0.s8 %v2957
    %v2959 = vlaneseq
    %v2960 = vshrl.u32 %v2959, 7
    %v2961 = vsub.s32 %v2958, %v2960
    %v2962 = vrot.slane %v2955, %v2961
    %v2963 = vcombine.low %v2867, %v2874
    %v2965 = vunpack.c.l.s4 1983009808
    %v2966 = vunpack.c.0.s8 %v2965
    %v2967 = vlaneseq
    %v2968 = vshrl.u32 %v2967, 7
    %v2969 = vsub.s32 %v2966, %v2968
    %v2970 = vrot.slane %v2963, %v2969
    %v2971 = vcombine.low %v2877, %v2878
    %v2973 = vunpack.c.l.s4 1983009808
    %v2974 = vunpack.c.0.s8 %v2973
    %v2975 = vlaneseq
    %v2976 = vshrl.u32 %v2975, 7
    %v2977 = vsub.s32 %v2974, %v2976
    %v2978 = vrot.slane %v2971, %v2977
    %v2979 = vcombine.low %v2954, %v2962
    %v2980 = vcombine.high %v2954, %v2962
    %v2982 = vunpack.c.l.s4 1934713408
    %v2983 = vunpack.c.0.s8 %v2982
    %v2984 = vlaneseq
    %v2985 = vshrl.u32 %v2984, 7
    %v2986 = vsub.s32 %v2983, %v2985
    %v2987 = vrot.slane %v2979, %v2986
    %v2989 = vunpack.c.l.s4 1934713408
    %v2990 = vunpack.c.0.s8 %v2989
    %v2991 = vlaneseq
    %v2992 = vshrl.u32 %v2991, 7
    %v2993 = vsub.s32 %v2990, %v2992
    %v2994 = vrot.slane %v2980, %v2993
    %v2995 = vcombine.low %v2970, %v2978
    %v2996 = vcombine.high %v2970, %v2978
    %v2998 = vunpack.c.l.s4 1934713408
    %v2999 = vunpack.c.0.s8 %v2998
    %v3000 = vlaneseq
    %v3001 = vshrl.u32 %v3000, 7
    %v3002 = vsub.s32 %v2999, %v3001
    %v3003 = vrot.slane %v2995, %v3002
    %v3005 = vunpack.c.l.s4 1934713408
    %v3006 = vunpack.c.0.s8 %v3005
    %v3007 = vlaneseq
    %v3008 = vshrl.u32 %v3007, 7
    %v3009 = vsub.s32 %v3006, %v3008
    %v3010 = vrot.slane %v2996, %v3009
    %v3011 = vcombine.low %v2987, %v3003
    %v3012 = vcombine.high %v2987, %v3003
    %v3013 = vcombine.low %v2994, %v3010
    %v3014 = vcombine.high %v2994, %v3010
    %v3015 = vpack.c.bf16 %v3011, %v2943
    %v3016 = vpack.c.bf16 %v3012, %v2944
    %v3017 = vpack.c.bf16 %v3013, %v2945
    %v3018 = vpack.c.bf16 %v3014, %v2946
    %3021 = vrot.lane.b32.xlu0 %v2421, 120
    %v3022 = vpop.permute.xlu0 %3021
    %3023 = vrot.lane.b32.xlu0 %v2424, 120
    %v3024 = vpop.permute.xlu0 %3023
    %3027 = vrot.lane.b32.xlu0 %v2421, 112
    %v3028 = vpop.permute.xlu0 %3027
    %3029 = vrot.lane.b32.xlu0 %v2424, 112
    %v3030 = vpop.permute.xlu0 %3029
    %3033 = vrot.lane.b32.xlu0 %v2421, 104
    %v3034 = vpop.permute.xlu0 %3033
    %3035 = vrot.lane.b32.xlu0 %v2424, 104
    %v3036 = vpop.permute.xlu0 %3035
    %v3039 = vcombine.low %v2421, %v3028
    %v3040 = vcombine.high %v2421, %v3028
    %v3042 = vunpack.c.l.s4 1983009808
    %v3043 = vunpack.c.0.s8 %v3042
    %v3044 = vlaneseq
    %v3045 = vshrl.u32 %v3044, 7
    %v3046 = vsub.s32 %v3043, %v3045
    %v3047 = vrot.slane %v3039, %v3046
    %v3049 = vunpack.c.l.s4 1983009808
    %v3050 = vunpack.c.0.s8 %v3049
    %v3051 = vlaneseq
    %v3052 = vshrl.u32 %v3051, 7
    %v3053 = vsub.s32 %v3050, %v3052
    %v3054 = vrot.slane %v3040, %v3053
    %v3055 = vcombine.low %v3022, %v3034
    %v3056 = vcombine.high %v3022, %v3034
    %v3058 = vunpack.c.l.s4 1983009808
    %v3059 = vunpack.c.0.s8 %v3058
    %v3060 = vlaneseq
    %v3061 = vshrl.u32 %v3060, 7
    %v3062 = vsub.s32 %v3059, %v3061
    %v3063 = vrot.slane %v3055, %v3062
    %v3065 = vunpack.c.l.s4 1983009808
    %v3066 = vunpack.c.0.s8 %v3065
    %v3067 = vlaneseq
    %v3068 = vshrl.u32 %v3067, 7
    %v3069 = vsub.s32 %v3066, %v3068
    %v3070 = vrot.slane %v3056, %v3069
    %v3071 = vcombine.low %v3047, %v3063
    %v3072 = vcombine.high %v3047, %v3063
    %v3074 = vunpack.c.l.s4 1934713408
    %v3075 = vunpack.c.0.s8 %v3074
    %v3076 = vlaneseq
    %v3077 = vshrl.u32 %v3076, 7
    %v3078 = vsub.s32 %v3075, %v3077
    %v3079 = vrot.slane %v3071, %v3078
    %v3081 = vunpack.c.l.s4 1934713408
    %v3082 = vunpack.c.0.s8 %v3081
    %v3083 = vlaneseq
    %v3084 = vshrl.u32 %v3083, 7
    %v3085 = vsub.s32 %v3082, %v3084
    %v3086 = vrot.slane %v3072, %v3085
    %v3087 = vcombine.low %v3054, %v3070
    %v3088 = vcombine.high %v3054, %v3070
    %v3090 = vunpack.c.l.s4 1934713408
    %v3091 = vunpack.c.0.s8 %v3090
    %v3092 = vlaneseq
    %v3093 = vshrl.u32 %v3092, 7
    %v3094 = vsub.s32 %v3091, %v3093
    %v3095 = vrot.slane %v3087, %v3094
    %v3097 = vunpack.c.l.s4 1934713408
    %v3098 = vunpack.c.0.s8 %v3097
    %v3099 = vlaneseq
    %v3100 = vshrl.u32 %v3099, 7
    %v3101 = vsub.s32 %v3098, %v3100
    %v3102 = vrot.slane %v3088, %v3101
    %v3103 = vcombine.high %v3079, 0.0
    %v3104 = vcombine.high %v3086, 0.0
    %v3105 = vcombine.high %v3095, 0.0
    %v3106 = vcombine.high %v3102, 0.0
    %v3107 = vcombine.low %v2424, %v3030
    %v3108 = vcombine.high %v2424, %v3030
    %v3110 = vunpack.c.l.s4 1983009808
    %v3111 = vunpack.c.0.s8 %v3110
    %v3112 = vlaneseq
    %v3113 = vshrl.u32 %v3112, 7
    %v3114 = vsub.s32 %v3111, %v3113
    %v3115 = vrot.slane %v3107, %v3114
    %v3117 = vunpack.c.l.s4 1983009808
    %v3118 = vunpack.c.0.s8 %v3117
    %v3119 = vlaneseq
    %v3120 = vshrl.u32 %v3119, 7
    %v3121 = vsub.s32 %v3118, %v3120
    %v3122 = vrot.slane %v3108, %v3121
    %v3123 = vcombine.low %v3024, %v3036
    %v3124 = vcombine.high %v3024, %v3036
    %v3126 = vunpack.c.l.s4 1983009808
    %v3127 = vunpack.c.0.s8 %v3126
    %v3128 = vlaneseq
    %v3129 = vshrl.u32 %v3128, 7
    %v3130 = vsub.s32 %v3127, %v3129
    %v3131 = vrot.slane %v3123, %v3130
    %v3133 = vunpack.c.l.s4 1983009808
    %v3134 = vunpack.c.0.s8 %v3133
    %v3135 = vlaneseq
    %v3136 = vshrl.u32 %v3135, 7
    %v3137 = vsub.s32 %v3134, %v3136
    %v3138 = vrot.slane %v3124, %v3137
    %v3139 = vcombine.low %v3115, %v3131
    %v3140 = vcombine.high %v3115, %v3131
    %v3142 = vunpack.c.l.s4 1934713408
    %v3143 = vunpack.c.0.s8 %v3142
    %v3144 = vlaneseq
    %v3145 = vshrl.u32 %v3144, 7
    %v3146 = vsub.s32 %v3143, %v3145
    %v3147 = vrot.slane %v3139, %v3146
    %v3149 = vunpack.c.l.s4 1934713408
    %v3150 = vunpack.c.0.s8 %v3149
    %v3151 = vlaneseq
    %v3152 = vshrl.u32 %v3151, 7
    %v3153 = vsub.s32 %v3150, %v3152
    %v3154 = vrot.slane %v3140, %v3153
    %v3155 = vcombine.low %v3122, %v3138
    %v3156 = vcombine.high %v3122, %v3138
    %v3158 = vunpack.c.l.s4 1934713408
    %v3159 = vunpack.c.0.s8 %v3158
    %v3160 = vlaneseq
    %v3161 = vshrl.u32 %v3160, 7
    %v3162 = vsub.s32 %v3159, %v3161
    %v3163 = vrot.slane %v3155, %v3162
    %v3165 = vunpack.c.l.s4 1934713408
    %v3166 = vunpack.c.0.s8 %v3165
    %v3167 = vlaneseq
    %v3168 = vshrl.u32 %v3167, 7
    %v3169 = vsub.s32 %v3166, %v3168
    %v3170 = vrot.slane %v3156, %v3169
    %v3171 = vcombine.high %v3147, 0.0
    %v3172 = vcombine.high %v3154, 0.0
    %v3173 = vcombine.high %v3163, 0.0
    %v3174 = vcombine.high %v3170, 0.0
    %v3175 = vcombine.low %v3079, %v3086
    %v3177 = vunpack.c.l.s4 1983009808
    %v3178 = vunpack.c.0.s8 %v3177
    %v3179 = vlaneseq
    %v3180 = vshrl.u32 %v3179, 7
    %v3181 = vsub.s32 %v3178, %v3180
    %v3182 = vrot.slane %v3175, %v3181
    %v3183 = vcombine.low %v3103, %v3104
    %v3185 = vunpack.c.l.s4 1983009808
    %v3186 = vunpack.c.0.s8 %v3185
    %v3187 = vlaneseq
    %v3188 = vshrl.u32 %v3187, 7
    %v3189 = vsub.s32 %v3186, %v3188
    %v3190 = vrot.slane %v3183, %v3189
    %v3191 = vcombine.low %v3095, %v3102
    %v3193 = vunpack.c.l.s4 1983009808
    %v3194 = vunpack.c.0.s8 %v3193
    %v3195 = vlaneseq
    %v3196 = vshrl.u32 %v3195, 7
    %v3197 = vsub.s32 %v3194, %v3196
    %v3198 = vrot.slane %v3191, %v3197
    %v3199 = vcombine.low %v3105, %v3106
    %v3201 = vunpack.c.l.s4 1983009808
    %v3202 = vunpack.c.0.s8 %v3201
    %v3203 = vlaneseq
    %v3204 = vshrl.u32 %v3203, 7
    %v3205 = vsub.s32 %v3202, %v3204
    %v3206 = vrot.slane %v3199, %v3205
    %v3207 = vcombine.low %v3182, %v3190
    %v3208 = vcombine.high %v3182, %v3190
    %v3210 = vunpack.c.l.s4 1934713408
    %v3211 = vunpack.c.0.s8 %v3210
    %v3212 = vlaneseq
    %v3213 = vshrl.u32 %v3212, 7
    %v3214 = vsub.s32 %v3211, %v3213
    %v3215 = vrot.slane %v3207, %v3214
    %v3217 = vunpack.c.l.s4 1934713408
    %v3218 = vunpack.c.0.s8 %v3217
    %v3219 = vlaneseq
    %v3220 = vshrl.u32 %v3219, 7
    %v3221 = vsub.s32 %v3218, %v3220
    %v3222 = vrot.slane %v3208, %v3221
    %v3223 = vcombine.low %v3198, %v3206
    %v3224 = vcombine.high %v3198, %v3206
    %v3226 = vunpack.c.l.s4 1934713408
    %v3227 = vunpack.c.0.s8 %v3226
    %v3228 = vlaneseq
    %v3229 = vshrl.u32 %v3228, 7
    %v3230 = vsub.s32 %v3227, %v3229
    %v3231 = vrot.slane %v3223, %v3230
    %v3233 = vunpack.c.l.s4 1934713408
    %v3234 = vunpack.c.0.s8 %v3233
    %v3235 = vlaneseq
    %v3236 = vshrl.u32 %v3235, 7
    %v3237 = vsub.s32 %v3234, %v3236
    %v3238 = vrot.slane %v3224, %v3237
    %v3239 = vcombine.low %v3215, %v3231
    %v3240 = vcombine.high %v3215, %v3231
    %v3241 = vcombine.low %v3222, %v3238
    %v3242 = vcombine.high %v3222, %v3238
    %v3243 = vcombine.low %v3147, %v3154
    %v3245 = vunpack.c.l.s4 1983009808
    %v3246 = vunpack.c.0.s8 %v3245
    %v3247 = vlaneseq
    %v3248 = vshrl.u32 %v3247, 7
    %v3249 = vsub.s32 %v3246, %v3248
    %v3250 = vrot.slane %v3243, %v3249
    %v3251 = vcombine.low %v3171, %v3172
    %v3253 = vunpack.c.l.s4 1983009808
    %v3254 = vunpack.c.0.s8 %v3253
    %v3255 = vlaneseq
    %v3256 = vshrl.u32 %v3255, 7
    %v3257 = vsub.s32 %v3254, %v3256
    %v3258 = vrot.slane %v3251, %v3257
    %v3259 = vcombine.low %v3163, %v3170
    %v3261 = vunpack.c.l.s4 1983009808
    %v3262 = vunpack.c.0.s8 %v3261
    %v3263 = vlaneseq
    %v3264 = vshrl.u32 %v3263, 7
    %v3265 = vsub.s32 %v3262, %v3264
    %v3266 = vrot.slane %v3259, %v3265
    %v3267 = vcombine.low %v3173, %v3174
    %v3269 = vunpack.c.l.s4 1983009808
    %v3270 = vunpack.c.0.s8 %v3269
    %v3271 = vlaneseq
    %v3272 = vshrl.u32 %v3271, 7
    %v3273 = vsub.s32 %v3270, %v3272
    %v3274 = vrot.slane %v3267, %v3273
    %v3275 = vcombine.low %v3250, %v3258
    %v3276 = vcombine.high %v3250, %v3258
    %v3278 = vunpack.c.l.s4 1934713408
    %v3279 = vunpack.c.0.s8 %v3278
    %v3280 = vlaneseq
    %v3281 = vshrl.u32 %v3280, 7
    %v3282 = vsub.s32 %v3279, %v3281
    %v3283 = vrot.slane %v3275, %v3282
    %v3285 = vunpack.c.l.s4 1934713408
    %v3286 = vunpack.c.0.s8 %v3285
    %v3287 = vlaneseq
    %v3288 = vshrl.u32 %v3287, 7
    %v3289 = vsub.s32 %v3286, %v3288
    %v3290 = vrot.slane %v3276, %v3289
    %v3291 = vcombine.low %v3266, %v3274
    %v3292 = vcombine.high %v3266, %v3274
    %v3294 = vunpack.c.l.s4 1934713408
    %v3295 = vunpack.c.0.s8 %v3294
    %v3296 = vlaneseq
    %v3297 = vshrl.u32 %v3296, 7
    %v3298 = vsub.s32 %v3295, %v3297
    %v3299 = vrot.slane %v3291, %v3298
    %v3301 = vunpack.c.l.s4 1934713408
    %v3302 = vunpack.c.0.s8 %v3301
    %v3303 = vlaneseq
    %v3304 = vshrl.u32 %v3303, 7
    %v3305 = vsub.s32 %v3302, %v3304
    %v3306 = vrot.slane %v3292, %v3305
    %v3307 = vcombine.low %v3283, %v3299
    %v3308 = vcombine.high %v3283, %v3299
    %v3309 = vcombine.low %v3290, %v3306
    %v3310 = vcombine.high %v3290, %v3306
    %v3311 = vpack.c.bf16 %v3307, %v3239
    %v3312 = vpack.c.bf16 %v3308, %v3240
    %v3313 = vpack.c.bf16 %v3309, %v3241
    %v3314 = vpack.c.bf16 %v3310, %v3242
    %v3316 = vsel %vm1193, %v2719, 0
    %v3319 = vsel %vm1193, %v3015, 0
    %3321 = vmatprep.subr.bf16.mxu0 0
    %3322 = vmatpush1.bf16.xpose.msra.mxu0 0
    %3323 = vmatprep.subr.bf16.mxu0 0
    %3324 = vmatpush1.bf16.xpose.msra.mxu0 0
    %3325 = vmatprep.subr.bf16.mxu0 0
    %3326 = vmatpush1.bf16.xpose.msra.mxu0 0
    %3327 = vmatprep.subr.bf16.mxu0 0
    %3328 = vmatpush1.bf16.xpose.msra.mxu0 0
    %3329 = vmatprep.subr.bf16.mxu0 0
    %3330 = vmatpush1.bf16.xpose.msra.mxu0 0
    %3331 = vmatprep.subr.bf16.mxu0 0
    %3332 = vmatpush1.bf16.xpose.msra.mxu0 0
    %3333 = vmatprep.subr.bf16.mxu0 0
    %3334 = vmatpush1.bf16.xpose.msra.mxu0 0
    %3335 = vmatprep.subr.bf16.mxu0 0
    %3336 = vmatpush1.bf16.xpose.msra.mxu0 %v3319
    %3337 = vmatprep.subr.bf16.mxu0 0
    %3338 = vmatpush2.bf16.xpose.msra.mxu0 0
    %3339 = vmatprep.subr.bf16.mxu0 0
    %3340 = vmatpush2.bf16.xpose.msra.mxu0 0
    %3341 = vmatprep.subr.bf16.mxu0 0
    %3342 = vmatpush2.bf16.xpose.msra.mxu0 0
    %3343 = vmatprep.subr.bf16.mxu0 0
    %3344 = vmatpush2.bf16.xpose.msra.mxu0 0
    %3345 = vmatprep.subr.bf16.mxu0 0
    %3346 = vmatpush2.bf16.xpose.msra.mxu0 0
    %3347 = vmatprep.subr.bf16.mxu0 0
    %3348 = vmatpush2.bf16.xpose.msra.mxu0 0
    %3349 = vmatprep.subr.bf16.mxu0 0
    %3350 = vmatpush2.bf16.xpose.msra.mxu0 0
    %3351 = vmatprep.subr.bf16.mxu0 0
    %3352 = vmatpush2.bf16.xpose.msra.mxu0 0
    %3353 = vmatprep.mubr.bf16.mxu0 0
    %3354 = vmatmul.mubr.bf16.gmra.mxu0 %v3316
    %v3355 = vpop.f32.mrf.mxu0
    %v3356 = vadd.f32 %v104, %v3355
    %v3357 = vpop.f32.mrf.mxu0
    %v3358 = vpop.f32.mrf.mxu0
    %v3359 = vadd.f32 %v105, %v3358
    %v3360 = vpop.f32.mrf.mxu0
    %3361 = vdwg.mxu0
    %v3363 = vsel %vm1193, %v2720, 0
    %v3366 = vsel %vm1193, %v3016, 0
    %3368 = vmatprep.subr.bf16.mxu0 0
    %3369 = vmatpush1.bf16.xpose.msra.mxu0 0
    %3370 = vmatprep.subr.bf16.mxu0 0
    %3371 = vmatpush1.bf16.xpose.msra.mxu0 0
    %3372 = vmatprep.subr.bf16.mxu0 0
    %3373 = vmatpush1.bf16.xpose.msra.mxu0 0
    %3374 = vmatprep.subr.bf16.mxu0 0
    %3375 = vmatpush1.bf16.xpose.msra.mxu0 0
    %3376 = vmatprep.subr.bf16.mxu0 0
    %3377 = vmatpush1.bf16.xpose.msra.mxu0 0
    %3378 = vmatprep.subr.bf16.mxu0 0
    %3379 = vmatpush1.bf16.xpose.msra.mxu0 0
    %3380 = vmatprep.subr.bf16.mxu0 0
    %3381 = vmatpush1.bf16.xpose.msra.mxu0 0
    %3382 = vmatprep.subr.bf16.mxu0 0
    %3383 = vmatpush1.bf16.xpose.msra.mxu0 %v3366
    %3384 = vmatprep.subr.bf16.mxu0 0
    %3385 = vmatpush2.bf16.xpose.msra.mxu0 0
    %3386 = vmatprep.subr.bf16.mxu0 0
    %3387 = vmatpush2.bf16.xpose.msra.mxu0 0
    %3388 = vmatprep.subr.bf16.mxu0 0
    %3389 = vmatpush2.bf16.xpose.msra.mxu0 0
    %3390 = vmatprep.subr.bf16.mxu0 0
    %3391 = vmatpush2.bf16.xpose.msra.mxu0 0
    %3392 = vmatprep.subr.bf16.mxu0 0
    %3393 = vmatpush2.bf16.xpose.msra.mxu0 0
    %3394 = vmatprep.subr.bf16.mxu0 0
    %3395 = vmatpush2.bf16.xpose.msra.mxu0 0
    %3396 = vmatprep.subr.bf16.mxu0 0
    %3397 = vmatpush2.bf16.xpose.msra.mxu0 0
    %3398 = vmatprep.subr.bf16.mxu0 0
    %3399 = vmatpush2.bf16.xpose.msra.mxu0 0
    %3400 = vmatprep.mubr.bf16.mxu0 0
    %3401 = vmatmul.mubr.bf16.gmra.mxu0 %v3363
    %v3402 = vpop.f32.mrf.mxu0
    %v3403 = vadd.f32 %v104, %v3402
    %v3404 = vpop.f32.mrf.mxu0
    %v3405 = vpop.f32.mrf.mxu0
    %v3406 = vadd.f32 %v105, %v3405
    %v3407 = vpop.f32.mrf.mxu0
    %3408 = vdwg.mxu0
    %v3410 = vsel %vm1193, %v2721, 0
    %v3413 = vsel %vm1193, %v3017, 0
    %3415 = vmatprep.subr.bf16.mxu0 0
    %3416 = vmatpush1.bf16.xpose.msra.mxu0 0
    %3417 = vmatprep.subr.bf16.mxu0 0
    %3418 = vmatpush1.bf16.xpose.msra.mxu0 0
    %3419 = vmatprep.subr.bf16.mxu0 0
    %3420 = vmatpush1.bf16.xpose.msra.mxu0 0
    %3421 = vmatprep.subr.bf16.mxu0 0
    %3422 = vmatpush1.bf16.xpose.msra.mxu0 0
    %3423 = vmatprep.subr.bf16.mxu0 0
    %3424 = vmatpush1.bf16.xpose.msra.mxu0 0
    %3425 = vmatprep.subr.bf16.mxu0 0
    %3426 = vmatpush1.bf16.xpose.msra.mxu0 0
    %3427 = vmatprep.subr.bf16.mxu0 0
    %3428 = vmatpush1.bf16.xpose.msra.mxu0 0
    %3429 = vmatprep.subr.bf16.mxu0 0
    %3430 = vmatpush1.bf16.xpose.msra.mxu0 %v3413
    %3431 = vmatprep.subr.bf16.mxu0 0
    %3432 = vmatpush2.bf16.xpose.msra.mxu0 0
    %3433 = vmatprep.subr.bf16.mxu0 0
    %3434 = vmatpush2.bf16.xpose.msra.mxu0 0
    %3435 = vmatprep.subr.bf16.mxu0 0
    %3436 = vmatpush2.bf16.xpose.msra.mxu0 0
    %3437 = vmatprep.subr.bf16.mxu0 0
    %3438 = vmatpush2.bf16.xpose.msra.mxu0 0
    %3439 = vmatprep.subr.bf16.mxu0 0
    %3440 = vmatpush2.bf16.xpose.msra.mxu0 0
    %3441 = vmatprep.subr.bf16.mxu0 0
    %3442 = vmatpush2.bf16.xpose.msra.mxu0 0
    %3443 = vmatprep.subr.bf16.mxu0 0
    %3444 = vmatpush2.bf16.xpose.msra.mxu0 0
    %3445 = vmatprep.subr.bf16.mxu0 0
    %3446 = vmatpush2.bf16.xpose.msra.mxu0 0
    %3447 = vmatprep.mubr.bf16.mxu0 0
    %3448 = vmatmul.mubr.bf16.gmra.mxu0 %v3410
    %v3449 = vpop.f32.mrf.mxu0
    %v3450 = vadd.f32 %v104, %v3449
    %v3451 = vpop.f32.mrf.mxu0
    %v3452 = vpop.f32.mrf.mxu0
    %v3453 = vadd.f32 %v105, %v3452
    %v3454 = vpop.f32.mrf.mxu0
    %3455 = vdwg.mxu0
    %v3457 = vsel %vm1193, %v2722, 0
    %v3460 = vsel %vm1193, %v3018, 0
    %3462 = vmatprep.subr.bf16.mxu0 0
    %3463 = vmatpush1.bf16.xpose.msra.mxu0 0
    %3464 = vmatprep.subr.bf16.mxu0 0
    %3465 = vmatpush1.bf16.xpose.msra.mxu0 0
    %3466 = vmatprep.subr.bf16.mxu0 0
    %3467 = vmatpush1.bf16.xpose.msra.mxu0 0
    %3468 = vmatprep.subr.bf16.mxu0 0
    %3469 = vmatpush1.bf16.xpose.msra.mxu0 0
    %3470 = vmatprep.subr.bf16.mxu0 0
    %3471 = vmatpush1.bf16.xpose.msra.mxu0 0
    %3472 = vmatprep.subr.bf16.mxu0 0
    %3473 = vmatpush1.bf16.xpose.msra.mxu0 0
    %3474 = vmatprep.subr.bf16.mxu0 0
    %3475 = vmatpush1.bf16.xpose.msra.mxu0 0
    %3476 = vmatprep.subr.bf16.mxu0 0
    %3477 = vmatpush1.bf16.xpose.msra.mxu0 %v3460
    %3478 = vmatprep.subr.bf16.mxu0 0
    %3479 = vmatpush2.bf16.xpose.msra.mxu0 0
    %3480 = vmatprep.subr.bf16.mxu0 0
    %3481 = vmatpush2.bf16.xpose.msra.mxu0 0
    %3482 = vmatprep.subr.bf16.mxu0 0
    %3483 = vmatpush2.bf16.xpose.msra.mxu0 0
    %3484 = vmatprep.subr.bf16.mxu0 0
    %3485 = vmatpush2.bf16.xpose.msra.mxu0 0
    %3486 = vmatprep.subr.bf16.mxu0 0
    %3487 = vmatpush2.bf16.xpose.msra.mxu0 0
    %3488 = vmatprep.subr.bf16.mxu0 0
    %3489 = vmatpush2.bf16.xpose.msra.mxu0 0
    %3490 = vmatprep.subr.bf16.mxu0 0
    %3491 = vmatpush2.bf16.xpose.msra.mxu0 0
    %3492 = vmatprep.subr.bf16.mxu0 0
    %3493 = vmatpush2.bf16.xpose.msra.mxu0 0
    %3494 = vmatprep.mubr.bf16.mxu0 0
    %3495 = vmatmul.mubr.bf16.gmra.mxu0 %v3457
    %v3496 = vpop.f32.mrf.mxu0
    %v3497 = vadd.f32 %v104, %v3496
    %v3498 = vpop.f32.mrf.mxu0
    %v3499 = vpop.f32.mrf.mxu0
    %v3500 = vadd.f32 %v105, %v3499
    %v3501 = vpop.f32.mrf.mxu0
    %3502 = vdwg.mxu0
    %v3503 = vsel %vm1382, %v3356, -inf
    %3504 = vmax.xlane.f32.xlu0 %v3503
    %v3505 = vpop.xlane.xlu0 %3504
    %v3506 = vsel %vm1382, %v3359, -inf
    %3507 = vmax.xlane.f32.xlu0 %v3506
    %v3508 = vpop.xlane.xlu0 %3507
    %v3509 = vsel %vm1382, %v3403, -inf
    %3510 = vmax.xlane.f32.xlu0 %v3509
    %v3511 = vpop.xlane.xlu0 %3510
    %v3512 = vsel %vm1382, %v3406, -inf
    %3513 = vmax.xlane.f32.xlu0 %v3512
    %v3514 = vpop.xlane.xlu0 %3513
    %v3515 = vsel %vm1382, %v3450, -inf
    %3516 = vmax.xlane.f32.xlu0 %v3515
    %v3517 = vpop.xlane.xlu0 %3516
    %v3518 = vsel %vm1382, %v3453, -inf
    %3519 = vmax.xlane.f32.xlu0 %v3518
    %v3520 = vpop.xlane.xlu0 %3519
    %v3521 = vsel %vm1382, %v3497, -inf
    %3522 = vmax.xlane.f32.xlu0 %v3521
    %v3523 = vpop.xlane.xlu0 %3522
    %v3524 = vsel %vm1382, %v3500, -inf
    %3525 = vmax.xlane.f32.xlu0 %v3524
    %v3526 = vpop.xlane.xlu0 %3525
    %v3527 = vsub.f32 %v3356, %v3505
    %v3528 = vsub.f32 %v3359, %v3508
    %v3529 = vsub.f32 %v3403, %v3511
    %v3530 = vsub.f32 %v3406, %v3514
    %v3531 = vsub.f32 %v3450, %v3517
    %v3532 = vsub.f32 %v3453, %v3520
    %v3533 = vsub.f32 %v3497, %v3523
    %v3534 = vsub.f32 %v3500, %v3526
    %v3535 = vmul.f32 %v3527, 1.442695
    %v3536 = vpow.pop %v3535
    %v3537 = vmul.f32 %v3528, 1.442695
    %v3538 = vpow.pop %v3537
    %v3539 = vmul.f32 %v3529, 1.442695
    %v3540 = vpow.pop %v3539
    %v3541 = vmul.f32 %v3530, 1.442695
    %v3542 = vpow.pop %v3541
    %v3543 = vmul.f32 %v3531, 1.442695
    %v3544 = vpow.pop %v3543
    %v3545 = vmul.f32 %v3532, 1.442695
    %v3546 = vpow.pop %v3545
    %v3547 = vmul.f32 %v3533, 1.442695
    %v3548 = vpow.pop %v3547
    %v3549 = vmul.f32 %v3534, 1.442695
    %v3550 = vpow.pop %v3549
    %v3551 = vsel %vm1382, %v3536, 0.0
    %3552 = vadd.xlane.f32.xlu0 %v3551
    %v3553 = vpop.xlane.xlu0 %3552
    %v3554 = vsel %vm1382, %v3538, 0.0
    %3555 = vadd.xlane.f32.xlu0 %v3554
    %v3556 = vpop.xlane.xlu0 %3555
    %v3557 = vsel %vm1382, %v3540, 0.0
    %3558 = vadd.xlane.f32.xlu0 %v3557
    %v3559 = vpop.xlane.xlu0 %3558
    %v3560 = vsel %vm1382, %v3542, 0.0
    %3561 = vadd.xlane.f32.xlu0 %v3560
    %v3562 = vpop.xlane.xlu0 %3561
    %v3563 = vsel %vm1382, %v3544, 0.0
    %3564 = vadd.xlane.f32.xlu0 %v3563
    %v3565 = vpop.xlane.xlu0 %3564
    %v3566 = vsel %vm1382, %v3546, 0.0
    %3567 = vadd.xlane.f32.xlu0 %v3566
    %v3568 = vpop.xlane.xlu0 %3567
    %v3569 = vsel %vm1382, %v3548, 0.0
    %3570 = vadd.xlane.f32.xlu0 %v3569
    %v3571 = vpop.xlane.xlu0 %3570
    %v3572 = vsel %vm1382, %v3550, 0.0
    %3573 = vadd.xlane.f32.xlu0 %v3572
    %v3574 = vpop.xlane.xlu0 %3573
    %v3575 = vrcp.pop %v3553
    %v3576 = vmul.f32 %v3536, %v3575
    %v3577 = vrcp.pop %v3556
    %v3578 = vmul.f32 %v3538, %v3577
    %v3579 = vrcp.pop %v3559
    %v3580 = vmul.f32 %v3540, %v3579
    %v3581 = vrcp.pop %v3562
    %v3582 = vmul.f32 %v3542, %v3581
    %v3583 = vrcp.pop %v3565
    %v3584 = vmul.f32 %v3544, %v3583
    %v3585 = vrcp.pop %v3568
    %v3586 = vmul.f32 %v3546, %v3585
    %v3587 = vrcp.pop %v3571
    %v3588 = vmul.f32 %v3548, %v3587
    %v3589 = vrcp.pop %v3574
    %v3590 = vmul.f32 %v3550, %v3589
    %v3591 = vpack.c.bf16 %v3578, %v3576
    %v3592 = vpack.c.bf16 %v3582, %v3580
    %v3593 = vpack.c.bf16 %v3586, %v3584
    %v3594 = vpack.c.bf16 %v3590, %v3588
    %v3596 = vsel %vm1382, %v3591, 0
    %3598 = vmatprep.subr.bf16.mxu0 0
    %3599 = vmatpush1.bf16.msra.mxu0 0
    %3600 = vmatprep.subr.bf16.mxu0 0
    %3601 = vmatpush1.bf16.msra.mxu0 0
    %3602 = vmatprep.subr.bf16.mxu0 0
    %3603 = vmatpush1.bf16.msra.mxu0 0
    %3604 = vmatprep.subr.bf16.mxu0 0
    %3605 = vmatpush1.bf16.msra.mxu0 0
    %3606 = vmatprep.subr.bf16.mxu0 0
    %3607 = vmatpush1.bf16.msra.mxu0 0
    %3608 = vmatprep.subr.bf16.mxu0 0
    %3609 = vmatpush1.bf16.msra.mxu0 0
    %3610 = vmatprep.subr.bf16.mxu0 0
    %3611 = vmatpush1.bf16.msra.mxu0 0
    %3612 = vmatprep.subr.bf16.mxu0 0
    %3613 = vmatpush1.bf16.msra.mxu0 %v3311
    %3614 = vmatprep.subr.bf16.mxu0 0
    %3615 = vmatpush2.bf16.msra.mxu0 0
    %3616 = vmatprep.subr.bf16.mxu0 0
    %3617 = vmatpush2.bf16.msra.mxu0 0
    %3618 = vmatprep.subr.bf16.mxu0 0
    %3619 = vmatpush2.bf16.msra.mxu0 0
    %3620 = vmatprep.subr.bf16.mxu0 0
    %3621 = vmatpush2.bf16.msra.mxu0 0
    %3622 = vmatprep.subr.bf16.mxu0 0
    %3623 = vmatpush2.bf16.msra.mxu0 0
    %3624 = vmatprep.subr.bf16.mxu0 0
    %3625 = vmatpush2.bf16.msra.mxu0 0
    %3626 = vmatprep.subr.bf16.mxu0 0
    %3627 = vmatpush2.bf16.msra.mxu0 0
    %3628 = vmatprep.subr.bf16.mxu0 0
    %3629 = vmatpush2.bf16.msra.mxu0 0
    %3630 = vmatprep.mubr.bf16.mxu0 0
    %3631 = vmatmul.mubr.bf16.gmra.mxu0 %v3596
    %v3632 = vpop.f32.mrf.mxu0
    %v3633 = vadd.f32 0.0, %v3632
    %v3634 = vpop.f32.mrf.mxu0
    %v3635 = vpop.f32.mrf.mxu0
    %v3636 = vadd.f32 0.0, %v3635
    %v3637 = vpop.f32.mrf.mxu0
    %3638 = vdwg.mxu0
    %v3640 = vsel %vm1382, %v3592, 0
    %3642 = vmatprep.subr.bf16.mxu0 0
    %3643 = vmatpush1.bf16.msra.mxu0 0
    %3644 = vmatprep.subr.bf16.mxu0 0
    %3645 = vmatpush1.bf16.msra.mxu0 0
    %3646 = vmatprep.subr.bf16.mxu0 0
    %3647 = vmatpush1.bf16.msra.mxu0 0
    %3648 = vmatprep.subr.bf16.mxu0 0
    %3649 = vmatpush1.bf16.msra.mxu0 0
    %3650 = vmatprep.subr.bf16.mxu0 0
    %3651 = vmatpush1.bf16.msra.mxu0 0
    %3652 = vmatprep.subr.bf16.mxu0 0
    %3653 = vmatpush1.bf16.msra.mxu0 0
    %3654 = vmatprep.subr.bf16.mxu0 0
    %3655 = vmatpush1.bf16.msra.mxu0 0
    %3656 = vmatprep.subr.bf16.mxu0 0
    %3657 = vmatpush1.bf16.msra.mxu0 %v3312
    %3658 = vmatprep.subr.bf16.mxu0 0
    %3659 = vmatpush2.bf16.msra.mxu0 0
    %3660 = vmatprep.subr.bf16.mxu0 0
    %3661 = vmatpush2.bf16.msra.mxu0 0
    %3662 = vmatprep.subr.bf16.mxu0 0
    %3663 = vmatpush2.bf16.msra.mxu0 0
    %3664 = vmatprep.subr.bf16.mxu0 0
    %3665 = vmatpush2.bf16.msra.mxu0 0
    %3666 = vmatprep.subr.bf16.mxu0 0
    %3667 = vmatpush2.bf16.msra.mxu0 0
    %3668 = vmatprep.subr.bf16.mxu0 0
    %3669 = vmatpush2.bf16.msra.mxu0 0
    %3670 = vmatprep.subr.bf16.mxu0 0
    %3671 = vmatpush2.bf16.msra.mxu0 0
    %3672 = vmatprep.subr.bf16.mxu0 0
    %3673 = vmatpush2.bf16.msra.mxu0 0
    %3674 = vmatprep.mubr.bf16.mxu0 0
    %3675 = vmatmul.mubr.bf16.gmra.mxu0 %v3640
    %v3676 = vpop.f32.mrf.mxu0
    %v3677 = vadd.f32 0.0, %v3676
    %v3678 = vpop.f32.mrf.mxu0
    %v3679 = vpop.f32.mrf.mxu0
    %v3680 = vadd.f32 0.0, %v3679
    %v3681 = vpop.f32.mrf.mxu0
    %3682 = vdwg.mxu0
    %v3684 = vsel %vm1382, %v3593, 0
    %3686 = vmatprep.subr.bf16.mxu0 0
    %3687 = vmatpush1.bf16.msra.mxu0 0
    %3688 = vmatprep.subr.bf16.mxu0 0
    %3689 = vmatpush1.bf16.msra.mxu0 0
    %3690 = vmatprep.subr.bf16.mxu0 0
    %3691 = vmatpush1.bf16.msra.mxu0 0
    %3692 = vmatprep.subr.bf16.mxu0 0
    %3693 = vmatpush1.bf16.msra.mxu0 0
    %3694 = vmatprep.subr.bf16.mxu0 0
    %3695 = vmatpush1.bf16.msra.mxu0 0
    %3696 = vmatprep.subr.bf16.mxu0 0
    %3697 = vmatpush1.bf16.msra.mxu0 0
    %3698 = vmatprep.subr.bf16.mxu0 0
    %3699 = vmatpush1.bf16.msra.mxu0 0
    %3700 = vmatprep.subr.bf16.mxu0 0
    %3701 = vmatpush1.bf16.msra.mxu0 %v3313
    %3702 = vmatprep.subr.bf16.mxu0 0
    %3703 = vmatpush2.bf16.msra.mxu0 0
    %3704 = vmatprep.subr.bf16.mxu0 0
    %3705 = vmatpush2.bf16.msra.mxu0 0
    %3706 = vmatprep.subr.bf16.mxu0 0
    %3707 = vmatpush2.bf16.msra.mxu0 0
    %3708 = vmatprep.subr.bf16.mxu0 0
    %3709 = vmatpush2.bf16.msra.mxu0 0
    %3710 = vmatprep.subr.bf16.mxu0 0
    %3711 = vmatpush2.bf16.msra.mxu0 0
    %3712 = vmatprep.subr.bf16.mxu0 0
    %3713 = vmatpush2.bf16.msra.mxu0 0
    %3714 = vmatprep.subr.bf16.mxu0 0
    %3715 = vmatpush2.bf16.msra.mxu0 0
    %3716 = vmatprep.subr.bf16.mxu0 0
    %3717 = vmatpush2.bf16.msra.mxu0 0
    %3718 = vmatprep.mubr.bf16.mxu0 0
    %3719 = vmatmul.mubr.bf16.gmra.mxu0 %v3684
    %v3720 = vpop.f32.mrf.mxu0
    %v3721 = vadd.f32 0.0, %v3720
    %v3722 = vpop.f32.mrf.mxu0
    %v3723 = vpop.f32.mrf.mxu0
    %v3724 = vadd.f32 0.0, %v3723
    %v3725 = vpop.f32.mrf.mxu0
    %3726 = vdwg.mxu0
    %v3728 = vsel %vm1382, %v3594, 0
    %3730 = vmatprep.subr.bf16.mxu0 0
    %3731 = vmatpush1.bf16.msra.mxu0 0
    %3732 = vmatprep.subr.bf16.mxu0 0
    %3733 = vmatpush1.bf16.msra.mxu0 0
    %3734 = vmatprep.subr.bf16.mxu0 0
    %3735 = vmatpush1.bf16.msra.mxu0 0
    %3736 = vmatprep.subr.bf16.mxu0 0
    %3737 = vmatpush1.bf16.msra.mxu0 0
    %3738 = vmatprep.subr.bf16.mxu0 0
    %3739 = vmatpush1.bf16.msra.mxu0 0
    %3740 = vmatprep.subr.bf16.mxu0 0
    %3741 = vmatpush1.bf16.msra.mxu0 0
    %3742 = vmatprep.subr.bf16.mxu0 0
    %3743 = vmatpush1.bf16.msra.mxu0 0
    %3744 = vmatprep.subr.bf16.mxu0 0
    %3745 = vmatpush1.bf16.msra.mxu0 %v3314
    %3746 = vmatprep.subr.bf16.mxu0 0
    %3747 = vmatpush2.bf16.msra.mxu0 0
    %3748 = vmatprep.subr.bf16.mxu0 0
    %3749 = vmatpush2.bf16.msra.mxu0 0
    %3750 = vmatprep.subr.bf16.mxu0 0
    %3751 = vmatpush2.bf16.msra.mxu0 0
    %3752 = vmatprep.subr.bf16.mxu0 0
    %3753 = vmatpush2.bf16.msra.mxu0 0
    %3754 = vmatprep.subr.bf16.mxu0 0
    %3755 = vmatpush2.bf16.msra.mxu0 0
    %3756 = vmatprep.subr.bf16.mxu0 0
    %3757 = vmatpush2.bf16.msra.mxu0 0
    %3758 = vmatprep.subr.bf16.mxu0 0
    %3759 = vmatpush2.bf16.msra.mxu0 0
    %3760 = vmatprep.subr.bf16.mxu0 0
    %3761 = vmatpush2.bf16.msra.mxu0 0
    %3762 = vmatprep.mubr.bf16.mxu0 0
    %3763 = vmatmul.mubr.bf16.gmra.mxu0 %v3728
    %v3764 = vpop.f32.mrf.mxu0
    %v3765 = vadd.f32 0.0, %v3764
    %v3766 = vpop.f32.mrf.mxu0
    %v3767 = vpop.f32.mrf.mxu0
    %v3768 = vadd.f32 0.0, %v3767
    %v3769 = vpop.f32.mrf.mxu0
    %3770 = vdwg.mxu0
    %v3771 = vcombine.low %v3633, %v3721
    %v3772 = vcombine.high %v3633, %v3721
    %v3774 = vunpack.c.l.s4 1983009808
    %v3775 = vunpack.c.0.s8 %v3774
    %v3776 = vlaneseq
    %v3777 = vshrl.u32 %v3776, 7
    %v3778 = vsub.s32 %v3775, %v3777
    %v3779 = vrot.slane %v3771, %v3778
    %v3781 = vunpack.c.l.s4 1983009808
    %v3782 = vunpack.c.0.s8 %v3781
    %v3783 = vlaneseq
    %v3784 = vshrl.u32 %v3783, 7
    %v3785 = vsub.s32 %v3782, %v3784
    %v3786 = vrot.slane %v3772, %v3785
    %v3787 = vcombine.low %v3677, %v3765
    %v3788 = vcombine.high %v3677, %v3765
    %v3790 = vunpack.c.l.s4 1983009808
    %v3791 = vunpack.c.0.s8 %v3790
    %v3792 = vlaneseq
    %v3793 = vshrl.u32 %v3792, 7
    %v3794 = vsub.s32 %v3791, %v3793
    %v3795 = vrot.slane %v3787, %v3794
    %v3797 = vunpack.c.l.s4 1983009808
    %v3798 = vunpack.c.0.s8 %v3797
    %v3799 = vlaneseq
    %v3800 = vshrl.u32 %v3799, 7
    %v3801 = vsub.s32 %v3798, %v3800
    %v3802 = vrot.slane %v3788, %v3801
    %v3803 = vcombine.low %v3779, %v3795
    %v3804 = vcombine.high %v3779, %v3795
    %v3806 = vunpack.c.l.s4 1934713408
    %v3807 = vunpack.c.0.s8 %v3806
    %v3808 = vlaneseq
    %v3809 = vshrl.u32 %v3808, 7
    %v3810 = vsub.s32 %v3807, %v3809
    %v3811 = vrot.slane %v3803, %v3810
    %v3813 = vunpack.c.l.s4 1934713408
    %v3814 = vunpack.c.0.s8 %v3813
    %v3815 = vlaneseq
    %v3816 = vshrl.u32 %v3815, 7
    %v3817 = vsub.s32 %v3814, %v3816
    %v3818 = vrot.slane %v3804, %v3817
    %v3819 = vcombine.low %v3786, %v3802
    %v3820 = vcombine.high %v3786, %v3802
    %v3822 = vunpack.c.l.s4 1934713408
    %v3823 = vunpack.c.0.s8 %v3822
    %v3824 = vlaneseq
    %v3825 = vshrl.u32 %v3824, 7
    %v3826 = vsub.s32 %v3823, %v3825
    %v3827 = vrot.slane %v3819, %v3826
    %v3829 = vunpack.c.l.s4 1934713408
    %v3830 = vunpack.c.0.s8 %v3829
    %v3831 = vlaneseq
    %v3832 = vshrl.u32 %v3831, 7
    %v3833 = vsub.s32 %v3830, %v3832
    %v3834 = vrot.slane %v3820, %v3833
    %v3835 = vcombine.high %v3811, 0.0
    %v3836 = vcombine.high %v3818, 0.0
    %v3837 = vcombine.high %v3827, 0.0
    %v3838 = vcombine.high %v3834, 0.0
    %v3839 = vcombine.low %v3636, %v3724
    %v3840 = vcombine.high %v3636, %v3724
    %v3842 = vunpack.c.l.s4 1983009808
    %v3843 = vunpack.c.0.s8 %v3842
    %v3844 = vlaneseq
    %v3845 = vshrl.u32 %v3844, 7
    %v3846 = vsub.s32 %v3843, %v3845
    %v3847 = vrot.slane %v3839, %v3846
    %v3849 = vunpack.c.l.s4 1983009808
    %v3850 = vunpack.c.0.s8 %v3849
    %v3851 = vlaneseq
    %v3852 = vshrl.u32 %v3851, 7
    %v3853 = vsub.s32 %v3850, %v3852
    %v3854 = vrot.slane %v3840, %v3853
    %v3855 = vcombine.low %v3680, %v3768
    %v3856 = vcombine.high %v3680, %v3768
    %v3858 = vunpack.c.l.s4 1983009808
    %v3859 = vunpack.c.0.s8 %v3858
    %v3860 = vlaneseq
    %v3861 = vshrl.u32 %v3860, 7
    %v3862 = vsub.s32 %v3859, %v3861
    %v3863 = vrot.slane %v3855, %v3862
    %v3865 = vunpack.c.l.s4 1983009808
    %v3866 = vunpack.c.0.s8 %v3865
    %v3867 = vlaneseq
    %v3868 = vshrl.u32 %v3867, 7
    %v3869 = vsub.s32 %v3866, %v3868
    %v3870 = vrot.slane %v3856, %v3869
    %v3871 = vcombine.low %v3847, %v3863
    %v3872 = vcombine.high %v3847, %v3863
    %v3874 = vunpack.c.l.s4 1934713408
    %v3875 = vunpack.c.0.s8 %v3874
    %v3876 = vlaneseq
    %v3877 = vshrl.u32 %v3876, 7
    %v3878 = vsub.s32 %v3875, %v3877
    %v3879 = vrot.slane %v3871, %v3878
    %v3881 = vunpack.c.l.s4 1934713408
    %v3882 = vunpack.c.0.s8 %v3881
    %v3883 = vlaneseq
    %v3884 = vshrl.u32 %v3883, 7
    %v3885 = vsub.s32 %v3882, %v3884
    %v3886 = vrot.slane %v3872, %v3885
    %v3887 = vcombine.low %v3854, %v3870
    %v3888 = vcombine.high %v3854, %v3870
    %v3890 = vunpack.c.l.s4 1934713408
    %v3891 = vunpack.c.0.s8 %v3890
    %v3892 = vlaneseq
    %v3893 = vshrl.u32 %v3892, 7
    %v3894 = vsub.s32 %v3891, %v3893
    %v3895 = vrot.slane %v3887, %v3894
    %v3897 = vunpack.c.l.s4 1934713408
    %v3898 = vunpack.c.0.s8 %v3897
    %v3899 = vlaneseq
    %v3900 = vshrl.u32 %v3899, 7
    %v3901 = vsub.s32 %v3898, %v3900
    %v3902 = vrot.slane %v3888, %v3901
    %v3903 = vcombine.high %v3879, 0.0
    %v3904 = vcombine.high %v3886, 0.0
    %v3905 = vcombine.high %v3895, 0.0
    %v3906 = vcombine.high %v3902, 0.0
    %v3907 = vcombine.low %v3811, %v3818
    %v3909 = vunpack.c.l.s4 1983009808
    %v3910 = vunpack.c.0.s8 %v3909
    %v3911 = vlaneseq
    %v3912 = vshrl.u32 %v3911, 7
    %v3913 = vsub.s32 %v3910, %v3912
    %v3914 = vrot.slane %v3907, %v3913
    %v3915 = vcombine.low %v3835, %v3836
    %v3917 = vunpack.c.l.s4 1983009808
    %v3918 = vunpack.c.0.s8 %v3917
    %v3919 = vlaneseq
    %v3920 = vshrl.u32 %v3919, 7
    %v3921 = vsub.s32 %v3918, %v3920
    %v3922 = vrot.slane %v3915, %v3921
    %v3923 = vcombine.low %v3827, %v3834
    %v3925 = vunpack.c.l.s4 1983009808
    %v3926 = vunpack.c.0.s8 %v3925
    %v3927 = vlaneseq
    %v3928 = vshrl.u32 %v3927, 7
    %v3929 = vsub.s32 %v3926, %v3928
    %v3930 = vrot.slane %v3923, %v3929
    %v3931 = vcombine.low %v3837, %v3838
    %v3933 = vunpack.c.l.s4 1983009808
    %v3934 = vunpack.c.0.s8 %v3933
    %v3935 = vlaneseq
    %v3936 = vshrl.u32 %v3935, 7
    %v3937 = vsub.s32 %v3934, %v3936
    %v3938 = vrot.slane %v3931, %v3937
    %v3939 = vcombine.low %v3914, %v3922
    %v3940 = vcombine.high %v3914, %v3922
    %v3942 = vunpack.c.l.s4 1934713408
    %v3943 = vunpack.c.0.s8 %v3942
    %v3944 = vlaneseq
    %v3945 = vshrl.u32 %v3944, 7
    %v3946 = vsub.s32 %v3943, %v3945
    %v3947 = vrot.slane %v3939, %v3946
    %v3949 = vunpack.c.l.s4 1934713408
    %v3950 = vunpack.c.0.s8 %v3949
    %v3951 = vlaneseq
    %v3952 = vshrl.u32 %v3951, 7
    %v3953 = vsub.s32 %v3950, %v3952
    %v3954 = vrot.slane %v3940, %v3953
    %v3955 = vcombine.low %v3930, %v3938
    %v3956 = vcombine.high %v3930, %v3938
    %v3958 = vunpack.c.l.s4 1934713408
    %v3959 = vunpack.c.0.s8 %v3958
    %v3960 = vlaneseq
    %v3961 = vshrl.u32 %v3960, 7
    %v3962 = vsub.s32 %v3959, %v3961
    %v3963 = vrot.slane %v3955, %v3962
    %v3965 = vunpack.c.l.s4 1934713408
    %v3966 = vunpack.c.0.s8 %v3965
    %v3967 = vlaneseq
    %v3968 = vshrl.u32 %v3967, 7
    %v3969 = vsub.s32 %v3966, %v3968
    %v3970 = vrot.slane %v3956, %v3969
    %v3971 = vcombine.low %v3947, %v3963
    %v3972 = vcombine.high %v3947, %v3963
    %v3973 = vcombine.low %v3954, %v3970
    %v3974 = vcombine.high %v3954, %v3970
    %v3975 = vcombine.low %v3879, %v3886
    %v3977 = vunpack.c.l.s4 1983009808
    %v3978 = vunpack.c.0.s8 %v3977
    %v3979 = vlaneseq
    %v3980 = vshrl.u32 %v3979, 7
    %v3981 = vsub.s32 %v3978, %v3980
    %v3982 = vrot.slane %v3975, %v3981
    %v3983 = vcombine.low %v3903, %v3904
    %v3985 = vunpack.c.l.s4 1983009808
    %v3986 = vunpack.c.0.s8 %v3985
    %v3987 = vlaneseq
    %v3988 = vshrl.u32 %v3987, 7
    %v3989 = vsub.s32 %v3986, %v3988
    %v3990 = vrot.slane %v3983, %v3989
    %v3991 = vcombine.low %v3895, %v3902
    %v3993 = vunpack.c.l.s4 1983009808
    %v3994 = vunpack.c.0.s8 %v3993
    %v3995 = vlaneseq
    %v3996 = vshrl.u32 %v3995, 7
    %v3997 = vsub.s32 %v3994, %v3996
    %v3998 = vrot.slane %v3991, %v3997
    %v3999 = vcombine.low %v3905, %v3906
    %v4001 = vunpack.c.l.s4 1983009808
    %v4002 = vunpack.c.0.s8 %v4001
    %v4003 = vlaneseq
    %v4004 = vshrl.u32 %v4003, 7
    %v4005 = vsub.s32 %v4002, %v4004
    %v4006 = vrot.slane %v3999, %v4005
    %v4007 = vcombine.low %v3982, %v3990
    %v4008 = vcombine.high %v3982, %v3990
    %v4010 = vunpack.c.l.s4 1934713408
    %v4011 = vunpack.c.0.s8 %v4010
    %v4012 = vlaneseq
    %v4013 = vshrl.u32 %v4012, 7
    %v4014 = vsub.s32 %v4011, %v4013
    %v4015 = vrot.slane %v4007, %v4014
    %v4017 = vunpack.c.l.s4 1934713408
    %v4018 = vunpack.c.0.s8 %v4017
    %v4019 = vlaneseq
    %v4020 = vshrl.u32 %v4019, 7
    %v4021 = vsub.s32 %v4018, %v4020
    %v4022 = vrot.slane %v4008, %v4021
    %v4023 = vcombine.low %v3998, %v4006
    %v4024 = vcombine.high %v3998, %v4006
    %v4026 = vunpack.c.l.s4 1934713408
    %v4027 = vunpack.c.0.s8 %v4026
    %v4028 = vlaneseq
    %v4029 = vshrl.u32 %v4028, 7
    %v4030 = vsub.s32 %v4027, %v4029
    %v4031 = vrot.slane %v4023, %v4030
    %v4033 = vunpack.c.l.s4 1934713408
    %v4034 = vunpack.c.0.s8 %v4033
    %v4035 = vlaneseq
    %v4036 = vshrl.u32 %v4035, 7
    %v4037 = vsub.s32 %v4034, %v4036
    %v4038 = vrot.slane %v4024, %v4037
    %v4039 = vcombine.low %v4015, %v4031
    %v4040 = vcombine.high %v4015, %v4031
    %v4041 = vcombine.low %v4022, %v4038
    %v4042 = vcombine.high %v4022, %v4038
    %4045 = vrot.lane.b32.xlu0 %v3972, 8
    %v4046 = vpop.permute.xlu0 %4045
    %4047 = vrot.lane.b32.xlu0 %v4040, 8
    %v4048 = vpop.permute.xlu0 %4047
    %4053 = vrot.lane.b32.xlu0 %v3973, 16
    %v4054 = vpop.permute.xlu0 %4053
    %4055 = vrot.lane.b32.xlu0 %v4041, 16
    %v4056 = vpop.permute.xlu0 %4055
    %4061 = vrot.lane.b32.xlu0 %v3974, 24
    %v4062 = vpop.permute.xlu0 %4061
    %4063 = vrot.lane.b32.xlu0 %v4042, 24
    %v4064 = vpop.permute.xlu0 %4063
    %v4067 = vsel %vm1193, %v3971, %v4046
    %v4068 = vsel %vm1193, %v4039, %v4048
    %v4069 = vsel %vm1382, %v4067, %v4054
    %v4070 = vsel %vm1382, %v4068, %v4056
    %v4071 = vsel %vm1951, %v4069, %v4062
    %v4072 = vsel %vm1951, %v4070, %v4064
    %v4073 = vpack.c.bf16 %v4072, %v4071
    %v4074 = vlaneseq
    %v4075 = vshrl.u32 %v4074, 7
    %v4076 = vsub.s32 5, %v4075
    %v4077 = vrot.slane %v58, %v4076
    %v4082 = vunpack.c.l.b16 %v2246
    %v4083 = vunpack.c.l.b16 %v2247
    %v4084 = vunpack.c.l.b16 %v2248
    %v4085 = vunpack.c.l.b16 %v2249
    %v4086 = vpack.c.b16 %v4083, %v4082
    %v4087 = vpack.c.b16 %v4085, %v4084
    %v4091 = vsel %vm144, %v4073, 0
    %4093 = vmatprep.subr.bf16.mxu0 0
    %4094 = vmatpush1.bf16.msra.mxu0 0
    %4095 = vmatprep.subr.bf16.mxu0 0
    %4096 = vmatpush1.bf16.msra.mxu0 0
    %4097 = vmatprep.subr.bf16.mxu0 0
    %4098 = vmatpush1.bf16.msra.mxu0 0
    %4099 = vmatprep.subr.bf16.mxu0 0
    %4100 = vmatpush1.bf16.msra.mxu0 0
    %4101 = vmatprep.subr.bf16.mxu0 0
    %4102 = vmatpush1.bf16.msra.mxu0 0
    %4103 = vmatprep.subr.bf16.mxu0 0
    %4104 = vmatpush1.bf16.msra.mxu0 0
    %4105 = vmatprep.subr.bf16.mxu0 0
    %4106 = vmatpush1.bf16.msra.mxu0 %v4087
    %4107 = vmatprep.subr.bf16.mxu0 0
    %4108 = vmatpush1.bf16.msra.mxu0 %v4086
    %4109 = vmatprep.subr.bf16.mxu0 0
    %4110 = vmatpush2.bf16.msra.mxu0 0
    %4111 = vmatprep.subr.bf16.mxu0 0
    %4112 = vmatpush2.bf16.msra.mxu0 0
    %4113 = vmatprep.subr.bf16.mxu0 0
    %4114 = vmatpush2.bf16.msra.mxu0 0
    %4115 = vmatprep.subr.bf16.mxu0 0
    %4116 = vmatpush2.bf16.msra.mxu0 0
    %4117 = vmatprep.subr.bf16.mxu0 0
    %4118 = vmatpush2.bf16.msra.mxu0 0
    %4119 = vmatprep.subr.bf16.mxu0 0
    %4120 = vmatpush2.bf16.msra.mxu0 0
    %4121 = vmatprep.subr.bf16.mxu0 0
    %4122 = vmatpush2.bf16.msra.mxu0 0
    %4123 = vmatprep.subr.bf16.mxu0 0
    %4124 = vmatpush2.bf16.msra.mxu0 0
    %4125 = vmatprep.mubr.bf16.mxu0 0
    %4126 = vmatmul.mubr.bf16.gmra.mxu0 %v4091
    %v4127 = vpop.f32.mrf.mxu0
    %v4128 = vadd.f32 %v4077, %v4127
    %v4129 = vpop.f32.mrf.mxu0
    %v4130 = vpop.f32.mrf.mxu0
    %v4131 = vadd.f32 %v4077, %v4130
    %v4132 = vpop.f32.mrf.mxu0
    %4133 = vdwg.mxu0
    %v4134 = vadd.f32 %v2228, %v4128
    %v4135 = vadd.f32 %v2229, %v4131
    %v4136 = vsel %vm144, %v4134, 0.0
    %4137 = vadd.xlane.f32.xlu0 %v4136
    %v4138 = vpop.xlane.xlu0 %4137
    %v4139 = vsel %vm144, %v4135, 0.0
    %4140 = vadd.xlane.f32.xlu0 %v4139
    %v4141 = vpop.xlane.xlu0 %4140
    %v4142 = vmul.f32 %v4138, %v2023
    %v4143 = vmul.f32 %v4141, %v2023
    %v4144 = vsub.f32 %v4134, %v4142
    %v4145 = vsub.f32 %v4135, %v4143
    %v4146 = vmul.f32 %v4144, %v4144
    %v4147 = vmul.f32 %v4145, %v4145
    %v4148 = vsel %vm144, %v4146, 0.0
    %4149 = vadd.xlane.f32.xlu0 %v4148
    %v4150 = vpop.xlane.xlu0 %4149
    %v4151 = vsel %vm144, %v4147, 0.0
    %4152 = vadd.xlane.f32.xlu0 %v4151
    %v4153 = vpop.xlane.xlu0 %4152
    %v4154 = vmul.f32 %v4150, %v2023
    %v4155 = vmul.f32 %v4153, %v2023
    %v4156 = vadd.f32 %v4154, 1e-05
    %v4157 = vadd.f32 %v4155, 1e-05
    %v4158 = vrsqrt.pop %v4156
    %v4159 = vrsqrt.pop %v4157
    %v4160 = vmul.f32 %v4144, %v4158
    %v4161 = vmul.f32 %v4145, %v4159
    %v4162 = vlaneseq
    %v4163 = vshrl.u32 %v4162, 7
    %v4164 = vsub.s32 6, %v4163
    %v4165 = vrot.slane %v58, %v4164
    %v4166 = vmul.f32 %v4160, %v4165
    %v4167 = vmul.f32 %v4161, %v4165
    %v4168 = vlaneseq
    %v4169 = vshrl.u32 %v4168, 7
    %v4170 = vsub.s32 7, %v4169
    %v4171 = vrot.slane %v58, %v4170
    %v4172 = vadd.f32 %v4166, %v4171
    %v4173 = vadd.f32 %v4167, %v4171
    %s4174 = scalar_lea.vmem [#allocation5], 160
    %v4175 = vld [vmem:[%s4174] sm:$0xf]
    %v4176 = vld [vmem:[%s4174 + $0x4] sm:$0xf]
    %v4177 = vld [vmem:[%s4174 + $0x8] sm:$0xf]
    %v4178 = vld [vmem:[%s4174 + $0xc] sm:$0xf]
    %s4179 = scalar_lea.vmem [#allocation5], 176
    %v4180 = vld [vmem:[%s4179] sm:$0xf]
    %v4181 = vld [vmem:[%s4179 + $0x4] sm:$0xf]
    %v4182 = vld [vmem:[%s4179 + $0x8] sm:$0xf]
    %v4183 = vld [vmem:[%s4179 + $0xc] sm:$0xf]
    %s4184 = scalar_lea.vmem [#allocation5], 192
    %v4185 = vld [vmem:[%s4184] sm:$0xf]
    %v4186 = vld [vmem:[%s4184 + $0x4] sm:$0xf]
    %v4187 = vld [vmem:[%s4184 + $0x8] sm:$0xf]
    %v4188 = vld [vmem:[%s4184 + $0xc] sm:$0xf]
    %s4189 = scalar_lea.vmem [#allocation5], 208
    %v4190 = vld [vmem:[%s4189] sm:$0xf]
    %v4191 = vld [vmem:[%s4189 + $0x4] sm:$0xf]
    %v4192 = vld [vmem:[%s4189 + $0x8] sm:$0xf]
    %v4193 = vld [vmem:[%s4189 + $0xc] sm:$0xf]
    %v4194 = vpack.c.bf16 %v4173, %v4172
    %v4195 = vlaneseq
    %v4196 = vshrl.u32 %v4195, 7
    %v4197 = vsub.s32 0, %v4196
    %v4198 = vrot.slane %v59, %v4197
    %v4203 = vunpack.c.l.b16 %v4175
    %v4204 = vunpack.c.l.b16 %v4176
    %v4205 = vunpack.c.l.b16 %v4177
    %v4206 = vunpack.c.l.b16 %v4178
    %v4207 = vpack.c.b16 %v4204, %v4203
    %v4208 = vpack.c.b16 %v4206, %v4205
    %v4212 = vsel %vm144, %v4194, 0
    %4214 = vmatprep.subr.bf16.mxu0 0
    %4215 = vmatpush1.bf16.msra.mxu0 0
    %4216 = vmatprep.subr.bf16.mxu0 0
    %4217 = vmatpush1.bf16.msra.mxu0 0
    %4218 = vmatprep.subr.bf16.mxu0 0
    %4219 = vmatpush1.bf16.msra.mxu0 0
    %4220 = vmatprep.subr.bf16.mxu0 0
    %4221 = vmatpush1.bf16.msra.mxu0 0
    %4222 = vmatprep.subr.bf16.mxu0 0
    %4223 = vmatpush1.bf16.msra.mxu0 0
    %4224 = vmatprep.subr.bf16.mxu0 0
    %4225 = vmatpush1.bf16.msra.mxu0 0
    %4226 = vmatprep.subr.bf16.mxu0 0
    %4227 = vmatpush1.bf16.msra.mxu0 %v4208
    %4228 = vmatprep.subr.bf16.mxu0 0
    %4229 = vmatpush1.bf16.msra.mxu0 %v4207
    %4230 = vmatprep.subr.bf16.mxu0 0
    %4231 = vmatpush2.bf16.msra.mxu0 0
    %4232 = vmatprep.subr.bf16.mxu0 0
    %4233 = vmatpush2.bf16.msra.mxu0 0
    %4234 = vmatprep.subr.bf16.mxu0 0
    %4235 = vmatpush2.bf16.msra.mxu0 0
    %4236 = vmatprep.subr.bf16.mxu0 0
    %4237 = vmatpush2.bf16.msra.mxu0 0
    %4238 = vmatprep.subr.bf16.mxu0 0
    %4239 = vmatpush2.bf16.msra.mxu0 0
    %4240 = vmatprep.subr.bf16.mxu0 0
    %4241 = vmatpush2.bf16.msra.mxu0 0
    %4242 = vmatprep.subr.bf16.mxu0 0
    %4243 = vmatpush2.bf16.msra.mxu0 0
    %4244 = vmatprep.subr.bf16.mxu0 0
    %4245 = vmatpush2.bf16.msra.mxu0 0
    %4246 = vmatprep.mubr.bf16.mxu0 0
    %4247 = vmatmul.mubr.bf16.gmra.mxu0 %v4212
    %v4248 = vpop.f32.mrf.mxu0
    %v4249 = vadd.f32 %v4198, %v4248
    %v4250 = vpop.f32.mrf.mxu0
    %v4251 = vpop.f32.mrf.mxu0
    %v4252 = vadd.f32 %v4198, %v4251
    %v4253 = vpop.f32.mrf.mxu0
    %4254 = vdwg.mxu0
    %v4255 = vmul.f32 %v4249, 0.35355338
    %v4256 = vmul.f32 %v4252, 0.35355338
    %v4257 = vlaneseq
    %v4258 = vshrl.u32 %v4257, 7
    %v4259 = vsub.s32 1, %v4258
    %v4260 = vrot.slane %v59, %v4259
    %v4265 = vunpack.c.l.b16 %v4180
    %v4266 = vunpack.c.l.b16 %v4181
    %v4267 = vunpack.c.l.b16 %v4182
    %v4268 = vunpack.c.l.b16 %v4183
    %v4269 = vpack.c.b16 %v4266, %v4265
    %v4270 = vpack.c.b16 %v4268, %v4267
    %4273 = vmatprep.subr.bf16.mxu0 0
    %4274 = vmatpush1.bf16.msra.mxu0 0
    %4275 = vmatprep.subr.bf16.mxu0 0
    %4276 = vmatpush1.bf16.msra.mxu0 0
    %4277 = vmatprep.subr.bf16.mxu0 0
    %4278 = vmatpush1.bf16.msra.mxu0 0
    %4279 = vmatprep.subr.bf16.mxu0 0
    %4280 = vmatpush1.bf16.msra.mxu0 0
    %4281 = vmatprep.subr.bf16.mxu0 0
    %4282 = vmatpush1.bf16.msra.mxu0 0
    %4283 = vmatprep.subr.bf16.mxu0 0
    %4284 = vmatpush1.bf16.msra.mxu0 0
    %4285 = vmatprep.subr.bf16.mxu0 0
    %4286 = vmatpush1.bf16.msra.mxu0 %v4270
    %4287 = vmatprep.subr.bf16.mxu0 0
    %4288 = vmatpush1.bf16.msra.mxu0 %v4269
    %4289 = vmatprep.subr.bf16.mxu0 0
    %4290 = vmatpush2.bf16.msra.mxu0 0
    %4291 = vmatprep.subr.bf16.mxu0 0
    %4292 = vmatpush2.bf16.msra.mxu0 0
    %4293 = vmatprep.subr.bf16.mxu0 0
    %4294 = vmatpush2.bf16.msra.mxu0 0
    %4295 = vmatprep.subr.bf16.mxu0 0
    %4296 = vmatpush2.bf16.msra.mxu0 0
    %4297 = vmatprep.subr.bf16.mxu0 0
    %4298 = vmatpush2.bf16.msra.mxu0 0
    %4299 = vmatprep.subr.bf16.mxu0 0
    %4300 = vmatpush2.bf16.msra.mxu0 0
    %4301 = vmatprep.subr.bf16.mxu0 0
    %4302 = vmatpush2.bf16.msra.mxu0 0
    %4303 = vmatprep.subr.bf16.mxu0 0
    %4304 = vmatpush2.bf16.msra.mxu0 0
    %4305 = vmatprep.mubr.bf16.mxu0 0
    %4306 = vmatmul.mubr.bf16.gmra.mxu0 %v2268
    %v4307 = vpop.f32.mrf.mxu0
    %v4308 = vadd.f32 %v4260, %v4307
    %v4309 = vpop.f32.mrf.mxu0
    %v4310 = vpop.f32.mrf.mxu0
    %v4311 = vadd.f32 %v4260, %v4310
    %v4312 = vpop.f32.mrf.mxu0
    %4313 = vdwg.mxu0
    %v4314 = vlaneseq
    %v4315 = vshrl.u32 %v4314, 7
    %v4316 = vsub.s32 2, %v4315
    %v4317 = vrot.slane %v59, %v4316
    %v4322 = vunpack.c.l.b16 %v4185
    %v4323 = vunpack.c.l.b16 %v4186
    %v4324 = vunpack.c.l.b16 %v4187
    %v4325 = vunpack.c.l.b16 %v4188
    %v4326 = vpack.c.b16 %v4323, %v4322
    %v4327 = vpack.c.b16 %v4325, %v4324
    %4330 = vmatprep.subr.bf16.mxu0 0
    %4331 = vmatpush1.bf16.msra.mxu0 0
    %4332 = vmatprep.subr.bf16.mxu0 0
    %4333 = vmatpush1.bf16.msra.mxu0 0
    %4334 = vmatprep.subr.bf16.mxu0 0
    %4335 = vmatpush1.bf16.msra.mxu0 0
    %4336 = vmatprep.subr.bf16.mxu0 0
    %4337 = vmatpush1.bf16.msra.mxu0 0
    %4338 = vmatprep.subr.bf16.mxu0 0
    %4339 = vmatpush1.bf16.msra.mxu0 0
    %4340 = vmatprep.subr.bf16.mxu0 0
    %4341 = vmatpush1.bf16.msra.mxu0 0
    %4342 = vmatprep.subr.bf16.mxu0 0
    %4343 = vmatpush1.bf16.msra.mxu0 %v4327
    %4344 = vmatprep.subr.bf16.mxu0 0
    %4345 = vmatpush1.bf16.msra.mxu0 %v4326
    %4346 = vmatprep.subr.bf16.mxu0 0
    %4347 = vmatpush2.bf16.msra.mxu0 0
    %4348 = vmatprep.subr.bf16.mxu0 0
    %4349 = vmatpush2.bf16.msra.mxu0 0
    %4350 = vmatprep.subr.bf16.mxu0 0
    %4351 = vmatpush2.bf16.msra.mxu0 0
    %4352 = vmatprep.subr.bf16.mxu0 0
    %4353 = vmatpush2.bf16.msra.mxu0 0
    %4354 = vmatprep.subr.bf16.mxu0 0
    %4355 = vmatpush2.bf16.msra.mxu0 0
    %4356 = vmatprep.subr.bf16.mxu0 0
    %4357 = vmatpush2.bf16.msra.mxu0 0
    %4358 = vmatprep.subr.bf16.mxu0 0
    %4359 = vmatpush2.bf16.msra.mxu0 0
    %4360 = vmatprep.subr.bf16.mxu0 0
    %4361 = vmatpush2.bf16.msra.mxu0 0
    %4362 = vmatprep.mubr.bf16.mxu0 0
    %4363 = vmatmul.mubr.bf16.gmra.mxu0 %v2268
    %v4364 = vpop.f32.mrf.mxu0
    %v4365 = vadd.f32 %v4317, %v4364
    %v4366 = vpop.f32.mrf.mxu0
    %v4367 = vpop.f32.mrf.mxu0
    %v4368 = vadd.f32 %v4317, %v4367
    %v4369 = vpop.f32.mrf.mxu0
    %4370 = vdwg.mxu0
    %4373 = vrot.lane.b32.xlu0 %v4255, 120
    %v4374 = vpop.permute.xlu0 %4373
    %4375 = vrot.lane.b32.xlu0 %v4256, 120
    %v4376 = vpop.permute.xlu0 %4375
    %4379 = vrot.lane.b32.xlu0 %v4255, 112
    %v4380 = vpop.permute.xlu0 %4379
    %4381 = vrot.lane.b32.xlu0 %v4256, 112
    %v4382 = vpop.permute.xlu0 %4381
    %4385 = vrot.lane.b32.xlu0 %v4255, 104
    %v4386 = vpop.permute.xlu0 %4385
    %4387 = vrot.lane.b32.xlu0 %v4256, 104
    %v4388 = vpop.permute.xlu0 %4387
    %v4391 = vcombine.low %v4255, %v4380
    %v4392 = vcombine.high %v4255, %v4380
    %v4394 = vunpack.c.l.s4 1983009808
    %v4395 = vunpack.c.0.s8 %v4394
    %v4396 = vlaneseq
    %v4397 = vshrl.u32 %v4396, 7
    %v4398 = vsub.s32 %v4395, %v4397
    %v4399 = vrot.slane %v4391, %v4398
    %v4401 = vunpack.c.l.s4 1983009808
    %v4402 = vunpack.c.0.s8 %v4401
    %v4403 = vlaneseq
    %v4404 = vshrl.u32 %v4403, 7
    %v4405 = vsub.s32 %v4402, %v4404
    %v4406 = vrot.slane %v4392, %v4405
    %v4407 = vcombine.low %v4374, %v4386
    %v4408 = vcombine.high %v4374, %v4386
    %v4410 = vunpack.c.l.s4 1983009808
    %v4411 = vunpack.c.0.s8 %v4410
    %v4412 = vlaneseq
    %v4413 = vshrl.u32 %v4412, 7
    %v4414 = vsub.s32 %v4411, %v4413
    %v4415 = vrot.slane %v4407, %v4414
    %v4417 = vunpack.c.l.s4 1983009808
    %v4418 = vunpack.c.0.s8 %v4417
    %v4419 = vlaneseq
    %v4420 = vshrl.u32 %v4419, 7
    %v4421 = vsub.s32 %v4418, %v4420
    %v4422 = vrot.slane %v4408, %v4421
    %v4423 = vcombine.low %v4399, %v4415
    %v4424 = vcombine.high %v4399, %v4415
    %v4426 = vunpack.c.l.s4 1934713408
    %v4427 = vunpack.c.0.s8 %v4426
    %v4428 = vlaneseq
    %v4429 = vshrl.u32 %v4428, 7
    %v4430 = vsub.s32 %v4427, %v4429
    %v4431 = vrot.slane %v4423, %v4430
    %v4433 = vunpack.c.l.s4 1934713408
    %v4434 = vunpack.c.0.s8 %v4433
    %v4435 = vlaneseq
    %v4436 = vshrl.u32 %v4435, 7
    %v4437 = vsub.s32 %v4434, %v4436
    %v4438 = vrot.slane %v4424, %v4437
    %v4439 = vcombine.low %v4406, %v4422
    %v4440 = vcombine.high %v4406, %v4422
    %v4442 = vunpack.c.l.s4 1934713408
    %v4443 = vunpack.c.0.s8 %v4442
    %v4444 = vlaneseq
    %v4445 = vshrl.u32 %v4444, 7
    %v4446 = vsub.s32 %v4443, %v4445
    %v4447 = vrot.slane %v4439, %v4446
    %v4449 = vunpack.c.l.s4 1934713408
    %v4450 = vunpack.c.0.s8 %v4449
    %v4451 = vlaneseq
    %v4452 = vshrl.u32 %v4451, 7
    %v4453 = vsub.s32 %v4450, %v4452
    %v4454 = vrot.slane %v4440, %v4453
    %v4455 = vcombine.high %v4431, 0.0
    %v4456 = vcombine.high %v4438, 0.0
    %v4457 = vcombine.high %v4447, 0.0
    %v4458 = vcombine.high %v4454, 0.0
    %v4459 = vcombine.low %v4256, %v4382
    %v4460 = vcombine.high %v4256, %v4382
    %v4462 = vunpack.c.l.s4 1983009808
    %v4463 = vunpack.c.0.s8 %v4462
    %v4464 = vlaneseq
    %v4465 = vshrl.u32 %v4464, 7
    %v4466 = vsub.s32 %v4463, %v4465
    %v4467 = vrot.slane %v4459, %v4466
    %v4469 = vunpack.c.l.s4 1983009808
    %v4470 = vunpack.c.0.s8 %v4469
    %v4471 = vlaneseq
    %v4472 = vshrl.u32 %v4471, 7
    %v4473 = vsub.s32 %v4470, %v4472
    %v4474 = vrot.slane %v4460, %v4473
    %v4475 = vcombine.low %v4376, %v4388
    %v4476 = vcombine.high %v4376, %v4388
    %v4478 = vunpack.c.l.s4 1983009808
    %v4479 = vunpack.c.0.s8 %v4478
    %v4480 = vlaneseq
    %v4481 = vshrl.u32 %v4480, 7
    %v4482 = vsub.s32 %v4479, %v4481
    %v4483 = vrot.slane %v4475, %v4482
    %v4485 = vunpack.c.l.s4 1983009808
    %v4486 = vunpack.c.0.s8 %v4485
    %v4487 = vlaneseq
    %v4488 = vshrl.u32 %v4487, 7
    %v4489 = vsub.s32 %v4486, %v4488
    %v4490 = vrot.slane %v4476, %v4489
    %v4491 = vcombine.low %v4467, %v4483
    %v4492 = vcombine.high %v4467, %v4483
    %v4494 = vunpack.c.l.s4 1934713408
    %v4495 = vunpack.c.0.s8 %v4494
    %v4496 = vlaneseq
    %v4497 = vshrl.u32 %v4496, 7
    %v4498 = vsub.s32 %v4495, %v4497
    %v4499 = vrot.slane %v4491, %v4498
    %v4501 = vunpack.c.l.s4 1934713408
    %v4502 = vunpack.c.0.s8 %v4501
    %v4503 = vlaneseq
    %v4504 = vshrl.u32 %v4503, 7
    %v4505 = vsub.s32 %v4502, %v4504
    %v4506 = vrot.slane %v4492, %v4505
    %v4507 = vcombine.low %v4474, %v4490
    %v4508 = vcombine.high %v4474, %v4490
    %v4510 = vunpack.c.l.s4 1934713408
    %v4511 = vunpack.c.0.s8 %v4510
    %v4512 = vlaneseq
    %v4513 = vshrl.u32 %v4512, 7
    %v4514 = vsub.s32 %v4511, %v4513
    %v4515 = vrot.slane %v4507, %v4514
    %v4517 = vunpack.c.l.s4 1934713408
    %v4518 = vunpack.c.0.s8 %v4517
    %v4519 = vlaneseq
    %v4520 = vshrl.u32 %v4519, 7
    %v4521 = vsub.s32 %v4518, %v4520
    %v4522 = vrot.slane %v4508, %v4521
    %v4523 = vcombine.high %v4499, 0.0
    %v4524 = vcombine.high %v4506, 0.0
    %v4525 = vcombine.high %v4515, 0.0
    %v4526 = vcombine.high %v4522, 0.0
    %v4527 = vcombine.low %v4431, %v4438
    %v4529 = vunpack.c.l.s4 1983009808
    %v4530 = vunpack.c.0.s8 %v4529
    %v4531 = vlaneseq
    %v4532 = vshrl.u32 %v4531, 7
    %v4533 = vsub.s32 %v4530, %v4532
    %v4534 = vrot.slane %v4527, %v4533
    %v4535 = vcombine.low %v4455, %v4456
    %v4537 = vunpack.c.l.s4 1983009808
    %v4538 = vunpack.c.0.s8 %v4537
    %v4539 = vlaneseq
    %v4540 = vshrl.u32 %v4539, 7
    %v4541 = vsub.s32 %v4538, %v4540
    %v4542 = vrot.slane %v4535, %v4541
    %v4543 = vcombine.low %v4447, %v4454
    %v4545 = vunpack.c.l.s4 1983009808
    %v4546 = vunpack.c.0.s8 %v4545
    %v4547 = vlaneseq
    %v4548 = vshrl.u32 %v4547, 7
    %v4549 = vsub.s32 %v4546, %v4548
    %v4550 = vrot.slane %v4543, %v4549
    %v4551 = vcombine.low %v4457, %v4458
    %v4553 = vunpack.c.l.s4 1983009808
    %v4554 = vunpack.c.0.s8 %v4553
    %v4555 = vlaneseq
    %v4556 = vshrl.u32 %v4555, 7
    %v4557 = vsub.s32 %v4554, %v4556
    %v4558 = vrot.slane %v4551, %v4557
    %v4559 = vcombine.low %v4534, %v4542
    %v4560 = vcombine.high %v4534, %v4542
    %v4562 = vunpack.c.l.s4 1934713408
    %v4563 = vunpack.c.0.s8 %v4562
    %v4564 = vlaneseq
    %v4565 = vshrl.u32 %v4564, 7
    %v4566 = vsub.s32 %v4563, %v4565
    %v4567 = vrot.slane %v4559, %v4566
    %v4569 = vunpack.c.l.s4 1934713408
    %v4570 = vunpack.c.0.s8 %v4569
    %v4571 = vlaneseq
    %v4572 = vshrl.u32 %v4571, 7
    %v4573 = vsub.s32 %v4570, %v4572
    %v4574 = vrot.slane %v4560, %v4573
    %v4575 = vcombine.low %v4550, %v4558
    %v4576 = vcombine.high %v4550, %v4558
    %v4578 = vunpack.c.l.s4 1934713408
    %v4579 = vunpack.c.0.s8 %v4578
    %v4580 = vlaneseq
    %v4581 = vshrl.u32 %v4580, 7
    %v4582 = vsub.s32 %v4579, %v4581
    %v4583 = vrot.slane %v4575, %v4582
    %v4585 = vunpack.c.l.s4 1934713408
    %v4586 = vunpack.c.0.s8 %v4585
    %v4587 = vlaneseq
    %v4588 = vshrl.u32 %v4587, 7
    %v4589 = vsub.s32 %v4586, %v4588
    %v4590 = vrot.slane %v4576, %v4589
    %v4591 = vcombine.low %v4567, %v4583
    %v4592 = vcombine.high %v4567, %v4583
    %v4593 = vcombine.low %v4574, %v4590
    %v4594 = vcombine.high %v4574, %v4590
    %v4595 = vcombine.low %v4499, %v4506
    %v4597 = vunpack.c.l.s4 1983009808
    %v4598 = vunpack.c.0.s8 %v4597
    %v4599 = vlaneseq
    %v4600 = vshrl.u32 %v4599, 7
    %v4601 = vsub.s32 %v4598, %v4600
    %v4602 = vrot.slane %v4595, %v4601
    %v4603 = vcombine.low %v4523, %v4524
    %v4605 = vunpack.c.l.s4 1983009808
    %v4606 = vunpack.c.0.s8 %v4605
    %v4607 = vlaneseq
    %v4608 = vshrl.u32 %v4607, 7
    %v4609 = vsub.s32 %v4606, %v4608
    %v4610 = vrot.slane %v4603, %v4609
    %v4611 = vcombine.low %v4515, %v4522
    %v4613 = vunpack.c.l.s4 1983009808
    %v4614 = vunpack.c.0.s8 %v4613
    %v4615 = vlaneseq
    %v4616 = vshrl.u32 %v4615, 7
    %v4617 = vsub.s32 %v4614, %v4616
    %v4618 = vrot.slane %v4611, %v4617
    %v4619 = vcombine.low %v4525, %v4526
    %v4621 = vunpack.c.l.s4 1983009808
    %v4622 = vunpack.c.0.s8 %v4621
    %v4623 = vlaneseq
    %v4624 = vshrl.u32 %v4623, 7
    %v4625 = vsub.s32 %v4622, %v4624
    %v4626 = vrot.slane %v4619, %v4625
    %v4627 = vcombine.low %v4602, %v4610
    %v4628 = vcombine.high %v4602, %v4610
    %v4630 = vunpack.c.l.s4 1934713408
    %v4631 = vunpack.c.0.s8 %v4630
    %v4632 = vlaneseq
    %v4633 = vshrl.u32 %v4632, 7
    %v4634 = vsub.s32 %v4631, %v4633
    %v4635 = vrot.slane %v4627, %v4634
    %v4637 = vunpack.c.l.s4 1934713408
    %v4638 = vunpack.c.0.s8 %v4637
    %v4639 = vlaneseq
    %v4640 = vshrl.u32 %v4639, 7
    %v4641 = vsub.s32 %v4638, %v4640
    %v4642 = vrot.slane %v4628, %v4641
    %v4643 = vcombine.low %v4618, %v4626
    %v4644 = vcombine.high %v4618, %v4626
    %v4646 = vunpack.c.l.s4 1934713408
    %v4647 = vunpack.c.0.s8 %v4646
    %v4648 = vlaneseq
    %v4649 = vshrl.u32 %v4648, 7
    %v4650 = vsub.s32 %v4647, %v4649
    %v4651 = vrot.slane %v4643, %v4650
    %v4653 = vunpack.c.l.s4 1934713408
    %v4654 = vunpack.c.0.s8 %v4653
    %v4655 = vlaneseq
    %v4656 = vshrl.u32 %v4655, 7
    %v4657 = vsub.s32 %v4654, %v4656
    %v4658 = vrot.slane %v4644, %v4657
    %v4659 = vcombine.low %v4635, %v4651
    %v4660 = vcombine.high %v4635, %v4651
    %v4661 = vcombine.low %v4642, %v4658
    %v4662 = vcombine.high %v4642, %v4658
    %v4663 = vpack.c.bf16 %v4659, %v4591
    %v4664 = vpack.c.bf16 %v4660, %v4592
    %v4665 = vpack.c.bf16 %v4661, %v4593
    %v4666 = vpack.c.bf16 %v4662, %v4594
    %4669 = vrot.lane.b32.xlu0 %v4308, 120
    %v4670 = vpop.permute.xlu0 %4669
    %4671 = vrot.lane.b32.xlu0 %v4311, 120
    %v4672 = vpop.permute.xlu0 %4671
    %4675 = vrot.lane.b32.xlu0 %v4308, 112
    %v4676 = vpop.permute.xlu0 %4675
    %4677 = vrot.lane.b32.xlu0 %v4311, 112
    %v4678 = vpop.permute.xlu0 %4677
    %4681 = vrot.lane.b32.xlu0 %v4308, 104
    %v4682 = vpop.permute.xlu0 %4681
    %4683 = vrot.lane.b32.xlu0 %v4311, 104
    %v4684 = vpop.permute.xlu0 %4683
    %v4687 = vcombine.low %v4308, %v4676
    %v4688 = vcombine.high %v4308, %v4676
    %v4690 = vunpack.c.l.s4 1983009808
    %v4691 = vunpack.c.0.s8 %v4690
    %v4692 = vlaneseq
    %v4693 = vshrl.u32 %v4692, 7
    %v4694 = vsub.s32 %v4691, %v4693
    %v4695 = vrot.slane %v4687, %v4694
    %v4697 = vunpack.c.l.s4 1983009808
    %v4698 = vunpack.c.0.s8 %v4697
    %v4699 = vlaneseq
    %v4700 = vshrl.u32 %v4699, 7
    %v4701 = vsub.s32 %v4698, %v4700
    %v4702 = vrot.slane %v4688, %v4701
    %v4703 = vcombine.low %v4670, %v4682
    %v4704 = vcombine.high %v4670, %v4682
    %v4706 = vunpack.c.l.s4 1983009808
    %v4707 = vunpack.c.0.s8 %v4706
    %v4708 = vlaneseq
    %v4709 = vshrl.u32 %v4708, 7
    %v4710 = vsub.s32 %v4707, %v4709
    %v4711 = vrot.slane %v4703, %v4710
    %v4713 = vunpack.c.l.s4 1983009808
    %v4714 = vunpack.c.0.s8 %v4713
    %v4715 = vlaneseq
    %v4716 = vshrl.u32 %v4715, 7
    %v4717 = vsub.s32 %v4714, %v4716
    %v4718 = vrot.slane %v4704, %v4717
    %v4719 = vcombine.low %v4695, %v4711
    %v4720 = vcombine.high %v4695, %v4711
    %v4722 = vunpack.c.l.s4 1934713408
    %v4723 = vunpack.c.0.s8 %v4722
    %v4724 = vlaneseq
    %v4725 = vshrl.u32 %v4724, 7
    %v4726 = vsub.s32 %v4723, %v4725
    %v4727 = vrot.slane %v4719, %v4726
    %v4729 = vunpack.c.l.s4 1934713408
    %v4730 = vunpack.c.0.s8 %v4729
    %v4731 = vlaneseq
    %v4732 = vshrl.u32 %v4731, 7
    %v4733 = vsub.s32 %v4730, %v4732
    %v4734 = vrot.slane %v4720, %v4733
    %v4735 = vcombine.low %v4702, %v4718
    %v4736 = vcombine.high %v4702, %v4718
    %v4738 = vunpack.c.l.s4 1934713408
    %v4739 = vunpack.c.0.s8 %v4738
    %v4740 = vlaneseq
    %v4741 = vshrl.u32 %v4740, 7
    %v4742 = vsub.s32 %v4739, %v4741
    %v4743 = vrot.slane %v4735, %v4742
    %v4745 = vunpack.c.l.s4 1934713408
    %v4746 = vunpack.c.0.s8 %v4745
    %v4747 = vlaneseq
    %v4748 = vshrl.u32 %v4747, 7
    %v4749 = vsub.s32 %v4746, %v4748
    %v4750 = vrot.slane %v4736, %v4749
    %v4751 = vcombine.high %v4727, 0.0
    %v4752 = vcombine.high %v4734, 0.0
    %v4753 = vcombine.high %v4743, 0.0
    %v4754 = vcombine.high %v4750, 0.0
    %v4755 = vcombine.low %v4311, %v4678
    %v4756 = vcombine.high %v4311, %v4678
    %v4758 = vunpack.c.l.s4 1983009808
    %v4759 = vunpack.c.0.s8 %v4758
    %v4760 = vlaneseq
    %v4761 = vshrl.u32 %v4760, 7
    %v4762 = vsub.s32 %v4759, %v4761
    %v4763 = vrot.slane %v4755, %v4762
    %v4765 = vunpack.c.l.s4 1983009808
    %v4766 = vunpack.c.0.s8 %v4765
    %v4767 = vlaneseq
    %v4768 = vshrl.u32 %v4767, 7
    %v4769 = vsub.s32 %v4766, %v4768
    %v4770 = vrot.slane %v4756, %v4769
    %v4771 = vcombine.low %v4672, %v4684
    %v4772 = vcombine.high %v4672, %v4684
    %v4774 = vunpack.c.l.s4 1983009808
    %v4775 = vunpack.c.0.s8 %v4774
    %v4776 = vlaneseq
    %v4777 = vshrl.u32 %v4776, 7
    %v4778 = vsub.s32 %v4775, %v4777
    %v4779 = vrot.slane %v4771, %v4778
    %v4781 = vunpack.c.l.s4 1983009808
    %v4782 = vunpack.c.0.s8 %v4781
    %v4783 = vlaneseq
    %v4784 = vshrl.u32 %v4783, 7
    %v4785 = vsub.s32 %v4782, %v4784
    %v4786 = vrot.slane %v4772, %v4785
    %v4787 = vcombine.low %v4763, %v4779
    %v4788 = vcombine.high %v4763, %v4779
    %v4790 = vunpack.c.l.s4 1934713408
    %v4791 = vunpack.c.0.s8 %v4790
    %v4792 = vlaneseq
    %v4793 = vshrl.u32 %v4792, 7
    %v4794 = vsub.s32 %v4791, %v4793
    %v4795 = vrot.slane %v4787, %v4794
    %v4797 = vunpack.c.l.s4 1934713408
    %v4798 = vunpack.c.0.s8 %v4797
    %v4799 = vlaneseq
    %v4800 = vshrl.u32 %v4799, 7
    %v4801 = vsub.s32 %v4798, %v4800
    %v4802 = vrot.slane %v4788, %v4801
    %v4803 = vcombine.low %v4770, %v4786
    %v4804 = vcombine.high %v4770, %v4786
    %v4806 = vunpack.c.l.s4 1934713408
    %v4807 = vunpack.c.0.s8 %v4806
    %v4808 = vlaneseq
    %v4809 = vshrl.u32 %v4808, 7
    %v4810 = vsub.s32 %v4807, %v4809
    %v4811 = vrot.slane %v4803, %v4810
    %v4813 = vunpack.c.l.s4 1934713408
    %v4814 = vunpack.c.0.s8 %v4813
    %v4815 = vlaneseq
    %v4816 = vshrl.u32 %v4815, 7
    %v4817 = vsub.s32 %v4814, %v4816
    %v4818 = vrot.slane %v4804, %v4817
    %v4819 = vcombine.high %v4795, 0.0
    %v4820 = vcombine.high %v4802, 0.0
    %v4821 = vcombine.high %v4811, 0.0
    %v4822 = vcombine.high %v4818, 0.0
    %v4823 = vcombine.low %v4727, %v4734
    %v4825 = vunpack.c.l.s4 1983009808
    %v4826 = vunpack.c.0.s8 %v4825
    %v4827 = vlaneseq
    %v4828 = vshrl.u32 %v4827, 7
    %v4829 = vsub.s32 %v4826, %v4828
    %v4830 = vrot.slane %v4823, %v4829
    %v4831 = vcombine.low %v4751, %v4752
    %v4833 = vunpack.c.l.s4 1983009808
    %v4834 = vunpack.c.0.s8 %v4833
    %v4835 = vlaneseq
    %v4836 = vshrl.u32 %v4835, 7
    %v4837 = vsub.s32 %v4834, %v4836
    %v4838 = vrot.slane %v4831, %v4837
    %v4839 = vcombine.low %v4743, %v4750
    %v4841 = vunpack.c.l.s4 1983009808
    %v4842 = vunpack.c.0.s8 %v4841
    %v4843 = vlaneseq
    %v4844 = vshrl.u32 %v4843, 7
    %v4845 = vsub.s32 %v4842, %v4844
    %v4846 = vrot.slane %v4839, %v4845
    %v4847 = vcombine.low %v4753, %v4754
    %v4849 = vunpack.c.l.s4 1983009808
    %v4850 = vunpack.c.0.s8 %v4849
    %v4851 = vlaneseq
    %v4852 = vshrl.u32 %v4851, 7
    %v4853 = vsub.s32 %v4850, %v4852
    %v4854 = vrot.slane %v4847, %v4853
    %v4855 = vcombine.low %v4830, %v4838
    %v4856 = vcombine.high %v4830, %v4838
    %v4858 = vunpack.c.l.s4 1934713408
    %v4859 = vunpack.c.0.s8 %v4858
    %v4860 = vlaneseq
    %v4861 = vshrl.u32 %v4860, 7
    %v4862 = vsub.s32 %v4859, %v4861
    %v4863 = vrot.slane %v4855, %v4862
    %v4865 = vunpack.c.l.s4 1934713408
    %v4866 = vunpack.c.0.s8 %v4865
    %v4867 = vlaneseq
    %v4868 = vshrl.u32 %v4867, 7
    %v4869 = vsub.s32 %v4866, %v4868
    %v4870 = vrot.slane %v4856, %v4869
    %v4871 = vcombine.low %v4846, %v4854
    %v4872 = vcombine.high %v4846, %v4854
    %v4874 = vunpack.c.l.s4 1934713408
    %v4875 = vunpack.c.0.s8 %v4874
    %v4876 = vlaneseq
    %v4877 = vshrl.u32 %v4876, 7
    %v4878 = vsub.s32 %v4875, %v4877
    %v4879 = vrot.slane %v4871, %v4878
    %v4881 = vunpack.c.l.s4 1934713408
    %v4882 = vunpack.c.0.s8 %v4881
    %v4883 = vlaneseq
    %v4884 = vshrl.u32 %v4883, 7
    %v4885 = vsub.s32 %v4882, %v4884
    %v4886 = vrot.slane %v4872, %v4885
    %v4887 = vcombine.low %v4863, %v4879
    %v4888 = vcombine.high %v4863, %v4879
    %v4889 = vcombine.low %v4870, %v4886
    %v4890 = vcombine.high %v4870, %v4886
    %v4891 = vcombine.low %v4795, %v4802
    %v4893 = vunpack.c.l.s4 1983009808
    %v4894 = vunpack.c.0.s8 %v4893
    %v4895 = vlaneseq
    %v4896 = vshrl.u32 %v4895, 7
    %v4897 = vsub.s32 %v4894, %v4896
    %v4898 = vrot.slane %v4891, %v4897
    %v4899 = vcombine.low %v4819, %v4820
    %v4901 = vunpack.c.l.s4 1983009808
    %v4902 = vunpack.c.0.s8 %v4901
    %v4903 = vlaneseq
    %v4904 = vshrl.u32 %v4903, 7
    %v4905 = vsub.s32 %v4902, %v4904
    %v4906 = vrot.slane %v4899, %v4905
    %v4907 = vcombine.low %v4811, %v4818
    %v4909 = vunpack.c.l.s4 1983009808
    %v4910 = vunpack.c.0.s8 %v4909
    %v4911 = vlaneseq
    %v4912 = vshrl.u32 %v4911, 7
    %v4913 = vsub.s32 %v4910, %v4912
    %v4914 = vrot.slane %v4907, %v4913
    %v4915 = vcombine.low %v4821, %v4822
    %v4917 = vunpack.c.l.s4 1983009808
    %v4918 = vunpack.c.0.s8 %v4917
    %v4919 = vlaneseq
    %v4920 = vshrl.u32 %v4919, 7
    %v4921 = vsub.s32 %v4918, %v4920
    %v4922 = vrot.slane %v4915, %v4921
    %v4923 = vcombine.low %v4898, %v4906
    %v4924 = vcombine.high %v4898, %v4906
    %v4926 = vunpack.c.l.s4 1934713408
    %v4927 = vunpack.c.0.s8 %v4926
    %v4928 = vlaneseq
    %v4929 = vshrl.u32 %v4928, 7
    %v4930 = vsub.s32 %v4927, %v4929
    %v4931 = vrot.slane %v4923, %v4930
    %v4933 = vunpack.c.l.s4 1934713408
    %v4934 = vunpack.c.0.s8 %v4933
    %v4935 = vlaneseq
    %v4936 = vshrl.u32 %v4935, 7
    %v4937 = vsub.s32 %v4934, %v4936
    %v4938 = vrot.slane %v4924, %v4937
    %v4939 = vcombine.low %v4914, %v4922
    %v4940 = vcombine.high %v4914, %v4922
    %v4942 = vunpack.c.l.s4 1934713408
    %v4943 = vunpack.c.0.s8 %v4942
    %v4944 = vlaneseq
    %v4945 = vshrl.u32 %v4944, 7
    %v4946 = vsub.s32 %v4943, %v4945
    %v4947 = vrot.slane %v4939, %v4946
    %v4949 = vunpack.c.l.s4 1934713408
    %v4950 = vunpack.c.0.s8 %v4949
    %v4951 = vlaneseq
    %v4952 = vshrl.u32 %v4951, 7
    %v4953 = vsub.s32 %v4950, %v4952
    %v4954 = vrot.slane %v4940, %v4953
    %v4955 = vcombine.low %v4931, %v4947
    %v4956 = vcombine.high %v4931, %v4947
    %v4957 = vcombine.low %v4938, %v4954
    %v4958 = vcombine.high %v4938, %v4954
    %v4959 = vpack.c.bf16 %v4955, %v4887
    %v4960 = vpack.c.bf16 %v4956, %v4888
    %v4961 = vpack.c.bf16 %v4957, %v4889
    %v4962 = vpack.c.bf16 %v4958, %v4890
    %4965 = vrot.lane.b32.xlu0 %v4365, 120
    %v4966 = vpop.permute.xlu0 %4965
    %4967 = vrot.lane.b32.xlu0 %v4368, 120
    %v4968 = vpop.permute.xlu0 %4967
    %4971 = vrot.lane.b32.xlu0 %v4365, 112
    %v4972 = vpop.permute.xlu0 %4971
    %4973 = vrot.lane.b32.xlu0 %v4368, 112
    %v4974 = vpop.permute.xlu0 %4973
    %4977 = vrot.lane.b32.xlu0 %v4365, 104
    %v4978 = vpop.permute.xlu0 %4977
    %4979 = vrot.lane.b32.xlu0 %v4368, 104
    %v4980 = vpop.permute.xlu0 %4979
    %v4983 = vcombine.low %v4365, %v4972
    %v4984 = vcombine.high %v4365, %v4972
    %v4986 = vunpack.c.l.s4 1983009808
    %v4987 = vunpack.c.0.s8 %v4986
    %v4988 = vlaneseq
    %v4989 = vshrl.u32 %v4988, 7
    %v4990 = vsub.s32 %v4987, %v4989
    %v4991 = vrot.slane %v4983, %v4990
    %v4993 = vunpack.c.l.s4 1983009808
    %v4994 = vunpack.c.0.s8 %v4993
    %v4995 = vlaneseq
    %v4996 = vshrl.u32 %v4995, 7
    %v4997 = vsub.s32 %v4994, %v4996
    %v4998 = vrot.slane %v4984, %v4997
    %v4999 = vcombine.low %v4966, %v4978
    %v5000 = vcombine.high %v4966, %v4978
    %v5002 = vunpack.c.l.s4 1983009808
    %v5003 = vunpack.c.0.s8 %v5002
    %v5004 = vlaneseq
    %v5005 = vshrl.u32 %v5004, 7
    %v5006 = vsub.s32 %v5003, %v5005
    %v5007 = vrot.slane %v4999, %v5006
    %v5009 = vunpack.c.l.s4 1983009808
    %v5010 = vunpack.c.0.s8 %v5009
    %v5011 = vlaneseq
    %v5012 = vshrl.u32 %v5011, 7
    %v5013 = vsub.s32 %v5010, %v5012
    %v5014 = vrot.slane %v5000, %v5013
    %v5015 = vcombine.low %v4991, %v5007
    %v5016 = vcombine.high %v4991, %v5007
    %v5018 = vunpack.c.l.s4 1934713408
    %v5019 = vunpack.c.0.s8 %v5018
    %v5020 = vlaneseq
    %v5021 = vshrl.u32 %v5020, 7
    %v5022 = vsub.s32 %v5019, %v5021
    %v5023 = vrot.slane %v5015, %v5022
    %v5025 = vunpack.c.l.s4 1934713408
    %v5026 = vunpack.c.0.s8 %v5025
    %v5027 = vlaneseq
    %v5028 = vshrl.u32 %v5027, 7
    %v5029 = vsub.s32 %v5026, %v5028
    %v5030 = vrot.slane %v5016, %v5029
    %v5031 = vcombine.low %v4998, %v5014
    %v5032 = vcombine.high %v4998, %v5014
    %v5034 = vunpack.c.l.s4 1934713408
    %v5035 = vunpack.c.0.s8 %v5034
    %v5036 = vlaneseq
    %v5037 = vshrl.u32 %v5036, 7
    %v5038 = vsub.s32 %v5035, %v5037
    %v5039 = vrot.slane %v5031, %v5038
    %v5041 = vunpack.c.l.s4 1934713408
    %v5042 = vunpack.c.0.s8 %v5041
    %v5043 = vlaneseq
    %v5044 = vshrl.u32 %v5043, 7
    %v5045 = vsub.s32 %v5042, %v5044
    %v5046 = vrot.slane %v5032, %v5045
    %v5047 = vcombine.high %v5023, 0.0
    %v5048 = vcombine.high %v5030, 0.0
    %v5049 = vcombine.high %v5039, 0.0
    %v5050 = vcombine.high %v5046, 0.0
    %v5051 = vcombine.low %v4368, %v4974
    %v5052 = vcombine.high %v4368, %v4974
    %v5054 = vunpack.c.l.s4 1983009808
    %v5055 = vunpack.c.0.s8 %v5054
    %v5056 = vlaneseq
    %v5057 = vshrl.u32 %v5056, 7
    %v5058 = vsub.s32 %v5055, %v5057
    %v5059 = vrot.slane %v5051, %v5058
    %v5061 = vunpack.c.l.s4 1983009808
    %v5062 = vunpack.c.0.s8 %v5061
    %v5063 = vlaneseq
    %v5064 = vshrl.u32 %v5063, 7
    %v5065 = vsub.s32 %v5062, %v5064
    %v5066 = vrot.slane %v5052, %v5065
    %v5067 = vcombine.low %v4968, %v4980
    %v5068 = vcombine.high %v4968, %v4980
    %v5070 = vunpack.c.l.s4 1983009808
    %v5071 = vunpack.c.0.s8 %v5070
    %v5072 = vlaneseq
    %v5073 = vshrl.u32 %v5072, 7
    %v5074 = vsub.s32 %v5071, %v5073
    %v5075 = vrot.slane %v5067, %v5074
    %v5077 = vunpack.c.l.s4 1983009808
    %v5078 = vunpack.c.0.s8 %v5077
    %v5079 = vlaneseq
    %v5080 = vshrl.u32 %v5079, 7
    %v5081 = vsub.s32 %v5078, %v5080
    %v5082 = vrot.slane %v5068, %v5081
    %v5083 = vcombine.low %v5059, %v5075
    %v5084 = vcombine.high %v5059, %v5075
    %v5086 = vunpack.c.l.s4 1934713408
    %v5087 = vunpack.c.0.s8 %v5086
    %v5088 = vlaneseq
    %v5089 = vshrl.u32 %v5088, 7
    %v5090 = vsub.s32 %v5087, %v5089
    %v5091 = vrot.slane %v5083, %v5090
    %v5093 = vunpack.c.l.s4 1934713408
    %v5094 = vunpack.c.0.s8 %v5093
    %v5095 = vlaneseq
    %v5096 = vshrl.u32 %v5095, 7
    %v5097 = vsub.s32 %v5094, %v5096
    %v5098 = vrot.slane %v5084, %v5097
    %v5099 = vcombine.low %v5066, %v5082
    %v5100 = vcombine.high %v5066, %v5082
    %v5102 = vunpack.c.l.s4 1934713408
    %v5103 = vunpack.c.0.s8 %v5102
    %v5104 = vlaneseq
    %v5105 = vshrl.u32 %v5104, 7
    %v5106 = vsub.s32 %v5103, %v5105
    %v5107 = vrot.slane %v5099, %v5106
    %v5109 = vunpack.c.l.s4 1934713408
    %v5110 = vunpack.c.0.s8 %v5109
    %v5111 = vlaneseq
    %v5112 = vshrl.u32 %v5111, 7
    %v5113 = vsub.s32 %v5110, %v5112
    %v5114 = vrot.slane %v5100, %v5113
    %v5115 = vcombine.high %v5091, 0.0
    %v5116 = vcombine.high %v5098, 0.0
    %v5117 = vcombine.high %v5107, 0.0
    %v5118 = vcombine.high %v5114, 0.0
    %v5119 = vcombine.low %v5023, %v5030
    %v5121 = vunpack.c.l.s4 1983009808
    %v5122 = vunpack.c.0.s8 %v5121
    %v5123 = vlaneseq
    %v5124 = vshrl.u32 %v5123, 7
    %v5125 = vsub.s32 %v5122, %v5124
    %v5126 = vrot.slane %v5119, %v5125
    %v5127 = vcombine.low %v5047, %v5048
    %v5129 = vunpack.c.l.s4 1983009808
    %v5130 = vunpack.c.0.s8 %v5129
    %v5131 = vlaneseq
    %v5132 = vshrl.u32 %v5131, 7
    %v5133 = vsub.s32 %v5130, %v5132
    %v5134 = vrot.slane %v5127, %v5133
    %v5135 = vcombine.low %v5039, %v5046
    %v5137 = vunpack.c.l.s4 1983009808
    %v5138 = vunpack.c.0.s8 %v5137
    %v5139 = vlaneseq
    %v5140 = vshrl.u32 %v5139, 7
    %v5141 = vsub.s32 %v5138, %v5140
    %v5142 = vrot.slane %v5135, %v5141
    %v5143 = vcombine.low %v5049, %v5050
    %v5145 = vunpack.c.l.s4 1983009808
    %v5146 = vunpack.c.0.s8 %v5145
    %v5147 = vlaneseq
    %v5148 = vshrl.u32 %v5147, 7
    %v5149 = vsub.s32 %v5146, %v5148
    %v5150 = vrot.slane %v5143, %v5149
    %v5151 = vcombine.low %v5126, %v5134
    %v5152 = vcombine.high %v5126, %v5134
    %v5154 = vunpack.c.l.s4 1934713408
    %v5155 = vunpack.c.0.s8 %v5154
    %v5156 = vlaneseq
    %v5157 = vshrl.u32 %v5156, 7
    %v5158 = vsub.s32 %v5155, %v5157
    %v5159 = vrot.slane %v5151, %v5158
    %v5161 = vunpack.c.l.s4 1934713408
    %v5162 = vunpack.c.0.s8 %v5161
    %v5163 = vlaneseq
    %v5164 = vshrl.u32 %v5163, 7
    %v5165 = vsub.s32 %v5162, %v5164
    %v5166 = vrot.slane %v5152, %v5165
    %v5167 = vcombine.low %v5142, %v5150
    %v5168 = vcombine.high %v5142, %v5150
    %v5170 = vunpack.c.l.s4 1934713408
    %v5171 = vunpack.c.0.s8 %v5170
    %v5172 = vlaneseq
    %v5173 = vshrl.u32 %v5172, 7
    %v5174 = vsub.s32 %v5171, %v5173
    %v5175 = vrot.slane %v5167, %v5174
    %v5177 = vunpack.c.l.s4 1934713408
    %v5178 = vunpack.c.0.s8 %v5177
    %v5179 = vlaneseq
    %v5180 = vshrl.u32 %v5179, 7
    %v5181 = vsub.s32 %v5178, %v5180
    %v5182 = vrot.slane %v5168, %v5181
    %v5183 = vcombine.low %v5159, %v5175
    %v5184 = vcombine.high %v5159, %v5175
    %v5185 = vcombine.low %v5166, %v5182
    %v5186 = vcombine.high %v5166, %v5182
    %v5187 = vcombine.low %v5091, %v5098
    %v5189 = vunpack.c.l.s4 1983009808
    %v5190 = vunpack.c.0.s8 %v5189
    %v5191 = vlaneseq
    %v5192 = vshrl.u32 %v5191, 7
    %v5193 = vsub.s32 %v5190, %v5192
    %v5194 = vrot.slane %v5187, %v5193
    %v5195 = vcombine.low %v5115, %v5116
    %v5197 = vunpack.c.l.s4 1983009808
    %v5198 = vunpack.c.0.s8 %v5197
    %v5199 = vlaneseq
    %v5200 = vshrl.u32 %v5199, 7
    %v5201 = vsub.s32 %v5198, %v5200
    %v5202 = vrot.slane %v5195, %v5201
    %v5203 = vcombine.low %v5107, %v5114
    %v5205 = vunpack.c.l.s4 1983009808
    %v5206 = vunpack.c.0.s8 %v5205
    %v5207 = vlaneseq
    %v5208 = vshrl.u32 %v5207, 7
    %v5209 = vsub.s32 %v5206, %v5208
    %v5210 = vrot.slane %v5203, %v5209
    %v5211 = vcombine.low %v5117, %v5118
    %v5213 = vunpack.c.l.s4 1983009808
    %v5214 = vunpack.c.0.s8 %v5213
    %v5215 = vlaneseq
    %v5216 = vshrl.u32 %v5215, 7
    %v5217 = vsub.s32 %v5214, %v5216
    %v5218 = vrot.slane %v5211, %v5217
    %v5219 = vcombine.low %v5194, %v5202
    %v5220 = vcombine.high %v5194, %v5202
    %v5222 = vunpack.c.l.s4 1934713408
    %v5223 = vunpack.c.0.s8 %v5222
    %v5224 = vlaneseq
    %v5225 = vshrl.u32 %v5224, 7
    %v5226 = vsub.s32 %v5223, %v5225
    %v5227 = vrot.slane %v5219, %v5226
    %v5229 = vunpack.c.l.s4 1934713408
    %v5230 = vunpack.c.0.s8 %v5229
    %v5231 = vlaneseq
    %v5232 = vshrl.u32 %v5231, 7
    %v5233 = vsub.s32 %v5230, %v5232
    %v5234 = vrot.slane %v5220, %v5233
    %v5235 = vcombine.low %v5210, %v5218
    %v5236 = vcombine.high %v5210, %v5218
    %v5238 = vunpack.c.l.s4 1934713408
    %v5239 = vunpack.c.0.s8 %v5238
    %v5240 = vlaneseq
    %v5241 = vshrl.u32 %v5240, 7
    %v5242 = vsub.s32 %v5239, %v5241
    %v5243 = vrot.slane %v5235, %v5242
    %v5245 = vunpack.c.l.s4 1934713408
    %v5246 = vunpack.c.0.s8 %v5245
    %v5247 = vlaneseq
    %v5248 = vshrl.u32 %v5247, 7
    %v5249 = vsub.s32 %v5246, %v5248
    %v5250 = vrot.slane %v5236, %v5249
    %v5251 = vcombine.low %v5227, %v5243
    %v5252 = vcombine.high %v5227, %v5243
    %v5253 = vcombine.low %v5234, %v5250
    %v5254 = vcombine.high %v5234, %v5250
    %v5255 = vpack.c.bf16 %v5251, %v5183
    %v5256 = vpack.c.bf16 %v5252, %v5184
    %v5257 = vpack.c.bf16 %v5253, %v5185
    %v5258 = vpack.c.bf16 %v5254, %v5186
    %v5260 = vsel %vm1193, %v4663, 0
    %v5263 = vsel %vm1193, %v4959, 0
    %5265 = vmatprep.subr.bf16.mxu0 0
    %5266 = vmatpush1.bf16.xpose.msra.mxu0 0
    %5267 = vmatprep.subr.bf16.mxu0 0
    %5268 = vmatpush1.bf16.xpose.msra.mxu0 0
    %5269 = vmatprep.subr.bf16.mxu0 0
    %5270 = vmatpush1.bf16.xpose.msra.mxu0 0
    %5271 = vmatprep.subr.bf16.mxu0 0
    %5272 = vmatpush1.bf16.xpose.msra.mxu0 0
    %5273 = vmatprep.subr.bf16.mxu0 0
    %5274 = vmatpush1.bf16.xpose.msra.mxu0 0
    %5275 = vmatprep.subr.bf16.mxu0 0
    %5276 = vmatpush1.bf16.xpose.msra.mxu0 0
    %5277 = vmatprep.subr.bf16.mxu0 0
    %5278 = vmatpush1.bf16.xpose.msra.mxu0 0
    %5279 = vmatprep.subr.bf16.mxu0 0
    %5280 = vmatpush1.bf16.xpose.msra.mxu0 %v5263
    %5281 = vmatprep.subr.bf16.mxu0 0
    %5282 = vmatpush2.bf16.xpose.msra.mxu0 0
    %5283 = vmatprep.subr.bf16.mxu0 0
    %5284 = vmatpush2.bf16.xpose.msra.mxu0 0
    %5285 = vmatprep.subr.bf16.mxu0 0
    %5286 = vmatpush2.bf16.xpose.msra.mxu0 0
    %5287 = vmatprep.subr.bf16.mxu0 0
    %5288 = vmatpush2.bf16.xpose.msra.mxu0 0
    %5289 = vmatprep.subr.bf16.mxu0 0
    %5290 = vmatpush2.bf16.xpose.msra.mxu0 0
    %5291 = vmatprep.subr.bf16.mxu0 0
    %5292 = vmatpush2.bf16.xpose.msra.mxu0 0
    %5293 = vmatprep.subr.bf16.mxu0 0
    %5294 = vmatpush2.bf16.xpose.msra.mxu0 0
    %5295 = vmatprep.subr.bf16.mxu0 0
    %5296 = vmatpush2.bf16.xpose.msra.mxu0 0
    %5297 = vmatprep.mubr.bf16.mxu0 0
    %5298 = vmatmul.mubr.bf16.gmra.mxu0 %v5260
    %v5299 = vpop.f32.mrf.mxu0
    %v5300 = vadd.f32 %v104, %v5299
    %v5301 = vpop.f32.mrf.mxu0
    %v5302 = vpop.f32.mrf.mxu0
    %v5303 = vadd.f32 %v105, %v5302
    %v5304 = vpop.f32.mrf.mxu0
    %5305 = vdwg.mxu0
    %v5307 = vsel %vm1193, %v4664, 0
    %v5310 = vsel %vm1193, %v4960, 0
    %5312 = vmatprep.subr.bf16.mxu0 0
    %5313 = vmatpush1.bf16.xpose.msra.mxu0 0
    %5314 = vmatprep.subr.bf16.mxu0 0
    %5315 = vmatpush1.bf16.xpose.msra.mxu0 0
    %5316 = vmatprep.subr.bf16.mxu0 0
    %5317 = vmatpush1.bf16.xpose.msra.mxu0 0
    %5318 = vmatprep.subr.bf16.mxu0 0
    %5319 = vmatpush1.bf16.xpose.msra.mxu0 0
    %5320 = vmatprep.subr.bf16.mxu0 0
    %5321 = vmatpush1.bf16.xpose.msra.mxu0 0
    %5322 = vmatprep.subr.bf16.mxu0 0
    %5323 = vmatpush1.bf16.xpose.msra.mxu0 0
    %5324 = vmatprep.subr.bf16.mxu0 0
    %5325 = vmatpush1.bf16.xpose.msra.mxu0 0
    %5326 = vmatprep.subr.bf16.mxu0 0
    %5327 = vmatpush1.bf16.xpose.msra.mxu0 %v5310
    %5328 = vmatprep.subr.bf16.mxu0 0
    %5329 = vmatpush2.bf16.xpose.msra.mxu0 0
    %5330 = vmatprep.subr.bf16.mxu0 0
    %5331 = vmatpush2.bf16.xpose.msra.mxu0 0
    %5332 = vmatprep.subr.bf16.mxu0 0
    %5333 = vmatpush2.bf16.xpose.msra.mxu0 0
    %5334 = vmatprep.subr.bf16.mxu0 0
    %5335 = vmatpush2.bf16.xpose.msra.mxu0 0
    %5336 = vmatprep.subr.bf16.mxu0 0
    %5337 = vmatpush2.bf16.xpose.msra.mxu0 0
    %5338 = vmatprep.subr.bf16.mxu0 0
    %5339 = vmatpush2.bf16.xpose.msra.mxu0 0
    %5340 = vmatprep.subr.bf16.mxu0 0
    %5341 = vmatpush2.bf16.xpose.msra.mxu0 0
    %5342 = vmatprep.subr.bf16.mxu0 0
    %5343 = vmatpush2.bf16.xpose.msra.mxu0 0
    %5344 = vmatprep.mubr.bf16.mxu0 0
    %5345 = vmatmul.mubr.bf16.gmra.mxu0 %v5307
    %v5346 = vpop.f32.mrf.mxu0
    %v5347 = vadd.f32 %v104, %v5346
    %v5348 = vpop.f32.mrf.mxu0
    %v5349 = vpop.f32.mrf.mxu0
    %v5350 = vadd.f32 %v105, %v5349
    %v5351 = vpop.f32.mrf.mxu0
    %5352 = vdwg.mxu0
    %v5354 = vsel %vm1193, %v4665, 0
    %v5357 = vsel %vm1193, %v4961, 0
    %5359 = vmatprep.subr.bf16.mxu0 0
    %5360 = vmatpush1.bf16.xpose.msra.mxu0 0
    %5361 = vmatprep.subr.bf16.mxu0 0
    %5362 = vmatpush1.bf16.xpose.msra.mxu0 0
    %5363 = vmatprep.subr.bf16.mxu0 0
    %5364 = vmatpush1.bf16.xpose.msra.mxu0 0
    %5365 = vmatprep.subr.bf16.mxu0 0
    %5366 = vmatpush1.bf16.xpose.msra.mxu0 0
    %5367 = vmatprep.subr.bf16.mxu0 0
    %5368 = vmatpush1.bf16.xpose.msra.mxu0 0
    %5369 = vmatprep.subr.bf16.mxu0 0
    %5370 = vmatpush1.bf16.xpose.msra.mxu0 0
    %5371 = vmatprep.subr.bf16.mxu0 0
    %5372 = vmatpush1.bf16.xpose.msra.mxu0 0
    %5373 = vmatprep.subr.bf16.mxu0 0
    %5374 = vmatpush1.bf16.xpose.msra.mxu0 %v5357
    %5375 = vmatprep.subr.bf16.mxu0 0
    %5376 = vmatpush2.bf16.xpose.msra.mxu0 0
    %5377 = vmatprep.subr.bf16.mxu0 0
    %5378 = vmatpush2.bf16.xpose.msra.mxu0 0
    %5379 = vmatprep.subr.bf16.mxu0 0
    %5380 = vmatpush2.bf16.xpose.msra.mxu0 0
    %5381 = vmatprep.subr.bf16.mxu0 0
    %5382 = vmatpush2.bf16.xpose.msra.mxu0 0
    %5383 = vmatprep.subr.bf16.mxu0 0
    %5384 = vmatpush2.bf16.xpose.msra.mxu0 0
    %5385 = vmatprep.subr.bf16.mxu0 0
    %5386 = vmatpush2.bf16.xpose.msra.mxu0 0
    %5387 = vmatprep.subr.bf16.mxu0 0
    %5388 = vmatpush2.bf16.xpose.msra.mxu0 0
    %5389 = vmatprep.subr.bf16.mxu0 0
    %5390 = vmatpush2.bf16.xpose.msra.mxu0 0
    %5391 = vmatprep.mubr.bf16.mxu0 0
    %5392 = vmatmul.mubr.bf16.gmra.mxu0 %v5354
    %v5393 = vpop.f32.mrf.mxu0
    %v5394 = vadd.f32 %v104, %v5393
    %v5395 = vpop.f32.mrf.mxu0
    %v5396 = vpop.f32.mrf.mxu0
    %v5397 = vadd.f32 %v105, %v5396
    %v5398 = vpop.f32.mrf.mxu0
    %5399 = vdwg.mxu0
    %v5401 = vsel %vm1193, %v4666, 0
    %v5404 = vsel %vm1193, %v4962, 0
    %5406 = vmatprep.subr.bf16.mxu0 0
    %5407 = vmatpush1.bf16.xpose.msra.mxu0 0
    %5408 = vmatprep.subr.bf16.mxu0 0
    %5409 = vmatpush1.bf16.xpose.msra.mxu0 0
    %5410 = vmatprep.subr.bf16.mxu0 0
    %5411 = vmatpush1.bf16.xpose.msra.mxu0 0
    %5412 = vmatprep.subr.bf16.mxu0 0
    %5413 = vmatpush1.bf16.xpose.msra.mxu0 0
    %5414 = vmatprep.subr.bf16.mxu0 0
    %5415 = vmatpush1.bf16.xpose.msra.mxu0 0
    %5416 = vmatprep.subr.bf16.mxu0 0
    %5417 = vmatpush1.bf16.xpose.msra.mxu0 0
    %5418 = vmatprep.subr.bf16.mxu0 0
    %5419 = vmatpush1.bf16.xpose.msra.mxu0 0
    %5420 = vmatprep.subr.bf16.mxu0 0
    %5421 = vmatpush1.bf16.xpose.msra.mxu0 %v5404
    %5422 = vmatprep.subr.bf16.mxu0 0
    %5423 = vmatpush2.bf16.xpose.msra.mxu0 0
    %5424 = vmatprep.subr.bf16.mxu0 0
    %5425 = vmatpush2.bf16.xpose.msra.mxu0 0
    %5426 = vmatprep.subr.bf16.mxu0 0
    %5427 = vmatpush2.bf16.xpose.msra.mxu0 0
    %5428 = vmatprep.subr.bf16.mxu0 0
    %5429 = vmatpush2.bf16.xpose.msra.mxu0 0
    %5430 = vmatprep.subr.bf16.mxu0 0
    %5431 = vmatpush2.bf16.xpose.msra.mxu0 0
    %5432 = vmatprep.subr.bf16.mxu0 0
    %5433 = vmatpush2.bf16.xpose.msra.mxu0 0
    %5434 = vmatprep.subr.bf16.mxu0 0
    %5435 = vmatpush2.bf16.xpose.msra.mxu0 0
    %5436 = vmatprep.subr.bf16.mxu0 0
    %5437 = vmatpush2.bf16.xpose.msra.mxu0 0
    %5438 = vmatprep.mubr.bf16.mxu0 0
    %5439 = vmatmul.mubr.bf16.gmra.mxu0 %v5401
    %v5440 = vpop.f32.mrf.mxu0
    %v5441 = vadd.f32 %v104, %v5440
    %v5442 = vpop.f32.mrf.mxu0
    %v5443 = vpop.f32.mrf.mxu0
    %v5444 = vadd.f32 %v105, %v5443
    %v5445 = vpop.f32.mrf.mxu0
    %5446 = vdwg.mxu0
    %v5447 = vsel %vm1382, %v5300, -inf
    %5448 = vmax.xlane.f32.xlu0 %v5447
    %v5449 = vpop.xlane.xlu0 %5448
    %v5450 = vsel %vm1382, %v5303, -inf
    %5451 = vmax.xlane.f32.xlu0 %v5450
    %v5452 = vpop.xlane.xlu0 %5451
    %v5453 = vsel %vm1382, %v5347, -inf
    %5454 = vmax.xlane.f32.xlu0 %v5453
    %v5455 = vpop.xlane.xlu0 %5454
    %v5456 = vsel %vm1382, %v5350, -inf
    %5457 = vmax.xlane.f32.xlu0 %v5456
    %v5458 = vpop.xlane.xlu0 %5457
    %v5459 = vsel %vm1382, %v5394, -inf
    %5460 = vmax.xlane.f32.xlu0 %v5459
    %v5461 = vpop.xlane.xlu0 %5460
    %v5462 = vsel %vm1382, %v5397, -inf
    %5463 = vmax.xlane.f32.xlu0 %v5462
    %v5464 = vpop.xlane.xlu0 %5463
    %v5465 = vsel %vm1382, %v5441, -inf
    %5466 = vmax.xlane.f32.xlu0 %v5465
    %v5467 = vpop.xlane.xlu0 %5466
    %v5468 = vsel %vm1382, %v5444, -inf
    %5469 = vmax.xlane.f32.xlu0 %v5468
    %v5470 = vpop.xlane.xlu0 %5469
    %v5471 = vsub.f32 %v5300, %v5449
    %v5472 = vsub.f32 %v5303, %v5452
    %v5473 = vsub.f32 %v5347, %v5455
    %v5474 = vsub.f32 %v5350, %v5458
    %v5475 = vsub.f32 %v5394, %v5461
    %v5476 = vsub.f32 %v5397, %v5464
    %v5477 = vsub.f32 %v5441, %v5467
    %v5478 = vsub.f32 %v5444, %v5470
    %v5479 = vmul.f32 %v5471, 1.442695
    %v5480 = vpow.pop %v5479
    %v5481 = vmul.f32 %v5472, 1.442695
    %v5482 = vpow.pop %v5481
    %v5483 = vmul.f32 %v5473, 1.442695
    %v5484 = vpow.pop %v5483
    %v5485 = vmul.f32 %v5474, 1.442695
    %v5486 = vpow.pop %v5485
    %v5487 = vmul.f32 %v5475, 1.442695
    %v5488 = vpow.pop %v5487
    %v5489 = vmul.f32 %v5476, 1.442695
    %v5490 = vpow.pop %v5489
    %v5491 = vmul.f32 %v5477, 1.442695
    %v5492 = vpow.pop %v5491
    %v5493 = vmul.f32 %v5478, 1.442695
    %v5494 = vpow.pop %v5493
    %v5495 = vsel %vm1382, %v5480, 0.0
    %5496 = vadd.xlane.f32.xlu0 %v5495
    %v5497 = vpop.xlane.xlu0 %5496
    %v5498 = vsel %vm1382, %v5482, 0.0
    %5499 = vadd.xlane.f32.xlu0 %v5498
    %v5500 = vpop.xlane.xlu0 %5499
    %v5501 = vsel %vm1382, %v5484, 0.0
    %5502 = vadd.xlane.f32.xlu0 %v5501
    %v5503 = vpop.xlane.xlu0 %5502
    %v5504 = vsel %vm1382, %v5486, 0.0
    %5505 = vadd.xlane.f32.xlu0 %v5504
    %v5506 = vpop.xlane.xlu0 %5505
    %v5507 = vsel %vm1382, %v5488, 0.0
    %5508 = vadd.xlane.f32.xlu0 %v5507
    %v5509 = vpop.xlane.xlu0 %5508
    %v5510 = vsel %vm1382, %v5490, 0.0
    %5511 = vadd.xlane.f32.xlu0 %v5510
    %v5512 = vpop.xlane.xlu0 %5511
    %v5513 = vsel %vm1382, %v5492, 0.0
    %5514 = vadd.xlane.f32.xlu0 %v5513
    %v5515 = vpop.xlane.xlu0 %5514
    %v5516 = vsel %vm1382, %v5494, 0.0
    %5517 = vadd.xlane.f32.xlu0 %v5516
    %v5518 = vpop.xlane.xlu0 %5517
    %v5519 = vrcp.pop %v5497
    %v5520 = vmul.f32 %v5480, %v5519
    %v5521 = vrcp.pop %v5500
    %v5522 = vmul.f32 %v5482, %v5521
    %v5523 = vrcp.pop %v5503
    %v5524 = vmul.f32 %v5484, %v5523
    %v5525 = vrcp.pop %v5506
    %v5526 = vmul.f32 %v5486, %v5525
    %v5527 = vrcp.pop %v5509
    %v5528 = vmul.f32 %v5488, %v5527
    %v5529 = vrcp.pop %v5512
    %v5530 = vmul.f32 %v5490, %v5529
    %v5531 = vrcp.pop %v5515
    %v5532 = vmul.f32 %v5492, %v5531
    %v5533 = vrcp.pop %v5518
    %v5534 = vmul.f32 %v5494, %v5533
    %v5535 = vpack.c.bf16 %v5522, %v5520
    %v5536 = vpack.c.bf16 %v5526, %v5524
    %v5537 = vpack.c.bf16 %v5530, %v5528
    %v5538 = vpack.c.bf16 %v5534, %v5532
    %v5540 = vsel %vm1382, %v5535, 0
    %5542 = vmatprep.subr.bf16.mxu0 0
    %5543 = vmatpush1.bf16.msra.mxu0 0
    %5544 = vmatprep.subr.bf16.mxu0 0
    %5545 = vmatpush1.bf16.msra.mxu0 0
    %5546 = vmatprep.subr.bf16.mxu0 0
    %5547 = vmatpush1.bf16.msra.mxu0 0
    %5548 = vmatprep.subr.bf16.mxu0 0
    %5549 = vmatpush1.bf16.msra.mxu0 0
    %5550 = vmatprep.subr.bf16.mxu0 0
    %5551 = vmatpush1.bf16.msra.mxu0 0
    %5552 = vmatprep.subr.bf16.mxu0 0
    %5553 = vmatpush1.bf16.msra.mxu0 0
    %5554 = vmatprep.subr.bf16.mxu0 0
    %5555 = vmatpush1.bf16.msra.mxu0 0
    %5556 = vmatprep.subr.bf16.mxu0 0
    %5557 = vmatpush1.bf16.msra.mxu0 %v5255
    %5558 = vmatprep.subr.bf16.mxu0 0
    %5559 = vmatpush2.bf16.msra.mxu0 0
    %5560 = vmatprep.subr.bf16.mxu0 0
    %5561 = vmatpush2.bf16.msra.mxu0 0
    %5562 = vmatprep.subr.bf16.mxu0 0
    %5563 = vmatpush2.bf16.msra.mxu0 0
    %5564 = vmatprep.subr.bf16.mxu0 0
    %5565 = vmatpush2.bf16.msra.mxu0 0
    %5566 = vmatprep.subr.bf16.mxu0 0
    %5567 = vmatpush2.bf16.msra.mxu0 0
    %5568 = vmatprep.subr.bf16.mxu0 0
    %5569 = vmatpush2.bf16.msra.mxu0 0
    %5570 = vmatprep.subr.bf16.mxu0 0
    %5571 = vmatpush2.bf16.msra.mxu0 0
    %5572 = vmatprep.subr.bf16.mxu0 0
    %5573 = vmatpush2.bf16.msra.mxu0 0
    %5574 = vmatprep.mubr.bf16.mxu0 0
    %5575 = vmatmul.mubr.bf16.gmra.mxu0 %v5540
    %v5576 = vpop.f32.mrf.mxu0
    %v5577 = vadd.f32 0.0, %v5576
    %v5578 = vpop.f32.mrf.mxu0
    %v5579 = vpop.f32.mrf.mxu0
    %v5580 = vadd.f32 0.0, %v5579
    %v5581 = vpop.f32.mrf.mxu0
    %5582 = vdwg.mxu0
    %v5584 = vsel %vm1382, %v5536, 0
    %5586 = vmatprep.subr.bf16.mxu0 0
    %5587 = vmatpush1.bf16.msra.mxu0 0
    %5588 = vmatprep.subr.bf16.mxu0 0
    %5589 = vmatpush1.bf16.msra.mxu0 0
    %5590 = vmatprep.subr.bf16.mxu0 0
    %5591 = vmatpush1.bf16.msra.mxu0 0
    %5592 = vmatprep.subr.bf16.mxu0 0
    %5593 = vmatpush1.bf16.msra.mxu0 0
    %5594 = vmatprep.subr.bf16.mxu0 0
    %5595 = vmatpush1.bf16.msra.mxu0 0
    %5596 = vmatprep.subr.bf16.mxu0 0
    %5597 = vmatpush1.bf16.msra.mxu0 0
    %5598 = vmatprep.subr.bf16.mxu0 0
    %5599 = vmatpush1.bf16.msra.mxu0 0
    %5600 = vmatprep.subr.bf16.mxu0 0
    %5601 = vmatpush1.bf16.msra.mxu0 %v5256
    %5602 = vmatprep.subr.bf16.mxu0 0
    %5603 = vmatpush2.bf16.msra.mxu0 0
    %5604 = vmatprep.subr.bf16.mxu0 0
    %5605 = vmatpush2.bf16.msra.mxu0 0
    %5606 = vmatprep.subr.bf16.mxu0 0
    %5607 = vmatpush2.bf16.msra.mxu0 0
    %5608 = vmatprep.subr.bf16.mxu0 0
    %5609 = vmatpush2.bf16.msra.mxu0 0
    %5610 = vmatprep.subr.bf16.mxu0 0
    %5611 = vmatpush2.bf16.msra.mxu0 0
    %5612 = vmatprep.subr.bf16.mxu0 0
    %5613 = vmatpush2.bf16.msra.mxu0 0
    %5614 = vmatprep.subr.bf16.mxu0 0
    %5615 = vmatpush2.bf16.msra.mxu0 0
    %5616 = vmatprep.subr.bf16.mxu0 0
    %5617 = vmatpush2.bf16.msra.mxu0 0
    %5618 = vmatprep.mubr.bf16.mxu0 0
    %5619 = vmatmul.mubr.bf16.gmra.mxu0 %v5584
    %v5620 = vpop.f32.mrf.mxu0
    %v5621 = vadd.f32 0.0, %v5620
    %v5622 = vpop.f32.mrf.mxu0
    %v5623 = vpop.f32.mrf.mxu0
    %v5624 = vadd.f32 0.0, %v5623
    %v5625 = vpop.f32.mrf.mxu0
    %5626 = vdwg.mxu0
    %v5628 = vsel %vm1382, %v5537, 0
    %5630 = vmatprep.subr.bf16.mxu0 0
    %5631 = vmatpush1.bf16.msra.mxu0 0
    %5632 = vmatprep.subr.bf16.mxu0 0
    %5633 = vmatpush1.bf16.msra.mxu0 0
    %5634 = vmatprep.subr.bf16.mxu0 0
    %5635 = vmatpush1.bf16.msra.mxu0 0
    %5636 = vmatprep.subr.bf16.mxu0 0
    %5637 = vmatpush1.bf16.msra.mxu0 0
    %5638 = vmatprep.subr.bf16.mxu0 0
    %5639 = vmatpush1.bf16.msra.mxu0 0
    %5640 = vmatprep.subr.bf16.mxu0 0
    %5641 = vmatpush1.bf16.msra.mxu0 0
    %5642 = vmatprep.subr.bf16.mxu0 0
    %5643 = vmatpush1.bf16.msra.mxu0 0
    %5644 = vmatprep.subr.bf16.mxu0 0
    %5645 = vmatpush1.bf16.msra.mxu0 %v5257
    %5646 = vmatprep.subr.bf16.mxu0 0
    %5647 = vmatpush2.bf16.msra.mxu0 0
    %5648 = vmatprep.subr.bf16.mxu0 0
    %5649 = vmatpush2.bf16.msra.mxu0 0
    %5650 = vmatprep.subr.bf16.mxu0 0
    %5651 = vmatpush2.bf16.msra.mxu0 0
    %5652 = vmatprep.subr.bf16.mxu0 0
    %5653 = vmatpush2.bf16.msra.mxu0 0
    %5654 = vmatprep.subr.bf16.mxu0 0
    %5655 = vmatpush2.bf16.msra.mxu0 0
    %5656 = vmatprep.subr.bf16.mxu0 0
    %5657 = vmatpush2.bf16.msra.mxu0 0
    %5658 = vmatprep.subr.bf16.mxu0 0
    %5659 = vmatpush2.bf16.msra.mxu0 0
    %5660 = vmatprep.subr.bf16.mxu0 0
    %5661 = vmatpush2.bf16.msra.mxu0 0
    %5662 = vmatprep.mubr.bf16.mxu0 0
    %5663 = vmatmul.mubr.bf16.gmra.mxu0 %v5628
    %v5664 = vpop.f32.mrf.mxu0
    %v5665 = vadd.f32 0.0, %v5664
    %v5666 = vpop.f32.mrf.mxu0
    %v5667 = vpop.f32.mrf.mxu0
    %v5668 = vadd.f32 0.0, %v5667
    %v5669 = vpop.f32.mrf.mxu0
    %5670 = vdwg.mxu0
    %v5672 = vsel %vm1382, %v5538, 0
    %5674 = vmatprep.subr.bf16.mxu0 0
    %5675 = vmatpush1.bf16.msra.mxu0 0
    %5676 = vmatprep.subr.bf16.mxu0 0
    %5677 = vmatpush1.bf16.msra.mxu0 0
    %5678 = vmatprep.subr.bf16.mxu0 0
    %5679 = vmatpush1.bf16.msra.mxu0 0
    %5680 = vmatprep.subr.bf16.mxu0 0
    %5681 = vmatpush1.bf16.msra.mxu0 0
    %5682 = vmatprep.subr.bf16.mxu0 0
    %5683 = vmatpush1.bf16.msra.mxu0 0
    %5684 = vmatprep.subr.bf16.mxu0 0
    %5685 = vmatpush1.bf16.msra.mxu0 0
    %5686 = vmatprep.subr.bf16.mxu0 0
    %5687 = vmatpush1.bf16.msra.mxu0 0
    %5688 = vmatprep.subr.bf16.mxu0 0
    %5689 = vmatpush1.bf16.msra.mxu0 %v5258
    %5690 = vmatprep.subr.bf16.mxu0 0
    %5691 = vmatpush2.bf16.msra.mxu0 0
    %5692 = vmatprep.subr.bf16.mxu0 0
    %5693 = vmatpush2.bf16.msra.mxu0 0
    %5694 = vmatprep.subr.bf16.mxu0 0
    %5695 = vmatpush2.bf16.msra.mxu0 0
    %5696 = vmatprep.subr.bf16.mxu0 0
    %5697 = vmatpush2.bf16.msra.mxu0 0
    %5698 = vmatprep.subr.bf16.mxu0 0
    %5699 = vmatpush2.bf16.msra.mxu0 0
    %5700 = vmatprep.subr.bf16.mxu0 0
    %5701 = vmatpush2.bf16.msra.mxu0 0
    %5702 = vmatprep.subr.bf16.mxu0 0
    %5703 = vmatpush2.bf16.msra.mxu0 0
    %5704 = vmatprep.subr.bf16.mxu0 0
    %5705 = vmatpush2.bf16.msra.mxu0 0
    %5706 = vmatprep.mubr.bf16.mxu0 0
    %5707 = vmatmul.mubr.bf16.gmra.mxu0 %v5672
    %v5708 = vpop.f32.mrf.mxu0
    %v5709 = vadd.f32 0.0, %v5708
    %v5710 = vpop.f32.mrf.mxu0
    %v5711 = vpop.f32.mrf.mxu0
    %v5712 = vadd.f32 0.0, %v5711
    %v5713 = vpop.f32.mrf.mxu0
    %5714 = vdwg.mxu0
    %v5715 = vcombine.low %v5577, %v5665
    %v5716 = vcombine.high %v5577, %v5665
    %v5718 = vunpack.c.l.s4 1983009808
    %v5719 = vunpack.c.0.s8 %v5718
    %v5720 = vlaneseq
    %v5721 = vshrl.u32 %v5720, 7
    %v5722 = vsub.s32 %v5719, %v5721
    %v5723 = vrot.slane %v5715, %v5722
    %v5725 = vunpack.c.l.s4 1983009808
    %v5726 = vunpack.c.0.s8 %v5725
    %v5727 = vlaneseq
    %v5728 = vshrl.u32 %v5727, 7
    %v5729 = vsub.s32 %v5726, %v5728
    %v5730 = vrot.slane %v5716, %v5729
    %v5731 = vcombine.low %v5621, %v5709
    %v5732 = vcombine.high %v5621, %v5709
    %v5734 = vunpack.c.l.s4 1983009808
    %v5735 = vunpack.c.0.s8 %v5734
    %v5736 = vlaneseq
    %v5737 = vshrl.u32 %v5736, 7
    %v5738 = vsub.s32 %v5735, %v5737
    %v5739 = vrot.slane %v5731, %v5738
    %v5741 = vunpack.c.l.s4 1983009808
    %v5742 = vunpack.c.0.s8 %v5741
    %v5743 = vlaneseq
    %v5744 = vshrl.u32 %v5743, 7
    %v5745 = vsub.s32 %v5742, %v5744
    %v5746 = vrot.slane %v5732, %v5745
    %v5747 = vcombine.low %v5723, %v5739
    %v5748 = vcombine.high %v5723, %v5739
    %v5750 = vunpack.c.l.s4 1934713408
    %v5751 = vunpack.c.0.s8 %v5750
    %v5752 = vlaneseq
    %v5753 = vshrl.u32 %v5752, 7
    %v5754 = vsub.s32 %v5751, %v5753
    %v5755 = vrot.slane %v5747, %v5754
    %v5757 = vunpack.c.l.s4 1934713408
    %v5758 = vunpack.c.0.s8 %v5757
    %v5759 = vlaneseq
    %v5760 = vshrl.u32 %v5759, 7
    %v5761 = vsub.s32 %v5758, %v5760
    %v5762 = vrot.slane %v5748, %v5761
    %v5763 = vcombine.low %v5730, %v5746
    %v5764 = vcombine.high %v5730, %v5746
    %v5766 = vunpack.c.l.s4 1934713408
    %v5767 = vunpack.c.0.s8 %v5766
    %v5768 = vlaneseq
    %v5769 = vshrl.u32 %v5768, 7
    %v5770 = vsub.s32 %v5767, %v5769
    %v5771 = vrot.slane %v5763, %v5770
    %v5773 = vunpack.c.l.s4 1934713408
    %v5774 = vunpack.c.0.s8 %v5773
    %v5775 = vlaneseq
    %v5776 = vshrl.u32 %v5775, 7
    %v5777 = vsub.s32 %v5774, %v5776
    %v5778 = vrot.slane %v5764, %v5777
    %v5779 = vcombine.high %v5755, 0.0
    %v5780 = vcombine.high %v5762, 0.0
    %v5781 = vcombine.high %v5771, 0.0
    %v5782 = vcombine.high %v5778, 0.0
    %v5783 = vcombine.low %v5580, %v5668
    %v5784 = vcombine.high %v5580, %v5668
    %v5786 = vunpack.c.l.s4 1983009808
    %v5787 = vunpack.c.0.s8 %v5786
    %v5788 = vlaneseq
    %v5789 = vshrl.u32 %v5788, 7
    %v5790 = vsub.s32 %v5787, %v5789
    %v5791 = vrot.slane %v5783, %v5790
    %v5793 = vunpack.c.l.s4 1983009808
    %v5794 = vunpack.c.0.s8 %v5793
    %v5795 = vlaneseq
    %v5796 = vshrl.u32 %v5795, 7
    %v5797 = vsub.s32 %v5794, %v5796
    %v5798 = vrot.slane %v5784, %v5797
    %v5799 = vcombine.low %v5624, %v5712
    %v5800 = vcombine.high %v5624, %v5712
    %v5802 = vunpack.c.l.s4 1983009808
    %v5803 = vunpack.c.0.s8 %v5802
    %v5804 = vlaneseq
    %v5805 = vshrl.u32 %v5804, 7
    %v5806 = vsub.s32 %v5803, %v5805
    %v5807 = vrot.slane %v5799, %v5806
    %v5809 = vunpack.c.l.s4 1983009808
    %v5810 = vunpack.c.0.s8 %v5809
    %v5811 = vlaneseq
    %v5812 = vshrl.u32 %v5811, 7
    %v5813 = vsub.s32 %v5810, %v5812
    %v5814 = vrot.slane %v5800, %v5813
    %v5815 = vcombine.low %v5791, %v5807
    %v5816 = vcombine.high %v5791, %v5807
    %v5818 = vunpack.c.l.s4 1934713408
    %v5819 = vunpack.c.0.s8 %v5818
    %v5820 = vlaneseq
    %v5821 = vshrl.u32 %v5820, 7
    %v5822 = vsub.s32 %v5819, %v5821
    %v5823 = vrot.slane %v5815, %v5822
    %v5825 = vunpack.c.l.s4 1934713408
    %v5826 = vunpack.c.0.s8 %v5825
    %v5827 = vlaneseq
    %v5828 = vshrl.u32 %v5827, 7
    %v5829 = vsub.s32 %v5826, %v5828
    %v5830 = vrot.slane %v5816, %v5829
    %v5831 = vcombine.low %v5798, %v5814
    %v5832 = vcombine.high %v5798, %v5814
    %v5834 = vunpack.c.l.s4 1934713408
    %v5835 = vunpack.c.0.s8 %v5834
    %v5836 = vlaneseq
    %v5837 = vshrl.u32 %v5836, 7
    %v5838 = vsub.s32 %v5835, %v5837
    %v5839 = vrot.slane %v5831, %v5838
    %v5841 = vunpack.c.l.s4 1934713408
    %v5842 = vunpack.c.0.s8 %v5841
    %v5843 = vlaneseq
    %v5844 = vshrl.u32 %v5843, 7
    %v5845 = vsub.s32 %v5842, %v5844
    %v5846 = vrot.slane %v5832, %v5845
    %v5847 = vcombine.high %v5823, 0.0
    %v5848 = vcombine.high %v5830, 0.0
    %v5849 = vcombine.high %v5839, 0.0
    %v5850 = vcombine.high %v5846, 0.0
    %v5851 = vcombine.low %v5755, %v5762
    %v5853 = vunpack.c.l.s4 1983009808
    %v5854 = vunpack.c.0.s8 %v5853
    %v5855 = vlaneseq
    %v5856 = vshrl.u32 %v5855, 7
    %v5857 = vsub.s32 %v5854, %v5856
    %v5858 = vrot.slane %v5851, %v5857
    %v5859 = vcombine.low %v5779, %v5780
    %v5861 = vunpack.c.l.s4 1983009808
    %v5862 = vunpack.c.0.s8 %v5861
    %v5863 = vlaneseq
    %v5864 = vshrl.u32 %v5863, 7
    %v5865 = vsub.s32 %v5862, %v5864
    %v5866 = vrot.slane %v5859, %v5865
    %v5867 = vcombine.low %v5771, %v5778
    %v5869 = vunpack.c.l.s4 1983009808
    %v5870 = vunpack.c.0.s8 %v5869
    %v5871 = vlaneseq
    %v5872 = vshrl.u32 %v5871, 7
    %v5873 = vsub.s32 %v5870, %v5872
    %v5874 = vrot.slane %v5867, %v5873
    %v5875 = vcombine.low %v5781, %v5782
    %v5877 = vunpack.c.l.s4 1983009808
    %v5878 = vunpack.c.0.s8 %v5877
    %v5879 = vlaneseq
    %v5880 = vshrl.u32 %v5879, 7
    %v5881 = vsub.s32 %v5878, %v5880
    %v5882 = vrot.slane %v5875, %v5881
    %v5883 = vcombine.low %v5858, %v5866
    %v5884 = vcombine.high %v5858, %v5866
    %v5886 = vunpack.c.l.s4 1934713408
    %v5887 = vunpack.c.0.s8 %v5886
    %v5888 = vlaneseq
    %v5889 = vshrl.u32 %v5888, 7
    %v5890 = vsub.s32 %v5887, %v5889
    %v5891 = vrot.slane %v5883, %v5890
    %v5893 = vunpack.c.l.s4 1934713408
    %v5894 = vunpack.c.0.s8 %v5893
    %v5895 = vlaneseq
    %v5896 = vshrl.u32 %v5895, 7
    %v5897 = vsub.s32 %v5894, %v5896
    %v5898 = vrot.slane %v5884, %v5897
    %v5899 = vcombine.low %v5874, %v5882
    %v5900 = vcombine.high %v5874, %v5882
    %v5902 = vunpack.c.l.s4 1934713408
    %v5903 = vunpack.c.0.s8 %v5902
    %v5904 = vlaneseq
    %v5905 = vshrl.u32 %v5904, 7
    %v5906 = vsub.s32 %v5903, %v5905
    %v5907 = vrot.slane %v5899, %v5906
    %v5909 = vunpack.c.l.s4 1934713408
    %v5910 = vunpack.c.0.s8 %v5909
    %v5911 = vlaneseq
    %v5912 = vshrl.u32 %v5911, 7
    %v5913 = vsub.s32 %v5910, %v5912
    %v5914 = vrot.slane %v5900, %v5913
    %v5915 = vcombine.low %v5891, %v5907
    %v5916 = vcombine.high %v5891, %v5907
    %v5917 = vcombine.low %v5898, %v5914
    %v5918 = vcombine.high %v5898, %v5914
    %v5919 = vcombine.low %v5823, %v5830
    %v5921 = vunpack.c.l.s4 1983009808
    %v5922 = vunpack.c.0.s8 %v5921
    %v5923 = vlaneseq
    %v5924 = vshrl.u32 %v5923, 7
    %v5925 = vsub.s32 %v5922, %v5924
    %v5926 = vrot.slane %v5919, %v5925
    %v5927 = vcombine.low %v5847, %v5848
    %v5929 = vunpack.c.l.s4 1983009808
    %v5930 = vunpack.c.0.s8 %v5929
    %v5931 = vlaneseq
    %v5932 = vshrl.u32 %v5931, 7
    %v5933 = vsub.s32 %v5930, %v5932
    %v5934 = vrot.slane %v5927, %v5933
    %v5935 = vcombine.low %v5839, %v5846
    %v5937 = vunpack.c.l.s4 1983009808
    %v5938 = vunpack.c.0.s8 %v5937
    %v5939 = vlaneseq
    %v5940 = vshrl.u32 %v5939, 7
    %v5941 = vsub.s32 %v5938, %v5940
    %v5942 = vrot.slane %v5935, %v5941
    %v5943 = vcombine.low %v5849, %v5850
    %v5945 = vunpack.c.l.s4 1983009808
    %v5946 = vunpack.c.0.s8 %v5945
    %v5947 = vlaneseq
    %v5948 = vshrl.u32 %v5947, 7
    %v5949 = vsub.s32 %v5946, %v5948
    %v5950 = vrot.slane %v5943, %v5949
    %v5951 = vcombine.low %v5926, %v5934
    %v5952 = vcombine.high %v5926, %v5934
    %v5954 = vunpack.c.l.s4 1934713408
    %v5955 = vunpack.c.0.s8 %v5954
    %v5956 = vlaneseq
    %v5957 = vshrl.u32 %v5956, 7
    %v5958 = vsub.s32 %v5955, %v5957
    %v5959 = vrot.slane %v5951, %v5958
    %v5961 = vunpack.c.l.s4 1934713408
    %v5962 = vunpack.c.0.s8 %v5961
    %v5963 = vlaneseq
    %v5964 = vshrl.u32 %v5963, 7
    %v5965 = vsub.s32 %v5962, %v5964
    %v5966 = vrot.slane %v5952, %v5965
    %v5967 = vcombine.low %v5942, %v5950
    %v5968 = vcombine.high %v5942, %v5950
    %v5970 = vunpack.c.l.s4 1934713408
    %v5971 = vunpack.c.0.s8 %v5970
    %v5972 = vlaneseq
    %v5973 = vshrl.u32 %v5972, 7
    %v5974 = vsub.s32 %v5971, %v5973
    %v5975 = vrot.slane %v5967, %v5974
    %v5977 = vunpack.c.l.s4 1934713408
    %v5978 = vunpack.c.0.s8 %v5977
    %v5979 = vlaneseq
    %v5980 = vshrl.u32 %v5979, 7
    %v5981 = vsub.s32 %v5978, %v5980
    %v5982 = vrot.slane %v5968, %v5981
    %v5983 = vcombine.low %v5959, %v5975
    %v5984 = vcombine.high %v5959, %v5975
    %v5985 = vcombine.low %v5966, %v5982
    %v5986 = vcombine.high %v5966, %v5982
    %5989 = vrot.lane.b32.xlu0 %v5916, 8
    %v5990 = vpop.permute.xlu0 %5989
    %5991 = vrot.lane.b32.xlu0 %v5984, 8
    %v5992 = vpop.permute.xlu0 %5991
    %5997 = vrot.lane.b32.xlu0 %v5917, 16
    %v5998 = vpop.permute.xlu0 %5997
    %5999 = vrot.lane.b32.xlu0 %v5985, 16
    %v6000 = vpop.permute.xlu0 %5999
    %6005 = vrot.lane.b32.xlu0 %v5918, 24
    %v6006 = vpop.permute.xlu0 %6005
    %6007 = vrot.lane.b32.xlu0 %v5986, 24
    %v6008 = vpop.permute.xlu0 %6007
    %v6011 = vsel %vm1193, %v5915, %v5990
    %v6012 = vsel %vm1193, %v5983, %v5992
    %v6013 = vsel %vm1382, %v6011, %v5998
    %v6014 = vsel %vm1382, %v6012, %v6000
    %v6015 = vsel %vm1951, %v6013, %v6006
    %v6016 = vsel %vm1951, %v6014, %v6008
    %v6017 = vpack.c.bf16 %v6016, %v6015
    %v6018 = vlaneseq
    %v6019 = vshrl.u32 %v6018, 7
    %v6020 = vsub.s32 3, %v6019
    %v6021 = vrot.slane %v59, %v6020
    %v6026 = vunpack.c.l.b16 %v4190
    %v6027 = vunpack.c.l.b16 %v4191
    %v6028 = vunpack.c.l.b16 %v4192
    %v6029 = vunpack.c.l.b16 %v4193
    %v6030 = vpack.c.b16 %v6027, %v6026
    %v6031 = vpack.c.b16 %v6029, %v6028
    %v6035 = vsel %vm144, %v6017, 0
    %6037 = vmatprep.subr.bf16.mxu0 0
    %6038 = vmatpush1.bf16.msra.mxu0 0
    %6039 = vmatprep.subr.bf16.mxu0 0
    %6040 = vmatpush1.bf16.msra.mxu0 0
    %6041 = vmatprep.subr.bf16.mxu0 0
    %6042 = vmatpush1.bf16.msra.mxu0 0
    %6043 = vmatprep.subr.bf16.mxu0 0
    %6044 = vmatpush1.bf16.msra.mxu0 0
    %6045 = vmatprep.subr.bf16.mxu0 0
    %6046 = vmatpush1.bf16.msra.mxu0 0
    %6047 = vmatprep.subr.bf16.mxu0 0
    %6048 = vmatpush1.bf16.msra.mxu0 0
    %6049 = vmatprep.subr.bf16.mxu0 0
    %6050 = vmatpush1.bf16.msra.mxu0 %v6031
    %6051 = vmatprep.subr.bf16.mxu0 0
    %6052 = vmatpush1.bf16.msra.mxu0 %v6030
    %6053 = vmatprep.subr.bf16.mxu0 0
    %6054 = vmatpush2.bf16.msra.mxu0 0
    %6055 = vmatprep.subr.bf16.mxu0 0
    %6056 = vmatpush2.bf16.msra.mxu0 0
    %6057 = vmatprep.subr.bf16.mxu0 0
    %6058 = vmatpush2.bf16.msra.mxu0 0
    %6059 = vmatprep.subr.bf16.mxu0 0
    %6060 = vmatpush2.bf16.msra.mxu0 0
    %6061 = vmatprep.subr.bf16.mxu0 0
    %6062 = vmatpush2.bf16.msra.mxu0 0
    %6063 = vmatprep.subr.bf16.mxu0 0
    %6064 = vmatpush2.bf16.msra.mxu0 0
    %6065 = vmatprep.subr.bf16.mxu0 0
    %6066 = vmatpush2.bf16.msra.mxu0 0
    %6067 = vmatprep.subr.bf16.mxu0 0
    %6068 = vmatpush2.bf16.msra.mxu0 0
    %6069 = vmatprep.mubr.bf16.mxu0 0
    %6070 = vmatmul.mubr.bf16.gmra.mxu0 %v6035
    %v6071 = vpop.f32.mrf.mxu0
    %v6072 = vadd.f32 %v6021, %v6071
    %v6073 = vpop.f32.mrf.mxu0
    %v6074 = vpop.f32.mrf.mxu0
    %v6075 = vadd.f32 %v6021, %v6074
    %v6076 = vpop.f32.mrf.mxu0
    %6077 = vdwg.mxu0
    %v6078 = vadd.f32 %v4172, %v6072
    %v6079 = vadd.f32 %v4173, %v6075
    %v6080 = vsel %vm144, %v6078, 0.0
    %6081 = vadd.xlane.f32.xlu0 %v6080
    %v6082 = vpop.xlane.xlu0 %6081
    %v6083 = vsel %vm144, %v6079, 0.0
    %6084 = vadd.xlane.f32.xlu0 %v6083
    %v6085 = vpop.xlane.xlu0 %6084
    %v6086 = vmul.f32 %v6082, %v2023
    %v6087 = vmul.f32 %v6085, %v2023
    %v6088 = vsub.f32 %v6078, %v6086
    %v6089 = vsub.f32 %v6079, %v6087
    %v6090 = vmul.f32 %v6088, %v6088
    %v6091 = vmul.f32 %v6089, %v6089
    %v6092 = vsel %vm144, %v6090, 0.0
    %6093 = vadd.xlane.f32.xlu0 %v6092
    %v6094 = vpop.xlane.xlu0 %6093
    %v6095 = vsel %vm144, %v6091, 0.0
    %6096 = vadd.xlane.f32.xlu0 %v6095
    %v6097 = vpop.xlane.xlu0 %6096
    %v6098 = vmul.f32 %v6094, %v2023
    %v6099 = vmul.f32 %v6097, %v2023
    %v6100 = vadd.f32 %v6098, 1e-05
    %v6101 = vadd.f32 %v6099, 1e-05
    %v6102 = vrsqrt.pop %v6100
    %v6103 = vrsqrt.pop %v6101
    %v6104 = vmul.f32 %v6088, %v6102
    %v6105 = vmul.f32 %v6089, %v6103
    %v6106 = vlaneseq
    %v6107 = vshrl.u32 %v6106, 7
    %v6108 = vsub.s32 4, %v6107
    %v6109 = vrot.slane %v59, %v6108
    %v6110 = vmul.f32 %v6104, %v6109
    %v6111 = vmul.f32 %v6105, %v6109
    %v6112 = vlaneseq
    %v6113 = vshrl.u32 %v6112, 7
    %v6114 = vsub.s32 5, %v6113
    %v6115 = vrot.slane %v59, %v6114
    %v6116 = vadd.f32 %v6110, %v6115
    %v6117 = vadd.f32 %v6111, %v6115
    %s6118 = scalar_lea.vmem [#allocation5], 224
    %v6119 = vld [vmem:[%s6118] sm:$0xf]
    %v6120 = vld [vmem:[%s6118 + $0x4] sm:$0xf]
    %v6121 = vld [vmem:[%s6118 + $0x8] sm:$0xf]
    %v6122 = vld [vmem:[%s6118 + $0xc] sm:$0xf]
    %s6123 = scalar_lea.vmem [#allocation5], 240
    %v6124 = vld [vmem:[%s6123] sm:$0xf]
    %v6125 = vld [vmem:[%s6123 + $0x4] sm:$0xf]
    %v6126 = vld [vmem:[%s6123 + $0x8] sm:$0xf]
    %v6127 = vld [vmem:[%s6123 + $0xc] sm:$0xf]
    %v6128 = vpack.c.bf16 %v6117, %v6116
    %v6129 = vlaneseq
    %v6130 = vshrl.u32 %v6129, 7
    %v6131 = vsub.s32 6, %v6130
    %v6132 = vrot.slane %v59, %v6131
    %v6137 = vunpack.c.l.b16 %v6119
    %v6138 = vunpack.c.l.b16 %v6120
    %v6139 = vunpack.c.l.b16 %v6121
    %v6140 = vunpack.c.l.b16 %v6122
    %v6141 = vpack.c.b16 %v6138, %v6137
    %v6142 = vpack.c.b16 %v6140, %v6139
    %v6146 = vsel %vm144, %v6128, 0
    %6148 = vmatprep.subr.bf16.mxu0 0
    %6149 = vmatpush1.bf16.msra.mxu0 0
    %6150 = vmatprep.subr.bf16.mxu0 0
    %6151 = vmatpush1.bf16.msra.mxu0 0
    %6152 = vmatprep.subr.bf16.mxu0 0
    %6153 = vmatpush1.bf16.msra.mxu0 0
    %6154 = vmatprep.subr.bf16.mxu0 0
    %6155 = vmatpush1.bf16.msra.mxu0 0
    %6156 = vmatprep.subr.bf16.mxu0 0
    %6157 = vmatpush1.bf16.msra.mxu0 0
    %6158 = vmatprep.subr.bf16.mxu0 0
    %6159 = vmatpush1.bf16.msra.mxu0 0
    %6160 = vmatprep.subr.bf16.mxu0 0
    %6161 = vmatpush1.bf16.msra.mxu0 %v6142
    %6162 = vmatprep.subr.bf16.mxu0 0
    %6163 = vmatpush1.bf16.msra.mxu0 %v6141
    %6164 = vmatprep.subr.bf16.mxu0 0
    %6165 = vmatpush2.bf16.msra.mxu0 0
    %6166 = vmatprep.subr.bf16.mxu0 0
    %6167 = vmatpush2.bf16.msra.mxu0 0
    %6168 = vmatprep.subr.bf16.mxu0 0
    %6169 = vmatpush2.bf16.msra.mxu0 0
    %6170 = vmatprep.subr.bf16.mxu0 0
    %6171 = vmatpush2.bf16.msra.mxu0 0
    %6172 = vmatprep.subr.bf16.mxu0 0
    %6173 = vmatpush2.bf16.msra.mxu0 0
    %6174 = vmatprep.subr.bf16.mxu0 0
    %6175 = vmatpush2.bf16.msra.mxu0 0
    %6176 = vmatprep.subr.bf16.mxu0 0
    %6177 = vmatpush2.bf16.msra.mxu0 0
    %6178 = vmatprep.subr.bf16.mxu0 0
    %6179 = vmatpush2.bf16.msra.mxu0 0
    %6180 = vmatprep.mubr.bf16.mxu0 0
    %6181 = vmatmul.mubr.bf16.gmra.mxu0 %v6146
    %v6182 = vpop.f32.mrf.mxu0
    %v6183 = vadd.f32 %v6132, %v6182
    %v6184 = vpop.f32.mrf.mxu0
    %v6185 = vpop.f32.mrf.mxu0
    %v6186 = vadd.f32 %v6132, %v6185
    %v6187 = vpop.f32.mrf.mxu0
    %6188 = vdwg.mxu0
    %v6189 = vmax.f32 %v6183, 0.0
    %v6190 = vmax.f32 %v6186, 0.0
    %v6191 = vpack.c.bf16 %v6190, %v6189
    %v6192 = vlaneseq
    %v6193 = vshrl.u32 %v6192, 7
    %v6194 = vsub.s32 7, %v6193
    %v6195 = vrot.slane %v59, %v6194
    %v6200 = vunpack.c.l.b16 %v6124
    %v6201 = vunpack.c.l.b16 %v6125
    %v6202 = vunpack.c.l.b16 %v6126
    %v6203 = vunpack.c.l.b16 %v6127
    %v6204 = vpack.c.b16 %v6201, %v6200
    %v6205 = vpack.c.b16 %v6203, %v6202
    %v6209 = vsel %vm144, %v6191, 0
    %6211 = vmatprep.subr.bf16.mxu0 0
    %6212 = vmatpush1.bf16.msra.mxu0 0
    %6213 = vmatprep.subr.bf16.mxu0 0
    %6214 = vmatpush1.bf16.msra.mxu0 0
    %6215 = vmatprep.subr.bf16.mxu0 0
    %6216 = vmatpush1.bf16.msra.mxu0 0
    %6217 = vmatprep.subr.bf16.mxu0 0
    %6218 = vmatpush1.bf16.msra.mxu0 0
    %6219 = vmatprep.subr.bf16.mxu0 0
    %6220 = vmatpush1.bf16.msra.mxu0 0
    %6221 = vmatprep.subr.bf16.mxu0 0
    %6222 = vmatpush1.bf16.msra.mxu0 0
    %6223 = vmatprep.subr.bf16.mxu0 0
    %6224 = vmatpush1.bf16.msra.mxu0 %v6205
    %6225 = vmatprep.subr.bf16.mxu0 0
    %6226 = vmatpush1.bf16.msra.mxu0 %v6204
    %6227 = vmatprep.subr.bf16.mxu0 0
    %6228 = vmatpush2.bf16.msra.mxu0 0
    %6229 = vmatprep.subr.bf16.mxu0 0
    %6230 = vmatpush2.bf16.msra.mxu0 0
    %6231 = vmatprep.subr.bf16.mxu0 0
    %6232 = vmatpush2.bf16.msra.mxu0 0
    %6233 = vmatprep.subr.bf16.mxu0 0
    %6234 = vmatpush2.bf16.msra.mxu0 0
    %6235 = vmatprep.subr.bf16.mxu0 0
    %6236 = vmatpush2.bf16.msra.mxu0 0
    %6237 = vmatprep.subr.bf16.mxu0 0
    %6238 = vmatpush2.bf16.msra.mxu0 0
    %6239 = vmatprep.subr.bf16.mxu0 0
    %6240 = vmatpush2.bf16.msra.mxu0 0
    %6241 = vmatprep.subr.bf16.mxu0 0
    %6242 = vmatpush2.bf16.msra.mxu0 0
    %6243 = vmatprep.mubr.bf16.mxu0 0
    %6244 = vmatmul.mubr.bf16.gmra.mxu0 %v6209
    %v6245 = vpop.f32.mrf.mxu0
    %v6246 = vadd.f32 %v6195, %v6245
    %v6247 = vpop.f32.mrf.mxu0
    %v6248 = vpop.f32.mrf.mxu0
    %v6249 = vadd.f32 %v6195, %v6248
    %v6250 = vpop.f32.mrf.mxu0
    %6251 = vdwg.mxu0
    %v6252 = vadd.f32 %v6116, %v6246
    %v6253 = vadd.f32 %v6117, %v6249
    %v6254 = vsel %vm144, %v6252, 0.0
    %6255 = vadd.xlane.f32.xlu0 %v6254
    %v6256 = vpop.xlane.xlu0 %6255
    %v6257 = vsel %vm144, %v6253, 0.0
    %6258 = vadd.xlane.f32.xlu0 %v6257
    %v6259 = vpop.xlane.xlu0 %6258
    %v6260 = vmul.f32 %v6256, %v2023
    %v6261 = vmul.f32 %v6259, %v2023
    %v6262 = vsub.f32 %v6252, %v6260
    %v6263 = vsub.f32 %v6253, %v6261
    %v6264 = vmul.f32 %v6262, %v6262
    %v6265 = vmul.f32 %v6263, %v6263
    %v6266 = vsel %vm144, %v6264, 0.0
    %6267 = vadd.xlane.f32.xlu0 %v6266
    %v6268 = vpop.xlane.xlu0 %6267
    %v6269 = vsel %vm144, %v6265, 0.0
    %6270 = vadd.xlane.f32.xlu0 %v6269
    %v6271 = vpop.xlane.xlu0 %6270
    %v6272 = vmul.f32 %v6268, %v2023
    %v6273 = vmul.f32 %v6271, %v2023
    %v6274 = vadd.f32 %v6272, 1e-05
    %v6275 = vadd.f32 %v6273, 1e-05
    %v6276 = vrsqrt.pop %v6274
    %v6277 = vrsqrt.pop %v6275
    %v6278 = vmul.f32 %v6262, %v6276
    %v6279 = vmul.f32 %v6263, %v6277
    %v6280 = vlaneseq
    %v6281 = vshrl.u32 %v6280, 7
    %v6282 = vsub.s32 0, %v6281
    %v6283 = vrot.slane %v60, %v6282
    %v6284 = vmul.f32 %v6278, %v6283
    %v6285 = vmul.f32 %v6279, %v6283
    %v6286 = vlaneseq
    %v6287 = vshrl.u32 %v6286, 7
    %v6288 = vsub.s32 1, %v6287
    %v6289 = vrot.slane %v60, %v6288
    %v6290 = vadd.f32 %v6284, %v6289
    %v6291 = vadd.f32 %v6285, %v6289
    %s6292 = scalar_lea.vmem [#allocation5], 256
    %v6293 = vld [vmem:[%s6292] sm:$0xf]
    %v6294 = vld [vmem:[%s6292 + $0x4] sm:$0xf]
    %v6295 = vld [vmem:[%s6292 + $0x8] sm:$0xf]
    %v6296 = vld [vmem:[%s6292 + $0xc] sm:$0xf]
    %v6297 = vpack.c.bf16 %v6291, %v6290
    %v6298 = vlaneseq
    %v6299 = vshrl.u32 %v6298, 7
    %v6300 = vsub.s32 2, %v6299
    %v6301 = vrot.slane %v60, %v6300
    %v6306 = vunpack.c.l.b16 %v6293
    %v6307 = vunpack.c.l.b16 %v6294
    %v6308 = vunpack.c.l.b16 %v6295
    %v6309 = vunpack.c.l.b16 %v6296
    %v6310 = vpack.c.b16 %v6307, %v6306
    %v6311 = vpack.c.b16 %v6309, %v6308
    %v6315 = vsel %vm144, %v6297, 0
    %6317 = vmatprep.subr.bf16.mxu0 0
    %6318 = vmatpush1.bf16.msra.mxu0 0
    %6319 = vmatprep.subr.bf16.mxu0 0
    %6320 = vmatpush1.bf16.msra.mxu0 0
    %6321 = vmatprep.subr.bf16.mxu0 0
    %6322 = vmatpush1.bf16.msra.mxu0 0
    %6323 = vmatprep.subr.bf16.mxu0 0
    %6324 = vmatpush1.bf16.msra.mxu0 0
    %6325 = vmatprep.subr.bf16.mxu0 0
    %6326 = vmatpush1.bf16.msra.mxu0 0
    %6327 = vmatprep.subr.bf16.mxu0 0
    %6328 = vmatpush1.bf16.msra.mxu0 0
    %6329 = vmatprep.subr.bf16.mxu0 0
    %6330 = vmatpush1.bf16.msra.mxu0 %v6311
    %6331 = vmatprep.subr.bf16.mxu0 0
    %6332 = vmatpush1.bf16.msra.mxu0 %v6310
    %6333 = vmatprep.subr.bf16.mxu0 0
    %6334 = vmatpush2.bf16.msra.mxu0 0
    %6335 = vmatprep.subr.bf16.mxu0 0
    %6336 = vmatpush2.bf16.msra.mxu0 0
    %6337 = vmatprep.subr.bf16.mxu0 0
    %6338 = vmatpush2.bf16.msra.mxu0 0
    %6339 = vmatprep.subr.bf16.mxu0 0
    %6340 = vmatpush2.bf16.msra.mxu0 0
    %6341 = vmatprep.subr.bf16.mxu0 0
    %6342 = vmatpush2.bf16.msra.mxu0 0
    %6343 = vmatprep.subr.bf16.mxu0 0
    %6344 = vmatpush2.bf16.msra.mxu0 0
    %6345 = vmatprep.subr.bf16.mxu0 0
    %6346 = vmatpush2.bf16.msra.mxu0 0
    %6347 = vmatprep.subr.bf16.mxu0 0
    %6348 = vmatpush2.bf16.msra.mxu0 0
    %6349 = vmatprep.mubr.bf16.mxu0 0
    %6350 = vmatmul.mubr.bf16.gmra.mxu0 %v6315
    %v6351 = vpop.f32.mrf.mxu0
    %v6352 = vadd.f32 %v6301, %v6351
    %v6353 = vpop.f32.mrf.mxu0
    %v6354 = vpop.f32.mrf.mxu0
    %v6355 = vadd.f32 %v6301, %v6354
    %v6356 = vpop.f32.mrf.mxu0
    %6357 = vdwg.mxu0
    %v6360 = vcombine.high %v6352, %v6352
    %v6362 = vunpack.c.l.s4 1983009808
    %v6363 = vunpack.c.0.s8 %v6362
    %v6364 = vlaneseq
    %v6365 = vshrl.u32 %v6364, 7
    %v6366 = vsub.s32 %v6363, %v6365
    %v6367 = vrot.slane %v6352, %v6366
    %v6369 = vunpack.c.l.s4 1983009808
    %v6370 = vunpack.c.0.s8 %v6369
    %v6371 = vlaneseq
    %v6372 = vshrl.u32 %v6371, 7
    %v6373 = vsub.s32 %v6370, %v6372
    %v6374 = vrot.slane %v6360, %v6373
    %v6375 = vcombine.high %v6367, %v6367
    %v6376 = vcombine.high %v6374, %v6374
    %v6377 = vcombine.high %v6355, %v6355
    %v6379 = vunpack.c.l.s4 1983009808
    %v6380 = vunpack.c.0.s8 %v6379
    %v6381 = vlaneseq
    %v6382 = vshrl.u32 %v6381, 7
    %v6383 = vsub.s32 %v6380, %v6382
    %v6384 = vrot.slane %v6355, %v6383
    %v6386 = vunpack.c.l.s4 1983009808
    %v6387 = vunpack.c.0.s8 %v6386
    %v6388 = vlaneseq
    %v6389 = vshrl.u32 %v6388, 7
    %v6390 = vsub.s32 %v6387, %v6389
    %v6391 = vrot.slane %v6377, %v6390
    %v6392 = vcombine.high %v6384, %v6384
    %v6393 = vcombine.high %v6391, %v6391
    %vm6402 = vcmask 254976
    %v6403 = vsel %vm6402, %v6367, -inf
    %v6404 = vrot.slane %v6403, 4
    %v6405 = vmax.f32 %v6403, %v6404
    %v6406 = vrot.slane %v6405, 2
    %v6407 = vmax.f32 %v6405, %v6406
    %v6408 = vrot.slane %v6407, 1
    %v6409 = vmax.f32 %v6407, %v6408
    %v6410 = vsel %vm6402, %v6375, -inf
    %v6411 = vrot.slane %v6410, 4
    %v6412 = vmax.f32 %v6410, %v6411
    %v6413 = vrot.slane %v6412, 2
    %v6414 = vmax.f32 %v6412, %v6413
    %v6415 = vrot.slane %v6414, 1
    %v6416 = vmax.f32 %v6414, %v6415
    %v6417 = vsel %vm6402, %v6374, -inf
    %v6418 = vrot.slane %v6417, 4
    %v6419 = vmax.f32 %v6417, %v6418
    %v6420 = vrot.slane %v6419, 2
    %v6421 = vmax.f32 %v6419, %v6420
    %v6422 = vrot.slane %v6421, 1
    %v6423 = vmax.f32 %v6421, %v6422
    %v6424 = vsel %vm6402, %v6376, -inf
    %v6425 = vrot.slane %v6424, 4
    %v6426 = vmax.f32 %v6424, %v6425
    %v6427 = vrot.slane %v6426, 2
    %v6428 = vmax.f32 %v6426, %v6427
    %v6429 = vrot.slane %v6428, 1
    %v6430 = vmax.f32 %v6428, %v6429
    %v6431 = vsel %vm6402, %v6384, -inf
    %v6432 = vrot.slane %v6431, 4
    %v6433 = vmax.f32 %v6431, %v6432
    %v6434 = vrot.slane %v6433, 2
    %v6435 = vmax.f32 %v6433, %v6434
    %v6436 = vrot.slane %v6435, 1
    %v6437 = vmax.f32 %v6435, %v6436
    %v6438 = vsel %vm6402, %v6392, -inf
    %v6439 = vrot.slane %v6438, 4
    %v6440 = vmax.f32 %v6438, %v6439
    %v6441 = vrot.slane %v6440, 2
    %v6442 = vmax.f32 %v6440, %v6441
    %v6443 = vrot.slane %v6442, 1
    %v6444 = vmax.f32 %v6442, %v6443
    %v6445 = vsel %vm6402, %v6391, -inf
    %v6446 = vrot.slane %v6445, 4
    %v6447 = vmax.f32 %v6445, %v6446
    %v6448 = vrot.slane %v6447, 2
    %v6449 = vmax.f32 %v6447, %v6448
    %v6450 = vrot.slane %v6449, 1
    %v6451 = vmax.f32 %v6449, %v6450
    %v6452 = vsel %vm6402, %v6393, -inf
    %v6453 = vrot.slane %v6452, 4
    %v6454 = vmax.f32 %v6452, %v6453
    %v6455 = vrot.slane %v6454, 2
    %v6456 = vmax.f32 %v6454, %v6455
    %v6457 = vrot.slane %v6456, 1
    %v6458 = vmax.f32 %v6456, %v6457
    %v6459 = vsub.f32 %v6367, %v6409
    %v6460 = vsub.f32 %v6375, %v6416
    %v6461 = vsub.f32 %v6374, %v6423
    %v6462 = vsub.f32 %v6376, %v6430
    %v6463 = vsub.f32 %v6384, %v6437
    %v6464 = vsub.f32 %v6392, %v6444
    %v6465 = vsub.f32 %v6391, %v6451
    %v6466 = vsub.f32 %v6393, %v6458
    %v6467 = vmul.f32 %v6459, 1.442695
    %v6468 = vpow.pop %v6467
    %v6469 = vmul.f32 %v6460, 1.442695
    %v6470 = vpow.pop %v6469
    %v6471 = vmul.f32 %v6461, 1.442695
    %v6472 = vpow.pop %v6471
    %v6473 = vmul.f32 %v6462, 1.442695
    %v6474 = vpow.pop %v6473
    %v6475 = vmul.f32 %v6463, 1.442695
    %v6476 = vpow.pop %v6475
    %v6477 = vmul.f32 %v6464, 1.442695
    %v6478 = vpow.pop %v6477
    %v6479 = vmul.f32 %v6465, 1.442695
    %v6480 = vpow.pop %v6479
    %v6481 = vmul.f32 %v6466, 1.442695
    %v6482 = vpow.pop %v6481
    %v6483 = vsel %vm6402, %v6468, 0.0
    %v6484 = vrot.slane %v6483, 4
    %v6485 = vadd.f32 %v6483, %v6484
    %v6486 = vrot.slane %v6485, 2
    %v6487 = vadd.f32 %v6485, %v6486
    %v6488 = vrot.slane %v6487, 1
    %v6489 = vadd.f32 %v6487, %v6488
    %v6490 = vsel %vm6402, %v6470, 0.0
    %v6491 = vrot.slane %v6490, 4
    %v6492 = vadd.f32 %v6490, %v6491
    %v6493 = vrot.slane %v6492, 2
    %v6494 = vadd.f32 %v6492, %v6493
    %v6495 = vrot.slane %v6494, 1
    %v6496 = vadd.f32 %v6494, %v6495
    %v6497 = vsel %vm6402, %v6472, 0.0
    %v6498 = vrot.slane %v6497, 4
    %v6499 = vadd.f32 %v6497, %v6498
    %v6500 = vrot.slane %v6499, 2
    %v6501 = vadd.f32 %v6499, %v6500
    %v6502 = vrot.slane %v6501, 1
    %v6503 = vadd.f32 %v6501, %v6502
    %v6504 = vsel %vm6402, %v6474, 0.0
    %v6505 = vrot.slane %v6504, 4
    %v6506 = vadd.f32 %v6504, %v6505
    %v6507 = vrot.slane %v6506, 2
    %v6508 = vadd.f32 %v6506, %v6507
    %v6509 = vrot.slane %v6508, 1
    %v6510 = vadd.f32 %v6508, %v6509
    %v6511 = vsel %vm6402, %v6476, 0.0
    %v6512 = vrot.slane %v6511, 4
    %v6513 = vadd.f32 %v6511, %v6512
    %v6514 = vrot.slane %v6513, 2
    %v6515 = vadd.f32 %v6513, %v6514
    %v6516 = vrot.slane %v6515, 1
    %v6517 = vadd.f32 %v6515, %v6516
    %v6518 = vsel %vm6402, %v6478, 0.0
    %v6519 = vrot.slane %v6518, 4
    %v6520 = vadd.f32 %v6518, %v6519
    %v6521 = vrot.slane %v6520, 2
    %v6522 = vadd.f32 %v6520, %v6521
    %v6523 = vrot.slane %v6522, 1
    %v6524 = vadd.f32 %v6522, %v6523
    %v6525 = vsel %vm6402, %v6480, 0.0
    %v6526 = vrot.slane %v6525, 4
    %v6527 = vadd.f32 %v6525, %v6526
    %v6528 = vrot.slane %v6527, 2
    %v6529 = vadd.f32 %v6527, %v6528
    %v6530 = vrot.slane %v6529, 1
    %v6531 = vadd.f32 %v6529, %v6530
    %v6532 = vsel %vm6402, %v6482, 0.0
    %v6533 = vrot.slane %v6532, 4
    %v6534 = vadd.f32 %v6532, %v6533
    %v6535 = vrot.slane %v6534, 2
    %v6536 = vadd.f32 %v6534, %v6535
    %v6537 = vrot.slane %v6536, 1
    %v6538 = vadd.f32 %v6536, %v6537
    %v6539 = vrcp.pop %v6489
    %v6540 = vmul.f32 %v6468, %v6539
    %v6541 = vrcp.pop %v6496
    %v6542 = vmul.f32 %v6470, %v6541
    %v6543 = vrcp.pop %v6503
    %v6544 = vmul.f32 %v6472, %v6543
    %v6545 = vrcp.pop %v6510
    %v6546 = vmul.f32 %v6474, %v6545
    %v6547 = vrcp.pop %v6517
    %v6548 = vmul.f32 %v6476, %v6547
    %v6549 = vrcp.pop %v6524
    %v6550 = vmul.f32 %v6478, %v6549
    %v6551 = vrcp.pop %v6531
    %v6552 = vmul.f32 %v6480, %v6551
    %v6553 = vrcp.pop %v6538
    %v6554 = vmul.f32 %v6482, %v6553
    %6555 = vst.msk [vmem:[#allocation8] sm:$0x3] %vm6402, %v6540
    %6556 = vst.msk [vmem:[#allocation8 + $0x2] sm:$0x3] %vm6402, %v6542
    %6557 = vst.msk [vmem:[#allocation8 + $0x4] sm:$0x3] %vm6402, %v6544
    %6558 = vst.msk [vmem:[#allocation8 + $0x6] sm:$0x3] %vm6402, %v6546
    %6559 = vst.msk [vmem:[#allocation8 + $0x8] sm:$0x3] %vm6402, %v6548
    %6560 = vst.msk [vmem:[#allocation8 + $0xa] sm:$0x3] %vm6402, %v6550
    %6561 = vst.msk [vmem:[#allocation8 + $0xc] sm:$0x3] %vm6402, %v6552
    %6562 = vst.msk [vmem:[#allocation8 + $0xe] sm:$0x3] %vm6402, %v6554
    // Predicated region
    $region26: #{galactic_transformer.1} parent=1 // pred_check
      _
    $region27: #{galactic_transformer.1} parent=1 // pred_check_branch
      %6564 = sbr.rel (0) target = $region29
    $region28: #{galactic_transformer.1} parent=1 // pred_region
      %s6566 = ssub.s32 256, 256
      %6567 = vsyncadd [#allocation4], %s6566
      %s6568 = sshll.u32 [#allocation8], 4
      %s6569 = int_to_ptr.vmem [resolvable:$true] %s6568
      %6574 = dma.vmem_to_hbm [thread:$0]  %s6569, 256, %s3, [#allocation4], 32, 32, 2
    $region29: #{galactic_transformer.1} parent=1 // pred_fallthru
      _
    // Predicated region
    $region30: #{galactic_transformer.1} parent=1 // pred_check
      _
    $region31: #{galactic_transformer.1} parent=1 // pred_check_branch
      %6576 = sbr.rel (0) target = $region33
    $region32: #{galactic_transformer.1} parent=1 // pred_region
      %6577 = dma.done [#allocation4], 256
    $region33: #{galactic_transformer.1} parent=1 // pred_fallthru
      _
    %6578 = vsyncpa [#allocation3], 1
    %6579 = vsyncpa [#allocation6], 1
    %6580 = vsyncpa [#allocation4], 1

</llo_original>
